<compile_context>
chip_gen: v5e
topology: v5e:2x2
jax: 0.10.0
libtpu: 0.0.40
codegen_flags: <defaults>
</compile_context>

<pallas_src>
import functools

import jax
import jax.numpy as jnp
from jax.experimental import pallas as pl
from jax.experimental.pallas import tpu as pltpu


def _round_up(x, m):
    return (x + m - 1) // m * m


def _pick_th(Ho, Wo_p, Cout):
    """Rows per grid step: sublane-aligned, f32 accumulator bounded ~128 KiB."""
    for th in (16, 8):
        if Ho % th == 0 and th * Wo_p * Cout * 4 <= 128 * 1024:
            return th
    if Ho % 8 == 0:
        return 8
    return Ho  # tiny maps: single block equal to the full row extent


# ----------------------------------------------------------------------------
# Pallas kernel: fused conv + BN affine + leaky-ReLU for TH output rows.
# ----------------------------------------------------------------------------
def _conv_kernel(band_ref, w_ref, sc_ref, b_ref, o_ref, *,
                 K, s, TH, Wo_p, Cin, Cout, act):
    M = TH * Wo_p
    acc = jnp.zeros((M, Cout), jnp.float32)
    for kh in range(K):
        for kw in range(K):
            p = (kh % s) * s + (kw % s)          # stride phase
            ih, iw = kh // s, kw // s            # offsets inside the phase
            # slice the ref directly (no value-level unaligned slicing)
            patch = band_ref[p, pl.ds(ih, TH), pl.ds(iw, Wo_p), :]   # (TH,Wo_p,Cin) bf16
            acc = acc + jnp.dot(patch.reshape(M, Cin), w_ref[kh * K + kw],
                                preferred_element_type=jnp.float32)
    y = acc * sc_ref[...] + b_ref[...]           # fused BN affine (or conv bias)
    if act:
        y = jnp.where(y > 0, y, 0.01 * y)        # InPlaceABN leaky_relu(0.01)
    o_ref[...] = y.astype(o_ref.dtype)


def conv_bn_act(x_hwc, w_hwio, scale, bias, *, K, s, pad, act,
                out_dtype=jnp.bfloat16):
    H, W, Cin = x_hwc.shape
    Cout = w_hwio.shape[-1]
    Ho = (H + 2 * pad - K) // s + 1
    Wo = (W + 2 * pad - K) // s + 1
    halo = (K - 1) // s                      # extra phase rows/cols needed
    Wo_p = _round_up(Wo, 8)                  # keeps in-kernel row-flatten layout-trivial
    TH = _pick_th(Ho, Wo_p, Cout)
    n_blk = Ho // TH
    THb, Wb = TH + halo, Wo_p + halo

    # --- plain-JAX glue: pad, stride-phase split, per-row-block halo bands ---
    need_h, need_w = Ho + halo, Wb
    x_pad = jnp.pad(x_hwc, ((pad, pad), (pad, pad), (0, 0)))
    Hp, Wp = x_pad.shape[0], x_pad.shape[1]
    x_big = jnp.pad(x_pad, ((0, max(0, s * need_h - Hp)),
                            (0, max(0, s * need_w - Wp)), (0, 0)))
    phases = jnp.stack(
        [x_big[ph::s, pw::s, :][:need_h, :need_w, :]
         for ph in range(s) for pw in range(s)], axis=0)      # (s*s, need_h, need_w, Cin)
    rows = jnp.arange(n_blk)[:, None] * TH + jnp.arange(THb)[None, :]
    bands = jnp.transpose(phases[:, rows], (1, 0, 2, 3, 4))   # (n_blk, s*s, THb, Wb, Cin)
    bands = bands.astype(jnp.bfloat16)

    w_flat = w_hwio.reshape(K * K, Cin, Cout).astype(jnp.bfloat16)
    sc = scale.reshape(1, Cout).astype(jnp.float32)
    bi = bias.reshape(1, Cout).astype(jnp.float32)

    # explicit VMEM budget derived from the chosen blocks (headroom for v7x's 64 MiB)
    out_bytes = jnp.dtype(out_dtype).itemsize
    est = (2 * (s * s * THb * Wb * Cin * 2)        # double-buffered input band (bf16)
           + 2 * (K * K * Cin * Cout * 2)          # weights (bf16)
           + 2 * (TH * Wo_p * Cout * out_bytes)    # double-buffered output block
           + TH * Wo_p * Cout * 4                  # f32 accumulator
           + (1 << 20))
    vmem_limit = int(min(64 * (1 << 20), max(8 * (1 << 20), 2 * est)))

    kernel = functools.partial(_conv_kernel, K=K, s=s, TH=TH, Wo_p=Wo_p,
                               Cin=Cin, Cout=Cout, act=act)
    out = pl.pallas_call(
        kernel,
        out_shape=jax.ShapeDtypeStruct((Ho * Wo_p, Cout), out_dtype),
        grid=(n_blk,),
        in_specs=[
            pl.BlockSpec((None, s * s, THb, Wb, Cin),
                         lambda i: (i, 0, 0, 0, 0)),
            pl.BlockSpec((K * K, Cin, Cout), lambda i: (0, 0, 0)),
            pl.BlockSpec((1, Cout), lambda i: (0, 0)),
            pl.BlockSpec((1, Cout), lambda i: (0, 0)),
        ],
        out_specs=pl.BlockSpec((TH * Wo_p, Cout), lambda i: (i, 0)),
        compiler_params=pltpu.CompilerParams(
            dimension_semantics=("parallel",),
            vmem_limit_bytes=vmem_limit),
    )(bands, w_flat, sc, bi)
    return out.reshape(Ho, Wo_p, Cout)[:, :Wo, :]


# ----------------------------------------------------------------------------
# FeatureNet parameters (deterministic synthetic init) and forward pass.
# ----------------------------------------------------------------------------
LAYER_CFG = [
    # (Cin, Cout, K, stride, pad)
    (3, 8, 3, 1, 1),     # conv0.0
    (8, 8, 3, 1, 1),     # conv0.1
    (8, 16, 5, 2, 2),    # conv1.0
    (16, 16, 3, 1, 1),   # conv1.1
    (16, 16, 3, 1, 1),   # conv1.2
    (16, 32, 5, 2, 2),   # conv2.0
    (32, 32, 3, 1, 1),   # conv2.1
    (32, 32, 3, 1, 1),   # conv2.2
]


def init_params(key):
    params = []
    for (cin, cout, k, s, p) in LAYER_CFG:
        key, kw, kg, kb, km, kv = jax.random.split(key, 6)
        w = jax.random.normal(kw, (k, k, cin, cout), jnp.float32) / jnp.sqrt(
            float(k * k * cin))
        gamma = 1.0 + 0.1 * jax.random.normal(kg, (cout,), jnp.float32)
        beta = 0.05 * jax.random.normal(kb, (cout,), jnp.float32)
        mean = 0.05 * jax.random.normal(km, (cout,), jnp.float32)
        var = 1.0 + 0.1 * jax.random.uniform(kv, (cout,), jnp.float32)
        # TODO(synk): InPlaceABN is reproduced in inference form (running stats
        # folded into a scale/bias); training-mode batch statistics are not used.
        scale = gamma / jnp.sqrt(var + 1e-5)
        bias = beta - mean * scale
        params.append((w, scale, bias, k, s, p))
    key, kw, kb = jax.random.split(key, 3)
    top_w = jax.random.normal(kw, (1, 1, 32, 32), jnp.float32) / jnp.sqrt(32.0)
    top_b = 0.05 * jax.random.normal(kb, (32,), jnp.float32)
    return params, (top_w, top_b)


def featurenet_forward(x_chw, params, top):
    """x_chw: (3, H, W) single image, as in FeatureNet.forward (intermediate=False)."""
    x = jnp.transpose(x_chw, (1, 2, 0))  # CHW -> HWC
    for (w, scale, bias, k, s, p) in params:
        x = conv_bn_act(x, w, scale, bias, K=k, s=s, pad=p, act=True,
                        out_dtype=jnp.bfloat16)
    top_w, top_b = top
    x = conv_bn_act(x, top_w, jnp.ones((32,), jnp.float32), top_b,
                    K=1, s=1, pad=0, act=False, out_dtype=jnp.float32)
    return [jnp.transpose(x, (2, 0, 1))[None]]  # HWC -> NCHW: (1, 32, H/4, W/4)


# ----------------------------------------------------------------------------
# Pure-JAX reference (lax conv, same bf16 rounding points) for correctness.
# ----------------------------------------------------------------------------
def _ref_layer(x_hwc, w, scale, bias, K, s, pad, act, out_dtype):
    y = jax.lax.conv_general_dilated(
        x_hwc.astype(jnp.bfloat16)[None], w.astype(jnp.bfloat16),
        (s, s), [(pad, pad), (pad, pad)],
        dimension_numbers=("NHWC", "HWIO", "NHWC"),
        preferred_element_type=jnp.float32)[0]
    y = y * scale + bias
    if act:
        y = jnp.where(y > 0, y, 0.01 * y)
    return y.astype(out_dtype)


def featurenet_reference(x_chw, params, top):
    x = jnp.transpose(x_chw, (1, 2, 0))
    for (w, scale, bias, k, s, p) in params:
        x = _ref_layer(x, w, scale, bias, k, s, p, True, jnp.bfloat16)
    top_w, top_b = top
    x = _ref_layer(x, top_w, jnp.ones((32,), jnp.float32), top_b, 1, 1, 0,
                   False, jnp.float32)
    return jnp.transpose(x, (2, 0, 1))[None]


if __name__ == "__main__":
    key = jax.random.PRNGKey(0)
    kx, kp = jax.random.split(key)
    H = W = 32
    x = jax.random.normal(kx, (3, H, W), jnp.float32)  # single CHW image

    params, top = init_params(kp)

    out = featurenet_forward(x, params, top)
    out = [jax.block_until_ready(o) for o in out]
    assert out[0].shape == (1, 32, H // 4, W // 4), out[0].shape

    ref = jax.block_until_ready(featurenet_reference(x, params, top))
    max_err = float(jnp.max(jnp.abs(out[0] - ref)))
    assert max_err < 5e-3, f"mismatch vs reference, max_err={max_err}"

    print("KERNEL_OK")
</pallas_src>

<mosaic_0001>
module attributes {stable_mosaic.version = 11 : i64} {
  func.func @_conv_kernel(%arg0: i32, %arg1: memref<1x1x18x34x3xbf16, #tpu.memory_space<vmem>>, %arg2: memref<9x3x8xbf16, #tpu.memory_space<vmem>>, %arg3: memref<1x8xf32, #tpu.memory_space<vmem>>, %arg4: memref<1x8xf32, #tpu.memory_space<vmem>>, %arg5: memref<512x8xbf16, #tpu.memory_space<vmem>>) attributes {dimension_semantics = [#tpu.dimension_semantics<parallel>], iteration_bounds = array<i64: 2>, scalar_prefetch = 0 : i64, scratch_operands = 0 : i64, tpu.core_type = #tpu.core_type<tc>, window_params = [{transform_indices = @transform_0, window_bounds = array<i64: 1, 1, 18, 34, 3>}, {pipeline_mode = #tpu.pipeline_mode<synchronous>, transform_indices = @transform_1, window_bounds = array<i64: 9, 3, 8>}, {pipeline_mode = #tpu.pipeline_mode<synchronous>, transform_indices = @transform_2, window_bounds = array<i64: 1, 8>}, {pipeline_mode = #tpu.pipeline_mode<synchronous>, transform_indices = @transform_3, window_bounds = array<i64: 1, 8>}, {transform_indices = @transform_4, window_bounds = array<i64: 512, 8>}]} {
    %cst = arith.constant 0.000000e+00 : f32
    %0 = vector.broadcast %cst : f32 to vector<512x8xf32>
    %c0 = arith.constant 0 : index
    %c0_0 = arith.constant 0 : index
    %c0_1 = arith.constant 0 : index
    %c0_2 = arith.constant 0 : index
    %c0_3 = arith.constant 0 : index
    %1 = vector.load %arg1[%c0, %c0_0, %c0_1, %c0_2, %c0_3] : memref<1x1x18x34x3xbf16, #tpu.memory_space<vmem>>, vector<1x1x16x32x3xbf16>
    %2 = vector.shape_cast %1 : vector<1x1x16x32x3xbf16> to vector<16x32x3xbf16>
    %3 = vector.shape_cast %2 : vector<16x32x3xbf16> to vector<512x3xbf16>
    %c0_4 = arith.constant 0 : index
    %c0_5 = arith.constant 0 : index
    %c0_6 = arith.constant 0 : index
    %4 = vector.load %arg2[%c0_4, %c0_5, %c0_6] : memref<9x3x8xbf16, #tpu.memory_space<vmem>>, vector<1x3x8xbf16>
    %5 = vector.shape_cast %4 : vector<1x3x8xbf16> to vector<3x8xbf16>
    %cst_7 = arith.constant dense<0.000000e+00> : vector<512x8xf32>
    %6 = tpu.matmul %3, %5, %cst_7 {dimension_numbers = #tpu.dot_dimension_numbers<[1], [0], [0], [1], [0, 0, 1, 1], [], []>} : vector<512x3xbf16>, vector<3x8xbf16>, vector<512x8xf32> -> vector<512x8xf32>
    %7 = arith.addf %0, %6 : vector<512x8xf32>
    %c0_8 = arith.constant 0 : index
    %c0_9 = arith.constant 0 : index
    %c0_10 = arith.constant 0 : index
    %c1 = arith.constant 1 : index
    %c0_11 = arith.constant 0 : index
    %8 = vector.load %arg1[%c0_8, %c0_9, %c0_10, %c1, %c0_11] : memref<1x1x18x34x3xbf16, #tpu.memory_space<vmem>>, vector<1x1x16x32x3xbf16>
    %9 = vector.shape_cast %8 : vector<1x1x16x32x3xbf16> to vector<16x32x3xbf16>
    %10 = vector.shape_cast %9 : vector<16x32x3xbf16> to vector<512x3xbf16>
    %c1_12 = arith.constant 1 : index
    %c0_13 = arith.constant 0 : index
    %c0_14 = arith.constant 0 : index
    %11 = vector.load %arg2[%c1_12, %c0_13, %c0_14] : memref<9x3x8xbf16, #tpu.memory_space<vmem>>, vector<1x3x8xbf16>
    %12 = vector.shape_cast %11 : vector<1x3x8xbf16> to vector<3x8xbf16>
    %cst_15 = arith.constant dense<0.000000e+00> : vector<512x8xf32>
    %13 = tpu.matmul %10, %12, %cst_15 {dimension_numbers = #tpu.dot_dimension_numbers<[1], [0], [0], [1], [0, 0, 1, 1], [], []>} : vector<512x3xbf16>, vector<3x8xbf16>, vector<512x8xf32> -> vector<512x8xf32>
    %14 = arith.addf %7, %13 : vector<512x8xf32>
    %c0_16 = arith.constant 0 : index
    %c0_17 = arith.constant 0 : index
    %c0_18 = arith.constant 0 : index
    %c2 = arith.constant 2 : index
    %c0_19 = arith.constant 0 : index
    %15 = vector.load %arg1[%c0_16, %c0_17, %c0_18, %c2, %c0_19] : memref<1x1x18x34x3xbf16, #tpu.memory_space<vmem>>, vector<1x1x16x32x3xbf16>
    %16 = vector.shape_cast %15 : vector<1x1x16x32x3xbf16> to vector<16x32x3xbf16>
    %17 = vector.shape_cast %16 : vector<16x32x3xbf16> to vector<512x3xbf16>
    %c2_20 = arith.constant 2 : index
    %c0_21 = arith.constant 0 : index
    %c0_22 = arith.constant 0 : index
    %18 = vector.load %arg2[%c2_20, %c0_21, %c0_22] : memref<9x3x8xbf16, #tpu.memory_space<vmem>>, vector<1x3x8xbf16>
    %19 = vector.shape_cast %18 : vector<1x3x8xbf16> to vector<3x8xbf16>
    %cst_23 = arith.constant dense<0.000000e+00> : vector<512x8xf32>
    %20 = tpu.matmul %17, %19, %cst_23 {dimension_numbers = #tpu.dot_dimension_numbers<[1], [0], [0], [1], [0, 0, 1, 1], [], []>} : vector<512x3xbf16>, vector<3x8xbf16>, vector<512x8xf32> -> vector<512x8xf32>
    %21 = arith.addf %14, %20 : vector<512x8xf32>
    %c0_24 = arith.constant 0 : index
    %c0_25 = arith.constant 0 : index
    %c1_26 = arith.constant 1 : index
    %c0_27 = arith.constant 0 : index
    %c0_28 = arith.constant 0 : index
    %22 = vector.load %arg1[%c0_24, %c0_25, %c1_26, %c0_27, %c0_28] : memref<1x1x18x34x3xbf16, #tpu.memory_space<vmem>>, vector<1x1x16x32x3xbf16>
    %23 = vector.shape_cast %22 : vector<1x1x16x32x3xbf16> to vector<16x32x3xbf16>
    %24 = vector.shape_cast %23 : vector<16x32x3xbf16> to vector<512x3xbf16>
    %c3 = arith.constant 3 : index
    %c0_29 = arith.constant 0 : index
    %c0_30 = arith.constant 0 : index
    %25 = vector.load %arg2[%c3, %c0_29, %c0_30] : memref<9x3x8xbf16, #tpu.memory_space<vmem>>, vector<1x3x8xbf16>
    %26 = vector.shape_cast %25 : vector<1x3x8xbf16> to vector<3x8xbf16>
    %cst_31 = arith.constant dense<0.000000e+00> : vector<512x8xf32>
    %27 = tpu.matmul %24, %26, %cst_31 {dimension_numbers = #tpu.dot_dimension_numbers<[1], [0], [0], [1], [0, 0, 1, 1], [], []>} : vector<512x3xbf16>, vector<3x8xbf16>, vector<512x8xf32> -> vector<512x8xf32>
    %28 = arith.addf %21, %27 : vector<512x8xf32>
    %c0_32 = arith.constant 0 : index
    %c0_33 = arith.constant 0 : index
    %c1_34 = arith.constant 1 : index
    %c1_35 = arith.constant 1 : index
    %c0_36 = arith.constant 0 : index
    %29 = vector.load %arg1[%c0_32, %c0_33, %c1_34, %c1_35, %c0_36] : memref<1x1x18x34x3xbf16, #tpu.memory_space<vmem>>, vector<1x1x16x32x3xbf16>
    %30 = vector.shape_cast %29 : vector<1x1x16x32x3xbf16> to vector<16x32x3xbf16>
    %31 = vector.shape_cast %30 : vector<16x32x3xbf16> to vector<512x3xbf16>
    %c4 = arith.constant 4 : index
    %c0_37 = arith.constant 0 : index
    %c0_38 = arith.constant 0 : index
    %32 = vector.load %arg2[%c4, %c0_37, %c0_38] : memref<9x3x8xbf16, #tpu.memory_space<vmem>>, vector<1x3x8xbf16>
    %33 = vector.shape_cast %32 : vector<1x3x8xbf16> to vector<3x8xbf16>
    %cst_39 = arith.constant dense<0.000000e+00> : vector<512x8xf32>
    %34 = tpu.matmul %31, %33, %cst_39 {dimension_numbers = #tpu.dot_dimension_numbers<[1], [0], [0], [1], [0, 0, 1, 1], [], []>} : vector<512x3xbf16>, vector<3x8xbf16>, vector<512x8xf32> -> vector<512x8xf32>
    %35 = arith.addf %28, %34 : vector<512x8xf32>
    %c0_40 = arith.constant 0 : index
    %c0_41 = arith.constant 0 : index
    %c1_42 = arith.constant 1 : index
    %c2_43 = arith.constant 2 : index
    %c0_44 = arith.constant 0 : index
    %36 = vector.load %arg1[%c0_40, %c0_41, %c1_42, %c2_43, %c0_44] : memref<1x1x18x34x3xbf16, #tpu.memory_space<vmem>>, vector<1x1x16x32x3xbf16>
    %37 = vector.shape_cast %36 : vector<1x1x16x32x3xbf16> to vector<16x32x3xbf16>
    %38 = vector.shape_cast %37 : vector<16x32x3xbf16> to vector<512x3xbf16>
    %c5 = arith.constant 5 : index
    %c0_45 = arith.constant 0 : index
    %c0_46 = arith.constant 0 : index
    %39 = vector.load %arg2[%c5, %c0_45, %c0_46] : memref<9x3x8xbf16, #tpu.memory_space<vmem>>, vector<1x3x8xbf16>
    %40 = vector.shape_cast %39 : vector<1x3x8xbf16> to vector<3x8xbf16>
    %cst_47 = arith.constant dense<0.000000e+00> : vector<512x8xf32>
    %41 = tpu.matmul %38, %40, %cst_47 {dimension_numbers = #tpu.dot_dimension_numbers<[1], [0], [0], [1], [0, 0, 1, 1], [], []>} : vector<512x3xbf16>, vector<3x8xbf16>, vector<512x8xf32> -> vector<512x8xf32>
    %42 = arith.addf %35, %41 : vector<512x8xf32>
    %c0_48 = arith.constant 0 : index
    %c0_49 = arith.constant 0 : index
    %c2_50 = arith.constant 2 : index
    %c0_51 = arith.constant 0 : index
    %c0_52 = arith.constant 0 : index
    %43 = vector.load %arg1[%c0_48, %c0_49, %c2_50, %c0_51, %c0_52] : memref<1x1x18x34x3xbf16, #tpu.memory_space<vmem>>, vector<1x1x16x32x3xbf16>
    %44 = vector.shape_cast %43 : vector<1x1x16x32x3xbf16> to vector<16x32x3xbf16>
    %45 = vector.shape_cast %44 : vector<16x32x3xbf16> to vector<512x3xbf16>
    %c6 = arith.constant 6 : index
    %c0_53 = arith.constant 0 : index
    %c0_54 = arith.constant 0 : index
    %46 = vector.load %arg2[%c6, %c0_53, %c0_54] : memref<9x3x8xbf16, #tpu.memory_space<vmem>>, vector<1x3x8xbf16>
    %47 = vector.shape_cast %46 : vector<1x3x8xbf16> to vector<3x8xbf16>
    %cst_55 = arith.constant dense<0.000000e+00> : vector<512x8xf32>
    %48 = tpu.matmul %45, %47, %cst_55 {dimension_numbers = #tpu.dot_dimension_numbers<[1], [0], [0], [1], [0, 0, 1, 1], [], []>} : vector<512x3xbf16>, vector<3x8xbf16>, vector<512x8xf32> -> vector<512x8xf32>
    %49 = arith.addf %42, %48 : vector<512x8xf32>
    %c0_56 = arith.constant 0 : index
    %c0_57 = arith.constant 0 : index
    %c2_58 = arith.constant 2 : index
    %c1_59 = arith.constant 1 : index
    %c0_60 = arith.constant 0 : index
    %50 = vector.load %arg1[%c0_56, %c0_57, %c2_58, %c1_59, %c0_60] : memref<1x1x18x34x3xbf16, #tpu.memory_space<vmem>>, vector<1x1x16x32x3xbf16>
    %51 = vector.shape_cast %50 : vector<1x1x16x32x3xbf16> to vector<16x32x3xbf16>
    %52 = vector.shape_cast %51 : vector<16x32x3xbf16> to vector<512x3xbf16>
    %c7 = arith.constant 7 : index
    %c0_61 = arith.constant 0 : index
    %c0_62 = arith.constant 0 : index
    %53 = vector.load %arg2[%c7, %c0_61, %c0_62] : memref<9x3x8xbf16, #tpu.memory_space<vmem>>, vector<1x3x8xbf16>
    %54 = vector.shape_cast %53 : vector<1x3x8xbf16> to vector<3x8xbf16>
    %cst_63 = arith.constant dense<0.000000e+00> : vector<512x8xf32>
    %55 = tpu.matmul %52, %54, %cst_63 {dimension_numbers = #tpu.dot_dimension_numbers<[1], [0], [0], [1], [0, 0, 1, 1], [], []>} : vector<512x3xbf16>, vector<3x8xbf16>, vector<512x8xf32> -> vector<512x8xf32>
    %56 = arith.addf %49, %55 : vector<512x8xf32>
    %c0_64 = arith.constant 0 : index
    %c0_65 = arith.constant 0 : index
    %c2_66 = arith.constant 2 : index
    %c2_67 = arith.constant 2 : index
    %c0_68 = arith.constant 0 : index
    %57 = vector.load %arg1[%c0_64, %c0_65, %c2_66, %c2_67, %c0_68] : memref<1x1x18x34x3xbf16, #tpu.memory_space<vmem>>, vector<1x1x16x32x3xbf16>
    %58 = vector.shape_cast %57 : vector<1x1x16x32x3xbf16> to vector<16x32x3xbf16>
    %59 = vector.shape_cast %58 : vector<16x32x3xbf16> to vector<512x3xbf16>
    %c8 = arith.constant 8 : index
    %c0_69 = arith.constant 0 : index
    %c0_70 = arith.constant 0 : index
    %60 = vector.load %arg2[%c8, %c0_69, %c0_70] : memref<9x3x8xbf16, #tpu.memory_space<vmem>>, vector<1x3x8xbf16>
    %61 = vector.shape_cast %60 : vector<1x3x8xbf16> to vector<3x8xbf16>
    %cst_71 = arith.constant dense<0.000000e+00> : vector<512x8xf32>
    %62 = tpu.matmul %59, %61, %cst_71 {dimension_numbers = #tpu.dot_dimension_numbers<[1], [0], [0], [1], [0, 0, 1, 1], [], []>} : vector<512x3xbf16>, vector<3x8xbf16>, vector<512x8xf32> -> vector<512x8xf32>
    %63 = arith.addf %56, %62 : vector<512x8xf32>
    %c0_72 = arith.constant 0 : index
    %c0_73 = arith.constant 0 : index
    %64 = vector.load %arg3[%c0_72, %c0_73] : memref<1x8xf32, #tpu.memory_space<vmem>>, vector<1x8xf32>
    %65 = vector.broadcast %64 : vector<1x8xf32> to vector<512x8xf32>
    %66 = arith.mulf %63, %65 : vector<512x8xf32>
    %c0_74 = arith.constant 0 : index
    %c0_75 = arith.constant 0 : index
    %67 = vector.load %arg4[%c0_74, %c0_75] : memref<1x8xf32, #tpu.memory_space<vmem>>, vector<1x8xf32>
    %68 = vector.broadcast %67 : vector<1x8xf32> to vector<512x8xf32>
    %69 = arith.addf %66, %68 : vector<512x8xf32>
    %cst_76 = arith.constant 0.000000e+00 : f32
    %70 = vector.broadcast %cst_76 : f32 to vector<512x8xf32>
    %71 = arith.cmpf ogt, %69, %70 : vector<512x8xf32>
    %cst_77 = arith.constant 0.00999999977 : f32
    %72 = vector.broadcast %cst_77 : f32 to vector<512x8xf32>
    %73 = arith.mulf %72, %69 : vector<512x8xf32>
    %74 = arith.select %71, %69, %73 : vector<512x8xi1>, vector<512x8xf32>
    %75 = arith.truncf %74 : vector<512x8xf32> to vector<512x8xbf16>
    %c0_78 = arith.constant 0 : index
    %c0_79 = arith.constant 0 : index
    %76 = vector.load %arg5[%c0_78, %c0_79] : memref<512x8xbf16, #tpu.memory_space<vmem>>, vector<512x8xbf16>
    tpu.vector_store %arg5[%c0_78, %c0_79], %75 {strides = array<i32>} : memref<512x8xbf16, #tpu.memory_space<vmem>>, vector<512x8xbf16>,
    return
  }
  func.func @transform_0(%arg0: i32) -> (i32, i32, i32, i32, i32) {
    %c0_i32 = arith.constant 0 : i32
    %c0_i32_0 = arith.constant 0 : i32
    %c0_i32_1 = arith.constant 0 : i32
    %c0_i32_2 = arith.constant 0 : i32
    %c0_i32_3 = arith.constant 0 : i32
    return %arg0, %c0_i32, %c0_i32_0, %c0_i32_1, %c0_i32_2 : i32, i32, i32, i32, i32
  }
  func.func @transform_1(%arg0: i32) -> (i32, i32, i32) {
    %c0_i32 = arith.constant 0 : i32
    %c0_i32_0 = arith.constant 0 : i32
    %c0_i32_1 = arith.constant 0 : i32
    %c0_i32_2 = arith.constant 0 : i32
    return %c0_i32, %c0_i32_0, %c0_i32_1 : i32, i32, i32
  }
  func.func @transform_2(%arg0: i32) -> (i32, i32) {
    %c0_i32 = arith.constant 0 : i32
    %c0_i32_0 = arith.constant 0 : i32
    %c0_i32_1 = arith.constant 0 : i32
    return %c0_i32, %c0_i32_0 : i32, i32
  }
  func.func @transform_3(%arg0: i32) -> (i32, i32) {
    %c0_i32 = arith.constant 0 : i32
    %c0_i32_0 = arith.constant 0 : i32
    %c0_i32_1 = arith.constant 0 : i32
    return %c0_i32, %c0_i32_0 : i32, i32
  }
  func.func @transform_4(%arg0: i32) -> (i32, i32) {
    %c0_i32 = arith.constant 0 : i32
    %c0_i32_0 = arith.constant 0 : i32
    return %arg0, %c0_i32 : i32, i32
  }
}

</mosaic_0001>

<llo_original>
// kernel: tpu_custom_call.1
$region0: #{tpu_custom_call.1}
  #allocation0 [shape = 'u32[]', space=smem, size = 0x4, offset = 0x4, fixed_abs, tag = 'smem constant byte address 0x4 - core index']
  #allocation1 [shape = 'u32[72,128]{1,0:T(1,128)}', space=vmem, size = 0x9000, scoped, tag = 'internal scratch']
  %s0 = inlined_call_operand.vmem [shape: bf16[2,1,18,34,3], index: 0, kind: input, shape index: {}]
  %s1 = inlined_call_operand.vmem [shape: bf16[9,3,8], index: 1, kind: input, shape index: {}]
  %s2 = inlined_call_operand.vmem [shape: f32[1,8], index: 2, kind: input, shape index: {}]
  %s3 = inlined_call_operand.vmem [shape: f32[1,8], index: 3, kind: input, shape index: {}]
  %s4 = inlined_call_operand.vmem [shape: bf16[1024,8], index: 4, kind: output, shape index: {}]
  %s5 = sld [smem:[#allocation0]]
  $region49: #{tpu_custom_call.1} parent=0
    _
  %s7 = ssub.s32 1, %s5
  %s8 = scalar_select 0, %s7, %s5
  loop: start=0, step=1, limit=4
  $region2: #{tpu_custom_call.1} parent=0 // loop_pre_header
    _
  $region3: #{tpu_custom_call.1} parent=0 // loop_header
    %s10 = sphi 0, %s14
    %p11 = scmp.ge.s32.totalorder %s10, 4
    %s20 = sphi 0, %s22
    %s23 = sphi 0, %s20
    %s24 = sphi 0, %s23
    %s40 = sphi 0, %s24
    %s44 = sphi 0, %s44
    %s46 = sphi 0, %s44
    %s47 = sphi 0, %s46
    %s61 = sphi 0, %s47
    %s65 = sphi 0, %s65
    %s67 = sphi 0, %s65
    %s68 = sphi 0, %s67
    %s82 = sphi 0, %s68
    %s86 = sphi 0, %s86
    %s88 = sphi 0, %s86
    %s89 = sphi 0, %s88
    %s103 = sphi 0, %s89
    %s109 = sphi 0, %s111
    %s112 = sphi 0, %s109
    %s113 = sphi 0, %s112
    %s129 = sphi 0, %s113
  $region4: #{tpu_custom_call.1} parent=0 // loop_header_branch
    %13 = sbr.rel (%p11) target = $region8
  $region5: #{tpu_custom_call.1} parent=0 // loop_body
    %s15 = ssub.s32 %s10, 1
    %s16 = ssub.s32 %s10, 2
    %s17 = sadd.s32 %s10, 1
    %s18 = ssub.s32 %s10, %s17
    %p19 = scmp.eq.s32.totalorder %s18, 0
    %s21 = sadd.s32 %s20, 1
    %s22 = scalar_select %p19, %s20, %s21
    %p25 = pneg %p19
    %p26 = scmp.eq.s32.totalorder %s10, 1
    %p27 = por %p25, %p26
    %p28 = scmp.ne.s32.totalorder %s20, %s23
    %p29 = scmp.eq.s32.totalorder %s10, 0
    %p30 = por %p28, %p29
    %p31 = scmp.ne.s32.totalorder %s20, %s23
    %p32 = scmp.eq.s32.totalorder %s15, 1
    %p33 = por %p31, %p32
    %p34 = scmp.ne.s32.totalorder %s23, %s24
    %p35 = scmp.eq.s32.totalorder %s15, 0
    %p36 = por %p34, %p35
    %p37 = scmp.ne.s32.totalorder %s23, %s24
    %p38 = scmp.eq.s32.totalorder %s16, 1
    %p39 = por %p37, %p38
    %p41 = scmp.ne.s32.totalorder %s24, %s40
    %p42 = scmp.eq.s32.totalorder %s16, 0
    %p43 = por %p41, %p42
    %s45 = sadd.s32 %s44, 1
    %p48 = scmp.eq.s32.totalorder %s10, 1
    %p49 = scmp.ne.s32.totalorder %s44, %s46
    %p50 = scmp.eq.s32.totalorder %s10, 0
    %p51 = por %p49, %p50
    %p52 = scmp.ne.s32.totalorder %s44, %s46
    %p53 = scmp.eq.s32.totalorder %s15, 1
    %p54 = por %p52, %p53
    %p55 = scmp.ne.s32.totalorder %s46, %s47
    %p56 = scmp.eq.s32.totalorder %s15, 0
    %p57 = por %p55, %p56
    %p58 = scmp.ne.s32.totalorder %s46, %s47
    %p59 = scmp.eq.s32.totalorder %s16, 1
    %p60 = por %p58, %p59
    %p62 = scmp.ne.s32.totalorder %s47, %s61
    %p63 = scmp.eq.s32.totalorder %s16, 0
    %p64 = por %p62, %p63
    %s66 = sadd.s32 %s65, 1
    %p69 = scmp.eq.s32.totalorder %s10, 1
    %p70 = scmp.ne.s32.totalorder %s65, %s67
    %p71 = scmp.eq.s32.totalorder %s10, 0
    %p72 = por %p70, %p71
    %p73 = scmp.ne.s32.totalorder %s65, %s67
    %p74 = scmp.eq.s32.totalorder %s15, 1
    %p75 = por %p73, %p74
    %p76 = scmp.ne.s32.totalorder %s67, %s68
    %p77 = scmp.eq.s32.totalorder %s15, 0
    %p78 = por %p76, %p77
    %p79 = scmp.ne.s32.totalorder %s67, %s68
    %p80 = scmp.eq.s32.totalorder %s16, 1
    %p81 = por %p79, %p80
    %p83 = scmp.ne.s32.totalorder %s68, %s82
    %p84 = scmp.eq.s32.totalorder %s16, 0
    %p85 = por %p83, %p84
    %s87 = sadd.s32 %s86, 1
    %p90 = scmp.eq.s32.totalorder %s10, 1
    %p91 = scmp.ne.s32.totalorder %s86, %s88
    %p92 = scmp.eq.s32.totalorder %s10, 0
    %p93 = por %p91, %p92
    %p94 = scmp.ne.s32.totalorder %s86, %s88
    %p95 = scmp.eq.s32.totalorder %s15, 1
    %p96 = por %p94, %p95
    %p97 = scmp.ne.s32.totalorder %s88, %s89
    %p98 = scmp.eq.s32.totalorder %s15, 0
    %p99 = por %p97, %p98
    %p100 = scmp.ne.s32.totalorder %s88, %s89
    %p101 = scmp.eq.s32.totalorder %s16, 1
    %p102 = por %p100, %p101
    %p104 = scmp.ne.s32.totalorder %s89, %s103
    %p105 = scmp.eq.s32.totalorder %s16, 0
    %p106 = por %p104, %p105
    %s107 = ssub.s32 %s10, %s17
    %p108 = scmp.eq.s32.totalorder %s107, 0
    %s110 = sadd.s32 %s109, 1
    %s111 = scalar_select %p108, %s109, %s110
    %p114 = pneg %p108
    %p115 = scmp.eq.s32.totalorder %s10, 1
    %p116 = por %p114, %p115
    %p117 = scmp.ne.s32.totalorder %s109, %s112
    %p118 = scmp.eq.s32.totalorder %s10, 0
    %p119 = por %p117, %p118
    %p120 = scmp.ne.s32.totalorder %s109, %s112
    %p121 = scmp.eq.s32.totalorder %s15, 1
    %p122 = por %p120, %p121
    %p123 = scmp.ne.s32.totalorder %s112, %s113
    %p124 = scmp.eq.s32.totalorder %s15, 0
    %p125 = por %p123, %p124
    %p126 = scmp.ne.s32.totalorder %s112, %s113
    %p127 = scmp.eq.s32.totalorder %s16, 1
    %p128 = por %p126, %p127
    %p130 = scmp.ne.s32.totalorder %s113, %s129
    %p131 = scmp.eq.s32.totalorder %s16, 0
    %p132 = por %p130, %p131
    %p133 = scmp.le.s32.totalorder 1, %s10
    %p134 = scmp.lt.s32.totalorder %s10, 3
    %p135 = pnand %p133, %p134
    %p136 = pneg %p135
    // Predicated region
    $region9: #{tpu_custom_call.1} parent=5 // pred_check
      _
    $region10: #{tpu_custom_call.1} parent=5 // pred_check_branch
      %138 = sbr.rel (%p135) target = $region12
    $region11: #{tpu_custom_call.1} parent=5 // pred_region
      %s139 = ssub.s32 %s10, 1
      // Predicated region
      $region13: #{tpu_custom_call.1} parent=11 // pred_check
        %p140 = pneg %p57
      $region14: #{tpu_custom_call.1} parent=11 // pred_check_branch
        %142 = sbr.rel (%p140) target = $region16
      $region15: #{tpu_custom_call.1} parent=11 // pred_region
        _
      $region16: #{tpu_custom_call.1} parent=11 // pred_fallthru
        _
      // Predicated region
      $region17: #{tpu_custom_call.1} parent=11 // pred_check
        %p143 = pneg %p78
      $region18: #{tpu_custom_call.1} parent=11 // pred_check_branch
        %145 = sbr.rel (%p143) target = $region20
      $region19: #{tpu_custom_call.1} parent=11 // pred_region
        _
      $region20: #{tpu_custom_call.1} parent=11 // pred_fallthru
        _
      // Predicated region
      $region21: #{tpu_custom_call.1} parent=11 // pred_check
        %p146 = pneg %p99
      $region22: #{tpu_custom_call.1} parent=11 // pred_check_branch
        %148 = sbr.rel (%p146) target = $region24
      $region23: #{tpu_custom_call.1} parent=11 // pred_region
        _
      $region24: #{tpu_custom_call.1} parent=11 // pred_fallthru
        _
    $region12: #{tpu_custom_call.1} parent=5 // pred_fallthru
      _
    %p149 = scmp.lt.s32.totalorder %s10, 2
    // Predicated region
    $region25: #{tpu_custom_call.1} parent=5 // pred_check
      %p150 = pneg %p149
    $region26: #{tpu_custom_call.1} parent=5 // pred_check_branch
      %152 = sbr.rel (%p150) target = $region28
    $region27: #{tpu_custom_call.1} parent=5 // pred_region
      // Predicated region
      $region29: #{tpu_custom_call.1} parent=27 // pred_check
        %p153 = pneg %p30
      $region30: #{tpu_custom_call.1} parent=27 // pred_check_branch
        %155 = sbr.rel (%p153) target = $region32
      $region31: #{tpu_custom_call.1} parent=27 // pred_region
        %p156 = scmp.lt.s32.totalorder %s10, 1
        %s157 = scalar_select %p156, %s10, 1
        %s158 = smul.addr %s157, 90
        %s159 = smul.addr %s158, 4
        %s160 = scalar_lea.vmem %s0, %s159
      $region32: #{tpu_custom_call.1} parent=27 // pred_fallthru
        _
    $region28: #{tpu_custom_call.1} parent=5 // pred_fallthru
      _
    %p161 = scmp.le.s32.totalorder 1, %s10
    %p162 = scmp.lt.s32.totalorder %s10, 3
    %p163 = pnand %p161, %p162
    %p164 = pneg %p163
    // Predicated region
    $region33: #{tpu_custom_call.1} parent=5 // pred_check
      _
    $region34: #{tpu_custom_call.1} parent=5 // pred_check_branch
      %166 = sbr.rel (%p163) target = $region36
    $region35: #{tpu_custom_call.1} parent=5 // pred_region
      %s167 = ssub.s32 %s10, 1
      %p168 = scmp.lt.s32.totalorder %s15, 1
      %s169 = scalar_select %p168, %s15, 1
      %s170 = smul.addr %s169, 90
      %s171 = smul.addr %s170, 4
      %s172 = scalar_lea.vmem %s0, %s171
      %p173 = pneg %p36
      %p174 = pneg %p33
      %p175 = pneg %p57
      %p176 = pneg %p54
      %p177 = pneg %p78
      %p178 = pneg %p75
      %p179 = pneg %p99
      %p180 = pneg %p96
      %p181 = pneg %p125
      %p182 = pneg %p122
      %s183 = smul.u32 64, %s15
      %p184 = scmp.lt.s32.totalorder %s183, 127
      %s185 = scalar_select %p184, %s183, 127
      %s186 = smul.addr %s185, 4
      %s187 = scalar_lea.vmem %s4, %s186
      %p188 = scmp.lt.s32.totalorder %s15, 1
      %s189 = scalar_select %p188, %s15, 1
      %s190 = smul.addr %s189, 90
      %s191 = smul.addr %s190, 4
      %s192 = scalar_lea.vmem %s0, %s191
      %s193 = smul.u32 64, %s15
      %p194 = scmp.lt.s32.totalorder %s193, 127
      %s195 = scalar_select %p194, %s193, 127
      %s196 = smul.addr %s195, 4
      %s197 = scalar_lea.vmem %s4, %s196
      %s198 = smul.u32 64, %s15
      %v200 = vld [vmem:[%s192] sm:$0xf]
      %v201 = vld [vmem:[%s192 + $0x4] sm:$0xf]
      %v202 = vld [vmem:[%s192 + $0x8] sm:$0xf]
      %v203 = vld [vmem:[%s192 + $0xc] sm:$0xf]
      %v204 = vld [vmem:[%s192 + $0x14] sm:$0xf]
      %v205 = vld [vmem:[%s192 + $0x18] sm:$0xf]
      %v206 = vld [vmem:[%s192 + $0x1c] sm:$0xf]
      %v207 = vld [vmem:[%s192 + $0x20] sm:$0xf]
      %v208 = vld [vmem:[%s192 + $0x28] sm:$0xf]
      %v209 = vld [vmem:[%s192 + $0x2c] sm:$0xf]
      %v210 = vld [vmem:[%s192 + $0x30] sm:$0xf]
      %v211 = vld [vmem:[%s192 + $0x34] sm:$0xf]
      %v212 = vld [vmem:[%s192 + $0x3c] sm:$0xf]
      %v213 = vld [vmem:[%s192 + $0x40] sm:$0xf]
      %v214 = vld [vmem:[%s192 + $0x44] sm:$0xf]
      %v215 = vld [vmem:[%s192 + $0x48] sm:$0xf]
      %v216 = vld [vmem:[%s192 + $0x50] sm:$0xf]
      %v217 = vld [vmem:[%s192 + $0x54] sm:$0xf]
      %v218 = vld [vmem:[%s192 + $0x58] sm:$0xf]
      %v219 = vld [vmem:[%s192 + $0x5c] sm:$0xf]
      %v220 = vld [vmem:[%s192 + $0x64] sm:$0xf]
      %v221 = vld [vmem:[%s192 + $0x68] sm:$0xf]
      %v222 = vld [vmem:[%s192 + $0x6c] sm:$0xf]
      %v223 = vld [vmem:[%s192 + $0x70] sm:$0xf]
      %v224 = vld [vmem:[%s192 + $0x78] sm:$0xf]
      %v225 = vld [vmem:[%s192 + $0x7c] sm:$0xf]
      %v226 = vld [vmem:[%s192 + $0x80] sm:$0xf]
      %v227 = vld [vmem:[%s192 + $0x84] sm:$0xf]
      %v228 = vld [vmem:[%s192 + $0x8c] sm:$0xf]
      %v229 = vld [vmem:[%s192 + $0x90] sm:$0xf]
      %v230 = vld [vmem:[%s192 + $0x94] sm:$0xf]
      %v231 = vld [vmem:[%s192 + $0x98] sm:$0xf]
      %v232 = vld [vmem:[%s192 + $0xa0] sm:$0xf]
      %v233 = vld [vmem:[%s192 + $0xa4] sm:$0xf]
      %v234 = vld [vmem:[%s192 + $0xa8] sm:$0xf]
      %v235 = vld [vmem:[%s192 + $0xac] sm:$0xf]
      %v236 = vld [vmem:[%s192 + $0xb4] sm:$0xf]
      %v237 = vld [vmem:[%s192 + $0xb8] sm:$0xf]
      %v238 = vld [vmem:[%s192 + $0xbc] sm:$0xf]
      %v239 = vld [vmem:[%s192 + $0xc0] sm:$0xf]
      %v240 = vld [vmem:[%s192 + $0xc8] sm:$0xf]
      %v241 = vld [vmem:[%s192 + $0xcc] sm:$0xf]
      %v242 = vld [vmem:[%s192 + $0xd0] sm:$0xf]
      %v243 = vld [vmem:[%s192 + $0xd4] sm:$0xf]
      %v244 = vld [vmem:[%s192 + $0xdc] sm:$0xf]
      %v245 = vld [vmem:[%s192 + $0xe0] sm:$0xf]
      %v246 = vld [vmem:[%s192 + $0xe4] sm:$0xf]
      %v247 = vld [vmem:[%s192 + $0xe8] sm:$0xf]
      %v248 = vld [vmem:[%s192 + $0xf0] sm:$0xf]
      %v249 = vld [vmem:[%s192 + $0xf4] sm:$0xf]
      %v250 = vld [vmem:[%s192 + $0xf8] sm:$0xf]
      %v251 = vld [vmem:[%s192 + $0xfc] sm:$0xf]
      %v252 = vld [vmem:[%s192 + $0x104] sm:$0xf]
      %v253 = vld [vmem:[%s192 + $0x108] sm:$0xf]
      %v254 = vld [vmem:[%s192 + $0x10c] sm:$0xf]
      %v255 = vld [vmem:[%s192 + $0x110] sm:$0xf]
      %v256 = vld [vmem:[%s192 + $0x118] sm:$0xf]
      %v257 = vld [vmem:[%s192 + $0x11c] sm:$0xf]
      %v258 = vld [vmem:[%s192 + $0x120] sm:$0xf]
      %v259 = vld [vmem:[%s192 + $0x124] sm:$0xf]
      %v260 = vld [vmem:[%s192 + $0x12c] sm:$0xf]
      %v261 = vld [vmem:[%s192 + $0x130] sm:$0xf]
      %v262 = vld [vmem:[%s192 + $0x134] sm:$0xf]
      %v263 = vld [vmem:[%s192 + $0x138] sm:$0xf]
      %v264 = vld [vmem:[%s1] sm:$0x3]
      %v265 = vld [vmem:[%s192 + $0x10] sm:$0x1]
      %v266 = vld [vmem:[%s192 + $0x24] sm:$0x1]
      %v267 = vld [vmem:[%s192 + $0x38] sm:$0x1]
      %v268 = vld [vmem:[%s192 + $0x4c] sm:$0x1]
      %v269 = vld [vmem:[%s192 + $0x60] sm:$0x1]
      %v270 = vld [vmem:[%s192 + $0x74] sm:$0x1]
      %v271 = vld [vmem:[%s192 + $0x88] sm:$0x1]
      %v272 = vld [vmem:[%s192 + $0x9c] sm:$0x1]
      %v273 = vld [vmem:[%s192 + $0xb0] sm:$0x1]
      %v274 = vld [vmem:[%s192 + $0xc4] sm:$0x1]
      %v275 = vld [vmem:[%s192 + $0xd8] sm:$0x1]
      %v276 = vld [vmem:[%s192 + $0xec] sm:$0x1]
      %v277 = vld [vmem:[%s192 + $0x100] sm:$0x1]
      %v278 = vld [vmem:[%s192 + $0x114] sm:$0x1]
      %v279 = vld [vmem:[%s192 + $0x128] sm:$0x1]
      %v280 = vld [vmem:[%s192 + $0x13c] sm:$0x1]
      %vm281 = vsmask.f32 3328
      %vm282 = vsmask.f32 7440
      %vm283 = vmor %vm281, %vm282
      %v285 = vshrl.u32 %v200, 16
      %v287 = vrot.slane %v285, 4
      %v288 = vshll.u32 %v200, 16
      %v290 = vrot.slane %v288, 5
      %v291 = vor.u32 %v287, %v290
      %v292 = vrot.slane %v291, 4
      %v294 = vshll.u32 %v201, 16
      %v296 = vrot.slane %v294, 5
      %v297 = vsel %vm283, %v292, %v296
      %v298 = vshrl.u32 %v201, 16
      %v300 = vrot.slane %v298, 4
      %v301 = vor.u32 %v300, %v296
      %v302 = vrot.slane %v301, 4
      %v304 = vshll.u32 %v202, 16
      %v306 = vrot.slane %v304, 5
      %v307 = vsel %vm283, %v302, %v306
      %v308 = vshrl.u32 %v202, 16
      %v310 = vrot.slane %v308, 4
      %v311 = vor.u32 %v310, %v306
      %v312 = vrot.slane %v311, 4
      %v314 = vshll.u32 %v203, 16
      %v316 = vrot.slane %v314, 5
      %v317 = vsel %vm283, %v312, %v316
      %v318 = vshrl.u32 %v203, 16
      %v320 = vrot.slane %v318, 4
      %v321 = vor.u32 %v320, %v316
      %v322 = vrot.slane %v321, 4
      %v324 = vshll.u32 %v265, 16
      %v326 = vrot.slane %v324, 5
      %v327 = vsel %vm283, %v322, %v326
      %v329 = vshrl.u32 %v204, 16
      %v331 = vrot.slane %v329, 4
      %v332 = vshll.u32 %v204, 16
      %v334 = vrot.slane %v332, 5
      %v335 = vor.u32 %v331, %v334
      %v336 = vrot.slane %v335, 4
      %v338 = vshll.u32 %v205, 16
      %v340 = vrot.slane %v338, 5
      %v341 = vsel %vm283, %v336, %v340
      %v342 = vshrl.u32 %v205, 16
      %v344 = vrot.slane %v342, 4
      %v345 = vor.u32 %v344, %v340
      %v346 = vrot.slane %v345, 4
      %v348 = vshll.u32 %v206, 16
      %v350 = vrot.slane %v348, 5
      %v351 = vsel %vm283, %v346, %v350
      %v352 = vshrl.u32 %v206, 16
      %v354 = vrot.slane %v352, 4
      %v355 = vor.u32 %v354, %v350
      %v356 = vrot.slane %v355, 4
      %v358 = vshll.u32 %v207, 16
      %v360 = vrot.slane %v358, 5
      %v361 = vsel %vm283, %v356, %v360
      %v362 = vshrl.u32 %v207, 16
      %v364 = vrot.slane %v362, 4
      %v365 = vor.u32 %v364, %v360
      %v366 = vrot.slane %v365, 4
      %v368 = vshll.u32 %v266, 16
      %v370 = vrot.slane %v368, 5
      %v371 = vsel %vm283, %v366, %v370
      %v373 = vshrl.u32 %v208, 16
      %v375 = vrot.slane %v373, 4
      %v376 = vshll.u32 %v208, 16
      %v378 = vrot.slane %v376, 5
      %v379 = vor.u32 %v375, %v378
      %v380 = vrot.slane %v379, 4
      %v382 = vshll.u32 %v209, 16
      %v384 = vrot.slane %v382, 5
      %v385 = vsel %vm283, %v380, %v384
      %v386 = vshrl.u32 %v209, 16
      %v388 = vrot.slane %v386, 4
      %v389 = vor.u32 %v388, %v384
      %v390 = vrot.slane %v389, 4
      %v392 = vshll.u32 %v210, 16
      %v394 = vrot.slane %v392, 5
      %v395 = vsel %vm283, %v390, %v394
      %v396 = vshrl.u32 %v210, 16
      %v398 = vrot.slane %v396, 4
      %v399 = vor.u32 %v398, %v394
      %v400 = vrot.slane %v399, 4
      %v402 = vshll.u32 %v211, 16
      %v404 = vrot.slane %v402, 5
      %v405 = vsel %vm283, %v400, %v404
      %v406 = vshrl.u32 %v211, 16
      %v408 = vrot.slane %v406, 4
      %v409 = vor.u32 %v408, %v404
      %v410 = vrot.slane %v409, 4
      %v412 = vshll.u32 %v267, 16
      %v414 = vrot.slane %v412, 5
      %v415 = vsel %vm283, %v410, %v414
      %v417 = vshrl.u32 %v212, 16
      %v419 = vrot.slane %v417, 4
      %v420 = vshll.u32 %v212, 16
      %v422 = vrot.slane %v420, 5
      %v423 = vor.u32 %v419, %v422
      %v424 = vrot.slane %v423, 4
      %v426 = vshll.u32 %v213, 16
      %v428 = vrot.slane %v426, 5
      %v429 = vsel %vm283, %v424, %v428
      %v430 = vshrl.u32 %v213, 16
      %v432 = vrot.slane %v430, 4
      %v433 = vor.u32 %v432, %v428
      %v434 = vrot.slane %v433, 4
      %v436 = vshll.u32 %v214, 16
      %v438 = vrot.slane %v436, 5
      %v439 = vsel %vm283, %v434, %v438
      %v440 = vshrl.u32 %v214, 16
      %v442 = vrot.slane %v440, 4
      %v443 = vor.u32 %v442, %v438
      %v444 = vrot.slane %v443, 4
      %v446 = vshll.u32 %v215, 16
      %v448 = vrot.slane %v446, 5
      %v449 = vsel %vm283, %v444, %v448
      %v450 = vshrl.u32 %v215, 16
      %v452 = vrot.slane %v450, 4
      %v453 = vor.u32 %v452, %v448
      %v454 = vrot.slane %v453, 4
      %v456 = vshll.u32 %v268, 16
      %v458 = vrot.slane %v456, 5
      %v459 = vsel %vm283, %v454, %v458
      %v461 = vshrl.u32 %v216, 16
      %v463 = vrot.slane %v461, 4
      %v464 = vshll.u32 %v216, 16
      %v466 = vrot.slane %v464, 5
      %v467 = vor.u32 %v463, %v466
      %v468 = vrot.slane %v467, 4
      %v470 = vshll.u32 %v217, 16
      %v472 = vrot.slane %v470, 5
      %v473 = vsel %vm283, %v468, %v472
      %v474 = vshrl.u32 %v217, 16
      %v476 = vrot.slane %v474, 4
      %v477 = vor.u32 %v476, %v472
      %v478 = vrot.slane %v477, 4
      %v480 = vshll.u32 %v218, 16
      %v482 = vrot.slane %v480, 5
      %v483 = vsel %vm283, %v478, %v482
      %v484 = vshrl.u32 %v218, 16
      %v486 = vrot.slane %v484, 4
      %v487 = vor.u32 %v486, %v482
      %v488 = vrot.slane %v487, 4
      %v490 = vshll.u32 %v219, 16
      %v492 = vrot.slane %v490, 5
      %v493 = vsel %vm283, %v488, %v492
      %v494 = vshrl.u32 %v219, 16
      %v496 = vrot.slane %v494, 4
      %v497 = vor.u32 %v496, %v492
      %v498 = vrot.slane %v497, 4
      %v500 = vshll.u32 %v269, 16
      %v502 = vrot.slane %v500, 5
      %v503 = vsel %vm283, %v498, %v502
      %v505 = vshrl.u32 %v220, 16
      %v507 = vrot.slane %v505, 4
      %v508 = vshll.u32 %v220, 16
      %v510 = vrot.slane %v508, 5
      %v511 = vor.u32 %v507, %v510
      %v512 = vrot.slane %v511, 4
      %v514 = vshll.u32 %v221, 16
      %v516 = vrot.slane %v514, 5
      %v517 = vsel %vm283, %v512, %v516
      %v518 = vshrl.u32 %v221, 16
      %v520 = vrot.slane %v518, 4
      %v521 = vor.u32 %v520, %v516
      %v522 = vrot.slane %v521, 4
      %v524 = vshll.u32 %v222, 16
      %v526 = vrot.slane %v524, 5
      %v527 = vsel %vm283, %v522, %v526
      %v528 = vshrl.u32 %v222, 16
      %v530 = vrot.slane %v528, 4
      %v531 = vor.u32 %v530, %v526
      %v532 = vrot.slane %v531, 4
      %v534 = vshll.u32 %v223, 16
      %v536 = vrot.slane %v534, 5
      %v537 = vsel %vm283, %v532, %v536
      %v538 = vshrl.u32 %v223, 16
      %v540 = vrot.slane %v538, 4
      %v541 = vor.u32 %v540, %v536
      %v542 = vrot.slane %v541, 4
      %v544 = vshll.u32 %v270, 16
      %v546 = vrot.slane %v544, 5
      %v547 = vsel %vm283, %v542, %v546
      %v549 = vshrl.u32 %v224, 16
      %v551 = vrot.slane %v549, 4
      %v552 = vshll.u32 %v224, 16
      %v554 = vrot.slane %v552, 5
      %v555 = vor.u32 %v551, %v554
      %v556 = vrot.slane %v555, 4
      %v558 = vshll.u32 %v225, 16
      %v560 = vrot.slane %v558, 5
      %v561 = vsel %vm283, %v556, %v560
      %v562 = vshrl.u32 %v225, 16
      %v564 = vrot.slane %v562, 4
      %v565 = vor.u32 %v564, %v560
      %v566 = vrot.slane %v565, 4
      %v568 = vshll.u32 %v226, 16
      %v570 = vrot.slane %v568, 5
      %v571 = vsel %vm283, %v566, %v570
      %v572 = vshrl.u32 %v226, 16
      %v574 = vrot.slane %v572, 4
      %v575 = vor.u32 %v574, %v570
      %v576 = vrot.slane %v575, 4
      %v578 = vshll.u32 %v227, 16
      %v580 = vrot.slane %v578, 5
      %v581 = vsel %vm283, %v576, %v580
      %v582 = vshrl.u32 %v227, 16
      %v584 = vrot.slane %v582, 4
      %v585 = vor.u32 %v584, %v580
      %v586 = vrot.slane %v585, 4
      %v588 = vshll.u32 %v271, 16
      %v590 = vrot.slane %v588, 5
      %v591 = vsel %vm283, %v586, %v590
      %v593 = vshrl.u32 %v228, 16
      %v595 = vrot.slane %v593, 4
      %v596 = vshll.u32 %v228, 16
      %v598 = vrot.slane %v596, 5
      %v599 = vor.u32 %v595, %v598
      %v600 = vrot.slane %v599, 4
      %v602 = vshll.u32 %v229, 16
      %v604 = vrot.slane %v602, 5
      %v605 = vsel %vm283, %v600, %v604
      %v606 = vshrl.u32 %v229, 16
      %v608 = vrot.slane %v606, 4
      %v609 = vor.u32 %v608, %v604
      %v610 = vrot.slane %v609, 4
      %v612 = vshll.u32 %v230, 16
      %v614 = vrot.slane %v612, 5
      %v615 = vsel %vm283, %v610, %v614
      %v616 = vshrl.u32 %v230, 16
      %v618 = vrot.slane %v616, 4
      %v619 = vor.u32 %v618, %v614
      %v620 = vrot.slane %v619, 4
      %v622 = vshll.u32 %v231, 16
      %v624 = vrot.slane %v622, 5
      %v625 = vsel %vm283, %v620, %v624
      %v626 = vshrl.u32 %v231, 16
      %v628 = vrot.slane %v626, 4
      %v629 = vor.u32 %v628, %v624
      %v630 = vrot.slane %v629, 4
      %v632 = vshll.u32 %v272, 16
      %v634 = vrot.slane %v632, 5
      %v635 = vsel %vm283, %v630, %v634
      %v637 = vshrl.u32 %v232, 16
      %v639 = vrot.slane %v637, 4
      %v640 = vshll.u32 %v232, 16
      %v642 = vrot.slane %v640, 5
      %v643 = vor.u32 %v639, %v642
      %v644 = vrot.slane %v643, 4
      %v646 = vshll.u32 %v233, 16
      %v648 = vrot.slane %v646, 5
      %v649 = vsel %vm283, %v644, %v648
      %v650 = vshrl.u32 %v233, 16
      %v652 = vrot.slane %v650, 4
      %v653 = vor.u32 %v652, %v648
      %v654 = vrot.slane %v653, 4
      %v656 = vshll.u32 %v234, 16
      %v658 = vrot.slane %v656, 5
      %v659 = vsel %vm283, %v654, %v658
      %v660 = vshrl.u32 %v234, 16
      %v662 = vrot.slane %v660, 4
      %v663 = vor.u32 %v662, %v658
      %v664 = vrot.slane %v663, 4
      %v666 = vshll.u32 %v235, 16
      %v668 = vrot.slane %v666, 5
      %v669 = vsel %vm283, %v664, %v668
      %v670 = vshrl.u32 %v235, 16
      %v672 = vrot.slane %v670, 4
      %v673 = vor.u32 %v672, %v668
      %v674 = vrot.slane %v673, 4
      %v676 = vshll.u32 %v273, 16
      %v678 = vrot.slane %v676, 5
      %v679 = vsel %vm283, %v674, %v678
      %v681 = vshrl.u32 %v236, 16
      %v683 = vrot.slane %v681, 4
      %v684 = vshll.u32 %v236, 16
      %v686 = vrot.slane %v684, 5
      %v687 = vor.u32 %v683, %v686
      %v688 = vrot.slane %v687, 4
      %v690 = vshll.u32 %v237, 16
      %v692 = vrot.slane %v690, 5
      %v693 = vsel %vm283, %v688, %v692
      %v694 = vshrl.u32 %v237, 16
      %v696 = vrot.slane %v694, 4
      %v697 = vor.u32 %v696, %v692
      %v698 = vrot.slane %v697, 4
      %v700 = vshll.u32 %v238, 16
      %v702 = vrot.slane %v700, 5
      %v703 = vsel %vm283, %v698, %v702
      %v704 = vshrl.u32 %v238, 16
      %v706 = vrot.slane %v704, 4
      %v707 = vor.u32 %v706, %v702
      %v708 = vrot.slane %v707, 4
      %v710 = vshll.u32 %v239, 16
      %v712 = vrot.slane %v710, 5
      %v713 = vsel %vm283, %v708, %v712
      %v714 = vshrl.u32 %v239, 16
      %v716 = vrot.slane %v714, 4
      %v717 = vor.u32 %v716, %v712
      %v718 = vrot.slane %v717, 4
      %v720 = vshll.u32 %v274, 16
      %v722 = vrot.slane %v720, 5
      %v723 = vsel %vm283, %v718, %v722
      %v725 = vshrl.u32 %v240, 16
      %v727 = vrot.slane %v725, 4
      %v728 = vshll.u32 %v240, 16
      %v730 = vrot.slane %v728, 5
      %v731 = vor.u32 %v727, %v730
      %v732 = vrot.slane %v731, 4
      %v734 = vshll.u32 %v241, 16
      %v736 = vrot.slane %v734, 5
      %v737 = vsel %vm283, %v732, %v736
      %v738 = vshrl.u32 %v241, 16
      %v740 = vrot.slane %v738, 4
      %v741 = vor.u32 %v740, %v736
      %v742 = vrot.slane %v741, 4
      %v744 = vshll.u32 %v242, 16
      %v746 = vrot.slane %v744, 5
      %v747 = vsel %vm283, %v742, %v746
      %v748 = vshrl.u32 %v242, 16
      %v750 = vrot.slane %v748, 4
      %v751 = vor.u32 %v750, %v746
      %v752 = vrot.slane %v751, 4
      %v754 = vshll.u32 %v243, 16
      %v756 = vrot.slane %v754, 5
      %v757 = vsel %vm283, %v752, %v756
      %v758 = vshrl.u32 %v243, 16
      %v760 = vrot.slane %v758, 4
      %v761 = vor.u32 %v760, %v756
      %v762 = vrot.slane %v761, 4
      %v764 = vshll.u32 %v275, 16
      %v766 = vrot.slane %v764, 5
      %v767 = vsel %vm283, %v762, %v766
      %v769 = vshrl.u32 %v244, 16
      %v771 = vrot.slane %v769, 4
      %v772 = vshll.u32 %v244, 16
      %v774 = vrot.slane %v772, 5
      %v775 = vor.u32 %v771, %v774
      %v776 = vrot.slane %v775, 4
      %v778 = vshll.u32 %v245, 16
      %v780 = vrot.slane %v778, 5
      %v781 = vsel %vm283, %v776, %v780
      %v782 = vshrl.u32 %v245, 16
      %v784 = vrot.slane %v782, 4
      %v785 = vor.u32 %v784, %v780
      %v786 = vrot.slane %v785, 4
      %v788 = vshll.u32 %v246, 16
      %v790 = vrot.slane %v788, 5
      %v791 = vsel %vm283, %v786, %v790
      %v792 = vshrl.u32 %v246, 16
      %v794 = vrot.slane %v792, 4
      %v795 = vor.u32 %v794, %v790
      %v796 = vrot.slane %v795, 4
      %v798 = vshll.u32 %v247, 16
      %v800 = vrot.slane %v798, 5
      %v801 = vsel %vm283, %v796, %v800
      %v802 = vshrl.u32 %v247, 16
      %v804 = vrot.slane %v802, 4
      %v805 = vor.u32 %v804, %v800
      %v806 = vrot.slane %v805, 4
      %v808 = vshll.u32 %v276, 16
      %v810 = vrot.slane %v808, 5
      %v811 = vsel %vm283, %v806, %v810
      %v813 = vshrl.u32 %v248, 16
      %v815 = vrot.slane %v813, 4
      %v816 = vshll.u32 %v248, 16
      %v818 = vrot.slane %v816, 5
      %v819 = vor.u32 %v815, %v818
      %v820 = vrot.slane %v819, 4
      %v822 = vshll.u32 %v249, 16
      %v824 = vrot.slane %v822, 5
      %v825 = vsel %vm283, %v820, %v824
      %v826 = vshrl.u32 %v249, 16
      %v828 = vrot.slane %v826, 4
      %v829 = vor.u32 %v828, %v824
      %v830 = vrot.slane %v829, 4
      %v832 = vshll.u32 %v250, 16
      %v834 = vrot.slane %v832, 5
      %v835 = vsel %vm283, %v830, %v834
      %v836 = vshrl.u32 %v250, 16
      %v838 = vrot.slane %v836, 4
      %v839 = vor.u32 %v838, %v834
      %v840 = vrot.slane %v839, 4
      %v842 = vshll.u32 %v251, 16
      %v844 = vrot.slane %v842, 5
      %v845 = vsel %vm283, %v840, %v844
      %v846 = vshrl.u32 %v251, 16
      %v848 = vrot.slane %v846, 4
      %v849 = vor.u32 %v848, %v844
      %v850 = vrot.slane %v849, 4
      %v852 = vshll.u32 %v277, 16
      %v854 = vrot.slane %v852, 5
      %v855 = vsel %vm283, %v850, %v854
      %v857 = vshrl.u32 %v252, 16
      %v859 = vrot.slane %v857, 4
      %v860 = vshll.u32 %v252, 16
      %v862 = vrot.slane %v860, 5
      %v863 = vor.u32 %v859, %v862
      %v864 = vrot.slane %v863, 4
      %v866 = vshll.u32 %v253, 16
      %v868 = vrot.slane %v866, 5
      %v869 = vsel %vm283, %v864, %v868
      %v870 = vshrl.u32 %v253, 16
      %v872 = vrot.slane %v870, 4
      %v873 = vor.u32 %v872, %v868
      %v874 = vrot.slane %v873, 4
      %v876 = vshll.u32 %v254, 16
      %v878 = vrot.slane %v876, 5
      %v879 = vsel %vm283, %v874, %v878
      %v880 = vshrl.u32 %v254, 16
      %v882 = vrot.slane %v880, 4
      %v883 = vor.u32 %v882, %v878
      %v884 = vrot.slane %v883, 4
      %v886 = vshll.u32 %v255, 16
      %v888 = vrot.slane %v886, 5
      %v889 = vsel %vm283, %v884, %v888
      %v890 = vshrl.u32 %v255, 16
      %v892 = vrot.slane %v890, 4
      %v893 = vor.u32 %v892, %v888
      %v894 = vrot.slane %v893, 4
      %v896 = vshll.u32 %v278, 16
      %v898 = vrot.slane %v896, 5
      %v899 = vsel %vm283, %v894, %v898
      %v901 = vshrl.u32 %v256, 16
      %v903 = vrot.slane %v901, 4
      %v904 = vshll.u32 %v256, 16
      %v906 = vrot.slane %v904, 5
      %v907 = vor.u32 %v903, %v906
      %v908 = vrot.slane %v907, 4
      %v910 = vshll.u32 %v257, 16
      %v912 = vrot.slane %v910, 5
      %v913 = vsel %vm283, %v908, %v912
      %v914 = vshrl.u32 %v257, 16
      %v916 = vrot.slane %v914, 4
      %v917 = vor.u32 %v916, %v912
      %v918 = vrot.slane %v917, 4
      %v920 = vshll.u32 %v258, 16
      %v922 = vrot.slane %v920, 5
      %v923 = vsel %vm283, %v918, %v922
      %v924 = vshrl.u32 %v258, 16
      %v926 = vrot.slane %v924, 4
      %v927 = vor.u32 %v926, %v922
      %v928 = vrot.slane %v927, 4
      %v930 = vshll.u32 %v259, 16
      %v932 = vrot.slane %v930, 5
      %v933 = vsel %vm283, %v928, %v932
      %v934 = vshrl.u32 %v259, 16
      %v936 = vrot.slane %v934, 4
      %v937 = vor.u32 %v936, %v932
      %v938 = vrot.slane %v937, 4
      %v940 = vshll.u32 %v279, 16
      %v942 = vrot.slane %v940, 5
      %v943 = vsel %vm283, %v938, %v942
      %v945 = vshrl.u32 %v260, 16
      %v947 = vrot.slane %v945, 4
      %v948 = vshll.u32 %v260, 16
      %v950 = vrot.slane %v948, 5
      %v951 = vor.u32 %v947, %v950
      %v952 = vrot.slane %v951, 4
      %v954 = vshll.u32 %v261, 16
      %v956 = vrot.slane %v954, 5
      %v957 = vsel %vm283, %v952, %v956
      %v958 = vshrl.u32 %v261, 16
      %v960 = vrot.slane %v958, 4
      %v961 = vor.u32 %v960, %v956
      %v962 = vrot.slane %v961, 4
      %v964 = vshll.u32 %v262, 16
      %v966 = vrot.slane %v964, 5
      %v967 = vsel %vm283, %v962, %v966
      %v968 = vshrl.u32 %v262, 16
      %v970 = vrot.slane %v968, 4
      %v971 = vor.u32 %v970, %v966
      %v972 = vrot.slane %v971, 4
      %v974 = vshll.u32 %v263, 16
      %v976 = vrot.slane %v974, 5
      %v977 = vsel %vm283, %v972, %v976
      %v978 = vshrl.u32 %v263, 16
      %v980 = vrot.slane %v978, 4
      %v981 = vor.u32 %v980, %v976
      %v982 = vrot.slane %v981, 4
      %v984 = vshll.u32 %v280, 16
      %v986 = vrot.slane %v984, 5
      %v987 = vsel %vm283, %v982, %v986
      %s988 = scalar_lea.vmem %s1, 2
      %v989 = vld [vmem:[%s988] sm:$0x3]
      %v990 = vunpack.c.l.b16 %v297
      %v991 = vunpack.c.l.b16 %v307
      %v992 = vunpack.c.l.b16 %v317
      %v993 = vunpack.c.l.b16 %v327
      %v994 = vunpack.c.l.b16 %v341
      %v995 = vunpack.c.l.b16 %v351
      %v996 = vunpack.c.l.b16 %v361
      %v997 = vunpack.c.l.b16 %v371
      %v998 = vunpack.c.l.b16 %v385
      %v999 = vunpack.c.l.b16 %v395
      %v1000 = vunpack.c.l.b16 %v405
      %v1001 = vunpack.c.l.b16 %v415
      %v1002 = vunpack.c.l.b16 %v429
      %v1003 = vunpack.c.l.b16 %v439
      %v1004 = vunpack.c.l.b16 %v449
      %v1005 = vunpack.c.l.b16 %v459
      %v1006 = vunpack.c.l.b16 %v473
      %v1007 = vunpack.c.l.b16 %v483
      %v1008 = vunpack.c.l.b16 %v493
      %v1009 = vunpack.c.l.b16 %v503
      %v1010 = vunpack.c.l.b16 %v517
      %v1011 = vunpack.c.l.b16 %v527
      %v1012 = vunpack.c.l.b16 %v537
      %v1013 = vunpack.c.l.b16 %v547
      %v1014 = vunpack.c.l.b16 %v561
      %v1015 = vunpack.c.l.b16 %v571
      %v1016 = vunpack.c.l.b16 %v581
      %v1017 = vunpack.c.l.b16 %v591
      %v1018 = vunpack.c.l.b16 %v605
      %v1019 = vunpack.c.l.b16 %v615
      %v1020 = vunpack.c.l.b16 %v625
      %v1021 = vunpack.c.l.b16 %v635
      %v1022 = vunpack.c.l.b16 %v649
      %v1023 = vunpack.c.l.b16 %v659
      %v1024 = vunpack.c.l.b16 %v669
      %v1025 = vunpack.c.l.b16 %v679
      %v1026 = vunpack.c.l.b16 %v693
      %v1027 = vunpack.c.l.b16 %v703
      %v1028 = vunpack.c.l.b16 %v713
      %v1029 = vunpack.c.l.b16 %v723
      %v1030 = vunpack.c.l.b16 %v737
      %v1031 = vunpack.c.l.b16 %v747
      %v1032 = vunpack.c.l.b16 %v757
      %v1033 = vunpack.c.l.b16 %v767
      %v1034 = vunpack.c.l.b16 %v781
      %v1035 = vunpack.c.l.b16 %v791
      %v1036 = vunpack.c.l.b16 %v801
      %v1037 = vunpack.c.l.b16 %v811
      %v1038 = vunpack.c.l.b16 %v825
      %v1039 = vunpack.c.l.b16 %v835
      %v1040 = vunpack.c.l.b16 %v845
      %v1041 = vunpack.c.l.b16 %v855
      %v1042 = vunpack.c.l.b16 %v869
      %v1043 = vunpack.c.l.b16 %v879
      %v1044 = vunpack.c.l.b16 %v889
      %v1045 = vunpack.c.l.b16 %v899
      %v1046 = vunpack.c.l.b16 %v913
      %v1047 = vunpack.c.l.b16 %v923
      %v1048 = vunpack.c.l.b16 %v933
      %v1049 = vunpack.c.l.b16 %v943
      %v1050 = vunpack.c.l.b16 %v957
      %v1051 = vunpack.c.l.b16 %v967
      %v1052 = vunpack.c.l.b16 %v977
      %v1053 = vunpack.c.l.b16 %v987
      %v1054 = vpack.c.b16 %v991, %v990
      %v1055 = vpack.c.b16 %v993, %v992
      %v1056 = vpack.c.b16 %v995, %v994
      %v1057 = vpack.c.b16 %v997, %v996
      %v1058 = vpack.c.b16 %v999, %v998
      %v1059 = vpack.c.b16 %v1001, %v1000
      %v1060 = vpack.c.b16 %v1003, %v1002
      %v1061 = vpack.c.b16 %v1005, %v1004
      %v1062 = vpack.c.b16 %v1007, %v1006
      %v1063 = vpack.c.b16 %v1009, %v1008
      %v1064 = vpack.c.b16 %v1011, %v1010
      %v1065 = vpack.c.b16 %v1013, %v1012
      %v1066 = vpack.c.b16 %v1015, %v1014
      %v1067 = vpack.c.b16 %v1017, %v1016
      %v1068 = vpack.c.b16 %v1019, %v1018
      %v1069 = vpack.c.b16 %v1021, %v1020
      %v1070 = vpack.c.b16 %v1023, %v1022
      %v1071 = vpack.c.b16 %v1025, %v1024
      %v1072 = vpack.c.b16 %v1027, %v1026
      %v1073 = vpack.c.b16 %v1029, %v1028
      %v1074 = vpack.c.b16 %v1031, %v1030
      %v1075 = vpack.c.b16 %v1033, %v1032
      %v1076 = vpack.c.b16 %v1035, %v1034
      %v1077 = vpack.c.b16 %v1037, %v1036
      %v1078 = vpack.c.b16 %v1039, %v1038
      %v1079 = vpack.c.b16 %v1041, %v1040
      %v1080 = vpack.c.b16 %v1043, %v1042
      %v1081 = vpack.c.b16 %v1045, %v1044
      %v1082 = vpack.c.b16 %v1047, %v1046
      %v1083 = vpack.c.b16 %v1049, %v1048
      %v1084 = vpack.c.b16 %v1051, %v1050
      %v1085 = vpack.c.b16 %v1053, %v1052
      %vm1086 = vcmask 23552
      %v1088 = vsel %vm1086, %v1054, 0
      %v1091 = vsel %vm1086, %v1055, 0
      %v1094 = vsel %vm1086, %v1056, 0
      %v1097 = vsel %vm1086, %v1057, 0
      %v1100 = vsel %vm1086, %v1058, 0
      %v1103 = vsel %vm1086, %v1059, 0
      %v1106 = vsel %vm1086, %v1060, 0
      %v1109 = vsel %vm1086, %v1061, 0
      %v1112 = vsel %vm1086, %v1062, 0
      %v1115 = vsel %vm1086, %v1063, 0
      %v1118 = vsel %vm1086, %v1064, 0
      %v1121 = vsel %vm1086, %v1065, 0
      %v1124 = vsel %vm1086, %v1066, 0
      %v1127 = vsel %vm1086, %v1067, 0
      %v1130 = vsel %vm1086, %v1068, 0
      %v1133 = vsel %vm1086, %v1069, 0
      %v1136 = vsel %vm1086, %v1070, 0
      %v1139 = vsel %vm1086, %v1071, 0
      %v1142 = vsel %vm1086, %v1072, 0
      %v1145 = vsel %vm1086, %v1073, 0
      %v1148 = vsel %vm1086, %v1074, 0
      %v1151 = vsel %vm1086, %v1075, 0
      %v1154 = vsel %vm1086, %v1076, 0
      %v1157 = vsel %vm1086, %v1077, 0
      %v1160 = vsel %vm1086, %v1078, 0
      %v1163 = vsel %vm1086, %v1079, 0
      %v1166 = vsel %vm1086, %v1080, 0
      %v1169 = vsel %vm1086, %v1081, 0
      %v1172 = vsel %vm1086, %v1082, 0
      %v1175 = vsel %vm1086, %v1083, 0
      %v1178 = vsel %vm1086, %v1084, 0
      %v1181 = vsel %vm1086, %v1085, 0
      %vm1183 = vcmask 1040384
      %vm1184 = vcmask 1041408
      %v1185 = vsel %vm1183, 4294967295, 65535
      %v1186 = vsel %vm1184, %v1185, 0
      %v1188 = vand.u32 %v989, %v1186
      %1190 = vmatpush.bf16.msra.mxu0 0
      %1191 = vmatpush.bf16.msra.mxu0 0
      %1192 = vmatpush.bf16.msra.mxu0 0
      %1193 = vmatpush.bf16.msra.mxu0 0
      %1194 = vmatpush.bf16.msra.mxu0 0
      %1195 = vmatpush.bf16.msra.mxu0 0
      %1196 = vmatpush.bf16.msra.mxu0 0
      %1197 = vmatpush.bf16.msra.mxu0 %v1188
      %1198 = vmatmul.bf16.gmra.mxu0 %v1088
      %v1199 = vpop.f32.mrf.mxu0
      %v1200 = vadd.f32 0.0, %v1199
      %v1201 = vpop.f32.mrf.mxu0
      %v1202 = vadd.f32 0.0, %v1201
      %1203 = vmatmul.bf16.gmra.mxu0 %v1091
      %v1204 = vpop.f32.mrf.mxu0
      %v1205 = vadd.f32 0.0, %v1204
      %v1206 = vpop.f32.mrf.mxu0
      %v1207 = vadd.f32 0.0, %v1206
      %1208 = vmatmul.bf16.gmra.mxu0 %v1094
      %v1209 = vpop.f32.mrf.mxu0
      %v1210 = vadd.f32 0.0, %v1209
      %v1211 = vpop.f32.mrf.mxu0
      %v1212 = vadd.f32 0.0, %v1211
      %1213 = vmatmul.bf16.gmra.mxu0 %v1097
      %v1214 = vpop.f32.mrf.mxu0
      %v1215 = vadd.f32 0.0, %v1214
      %v1216 = vpop.f32.mrf.mxu0
      %v1217 = vadd.f32 0.0, %v1216
      %1218 = vmatmul.bf16.gmra.mxu0 %v1100
      %v1219 = vpop.f32.mrf.mxu0
      %v1220 = vadd.f32 0.0, %v1219
      %v1221 = vpop.f32.mrf.mxu0
      %v1222 = vadd.f32 0.0, %v1221
      %1223 = vmatmul.bf16.gmra.mxu0 %v1103
      %v1224 = vpop.f32.mrf.mxu0
      %v1225 = vadd.f32 0.0, %v1224
      %v1226 = vpop.f32.mrf.mxu0
      %v1227 = vadd.f32 0.0, %v1226
      %1228 = vmatmul.bf16.gmra.mxu0 %v1106
      %v1229 = vpop.f32.mrf.mxu0
      %v1230 = vadd.f32 0.0, %v1229
      %v1231 = vpop.f32.mrf.mxu0
      %v1232 = vadd.f32 0.0, %v1231
      %1233 = vmatmul.bf16.gmra.mxu0 %v1109
      %v1234 = vpop.f32.mrf.mxu0
      %v1235 = vadd.f32 0.0, %v1234
      %v1236 = vpop.f32.mrf.mxu0
      %v1237 = vadd.f32 0.0, %v1236
      %1238 = vmatmul.bf16.gmra.mxu0 %v1112
      %v1239 = vpop.f32.mrf.mxu0
      %v1240 = vadd.f32 0.0, %v1239
      %v1241 = vpop.f32.mrf.mxu0
      %v1242 = vadd.f32 0.0, %v1241
      %1243 = vmatmul.bf16.gmra.mxu0 %v1115
      %v1244 = vpop.f32.mrf.mxu0
      %v1245 = vadd.f32 0.0, %v1244
      %v1246 = vpop.f32.mrf.mxu0
      %v1247 = vadd.f32 0.0, %v1246
      %1248 = vmatmul.bf16.gmra.mxu0 %v1118
      %v1249 = vpop.f32.mrf.mxu0
      %v1250 = vadd.f32 0.0, %v1249
      %v1251 = vpop.f32.mrf.mxu0
      %v1252 = vadd.f32 0.0, %v1251
      %1253 = vmatmul.bf16.gmra.mxu0 %v1121
      %v1254 = vpop.f32.mrf.mxu0
      %v1255 = vadd.f32 0.0, %v1254
      %v1256 = vpop.f32.mrf.mxu0
      %v1257 = vadd.f32 0.0, %v1256
      %1258 = vmatmul.bf16.gmra.mxu0 %v1124
      %v1259 = vpop.f32.mrf.mxu0
      %v1260 = vadd.f32 0.0, %v1259
      %v1261 = vpop.f32.mrf.mxu0
      %v1262 = vadd.f32 0.0, %v1261
      %1263 = vmatmul.bf16.gmra.mxu0 %v1127
      %v1264 = vpop.f32.mrf.mxu0
      %v1265 = vadd.f32 0.0, %v1264
      %v1266 = vpop.f32.mrf.mxu0
      %v1267 = vadd.f32 0.0, %v1266
      %1268 = vmatmul.bf16.gmra.mxu0 %v1130
      %v1269 = vpop.f32.mrf.mxu0
      %v1270 = vadd.f32 0.0, %v1269
      %v1271 = vpop.f32.mrf.mxu0
      %v1272 = vadd.f32 0.0, %v1271
      %1273 = vmatmul.bf16.gmra.mxu0 %v1133
      %v1274 = vpop.f32.mrf.mxu0
      %v1275 = vadd.f32 0.0, %v1274
      %v1276 = vpop.f32.mrf.mxu0
      %v1277 = vadd.f32 0.0, %v1276
      %1278 = vmatmul.bf16.gmra.mxu0 %v1136
      %v1279 = vpop.f32.mrf.mxu0
      %v1280 = vadd.f32 0.0, %v1279
      %v1281 = vpop.f32.mrf.mxu0
      %v1282 = vadd.f32 0.0, %v1281
      %1283 = vmatmul.bf16.gmra.mxu0 %v1139
      %v1284 = vpop.f32.mrf.mxu0
      %v1285 = vadd.f32 0.0, %v1284
      %v1286 = vpop.f32.mrf.mxu0
      %v1287 = vadd.f32 0.0, %v1286
      %1288 = vmatmul.bf16.gmra.mxu0 %v1142
      %v1289 = vpop.f32.mrf.mxu0
      %v1290 = vadd.f32 0.0, %v1289
      %v1291 = vpop.f32.mrf.mxu0
      %v1292 = vadd.f32 0.0, %v1291
      %1293 = vmatmul.bf16.gmra.mxu0 %v1145
      %v1294 = vpop.f32.mrf.mxu0
      %v1295 = vadd.f32 0.0, %v1294
      %v1296 = vpop.f32.mrf.mxu0
      %v1297 = vadd.f32 0.0, %v1296
      %1298 = vmatmul.bf16.gmra.mxu0 %v1148
      %v1299 = vpop.f32.mrf.mxu0
      %v1300 = vadd.f32 0.0, %v1299
      %v1301 = vpop.f32.mrf.mxu0
      %v1302 = vadd.f32 0.0, %v1301
      %1303 = vmatmul.bf16.gmra.mxu0 %v1151
      %v1304 = vpop.f32.mrf.mxu0
      %v1305 = vadd.f32 0.0, %v1304
      %v1306 = vpop.f32.mrf.mxu0
      %v1307 = vadd.f32 0.0, %v1306
      %1308 = vmatmul.bf16.gmra.mxu0 %v1154
      %v1309 = vpop.f32.mrf.mxu0
      %v1310 = vadd.f32 0.0, %v1309
      %v1311 = vpop.f32.mrf.mxu0
      %v1312 = vadd.f32 0.0, %v1311
      %1313 = vmatmul.bf16.gmra.mxu0 %v1157
      %v1314 = vpop.f32.mrf.mxu0
      %v1315 = vadd.f32 0.0, %v1314
      %v1316 = vpop.f32.mrf.mxu0
      %v1317 = vadd.f32 0.0, %v1316
      %1318 = vmatmul.bf16.gmra.mxu0 %v1160
      %v1319 = vpop.f32.mrf.mxu0
      %v1320 = vadd.f32 0.0, %v1319
      %v1321 = vpop.f32.mrf.mxu0
      %v1322 = vadd.f32 0.0, %v1321
      %1323 = vmatmul.bf16.gmra.mxu0 %v1163
      %v1324 = vpop.f32.mrf.mxu0
      %v1325 = vadd.f32 0.0, %v1324
      %v1326 = vpop.f32.mrf.mxu0
      %v1327 = vadd.f32 0.0, %v1326
      %1328 = vmatmul.bf16.gmra.mxu0 %v1166
      %v1329 = vpop.f32.mrf.mxu0
      %v1330 = vadd.f32 0.0, %v1329
      %v1331 = vpop.f32.mrf.mxu0
      %v1332 = vadd.f32 0.0, %v1331
      %1333 = vmatmul.bf16.gmra.mxu0 %v1169
      %v1334 = vpop.f32.mrf.mxu0
      %v1335 = vadd.f32 0.0, %v1334
      %v1336 = vpop.f32.mrf.mxu0
      %v1337 = vadd.f32 0.0, %v1336
      %1338 = vmatmul.bf16.gmra.mxu0 %v1172
      %v1339 = vpop.f32.mrf.mxu0
      %v1340 = vadd.f32 0.0, %v1339
      %v1341 = vpop.f32.mrf.mxu0
      %v1342 = vadd.f32 0.0, %v1341
      %1343 = vmatmul.bf16.gmra.mxu0 %v1175
      %v1344 = vpop.f32.mrf.mxu0
      %v1345 = vadd.f32 0.0, %v1344
      %v1346 = vpop.f32.mrf.mxu0
      %v1347 = vadd.f32 0.0, %v1346
      %1348 = vmatmul.bf16.gmra.mxu0 %v1178
      %v1349 = vpop.f32.mrf.mxu0
      %v1350 = vadd.f32 0.0, %v1349
      %v1351 = vpop.f32.mrf.mxu0
      %v1352 = vadd.f32 0.0, %v1351
      %1353 = vmatmul.bf16.gmra.mxu0 %v1181
      %v1354 = vpop.f32.mrf.mxu0
      %v1355 = vadd.f32 0.0, %v1354
      %v1356 = vpop.f32.mrf.mxu0
      %v1357 = vadd.f32 0.0, %v1356
      %1358 = vdwg.mxu0
      %v1423 = vunpack.c.l.b16 %v200
      %v1424 = vunpack.c.l.b16 %v201
      %v1425 = vunpack.c.l.b16 %v202
      %v1426 = vunpack.c.l.b16 %v203
      %v1427 = vunpack.c.l.b16 %v204
      %v1428 = vunpack.c.l.b16 %v205
      %v1429 = vunpack.c.l.b16 %v206
      %v1430 = vunpack.c.l.b16 %v207
      %v1431 = vunpack.c.l.b16 %v208
      %v1432 = vunpack.c.l.b16 %v209
      %v1433 = vunpack.c.l.b16 %v210
      %v1434 = vunpack.c.l.b16 %v211
      %v1435 = vunpack.c.l.b16 %v212
      %v1436 = vunpack.c.l.b16 %v213
      %v1437 = vunpack.c.l.b16 %v214
      %v1438 = vunpack.c.l.b16 %v215
      %v1439 = vunpack.c.l.b16 %v216
      %v1440 = vunpack.c.l.b16 %v217
      %v1441 = vunpack.c.l.b16 %v218
      %v1442 = vunpack.c.l.b16 %v219
      %v1443 = vunpack.c.l.b16 %v220
      %v1444 = vunpack.c.l.b16 %v221
      %v1445 = vunpack.c.l.b16 %v222
      %v1446 = vunpack.c.l.b16 %v223
      %v1447 = vunpack.c.l.b16 %v224
      %v1448 = vunpack.c.l.b16 %v225
      %v1449 = vunpack.c.l.b16 %v226
      %v1450 = vunpack.c.l.b16 %v227
      %v1451 = vunpack.c.l.b16 %v228
      %v1452 = vunpack.c.l.b16 %v229
      %v1453 = vunpack.c.l.b16 %v230
      %v1454 = vunpack.c.l.b16 %v231
      %v1455 = vunpack.c.l.b16 %v232
      %v1456 = vunpack.c.l.b16 %v233
      %v1457 = vunpack.c.l.b16 %v234
      %v1458 = vunpack.c.l.b16 %v235
      %v1459 = vunpack.c.l.b16 %v236
      %v1460 = vunpack.c.l.b16 %v237
      %v1461 = vunpack.c.l.b16 %v238
      %v1462 = vunpack.c.l.b16 %v239
      %v1463 = vunpack.c.l.b16 %v240
      %v1464 = vunpack.c.l.b16 %v241
      %v1465 = vunpack.c.l.b16 %v242
      %v1466 = vunpack.c.l.b16 %v243
      %v1467 = vunpack.c.l.b16 %v244
      %v1468 = vunpack.c.l.b16 %v245
      %v1469 = vunpack.c.l.b16 %v246
      %v1470 = vunpack.c.l.b16 %v247
      %v1471 = vunpack.c.l.b16 %v248
      %v1472 = vunpack.c.l.b16 %v249
      %v1473 = vunpack.c.l.b16 %v250
      %v1474 = vunpack.c.l.b16 %v251
      %v1475 = vunpack.c.l.b16 %v252
      %v1476 = vunpack.c.l.b16 %v253
      %v1477 = vunpack.c.l.b16 %v254
      %v1478 = vunpack.c.l.b16 %v255
      %v1479 = vunpack.c.l.b16 %v256
      %v1480 = vunpack.c.l.b16 %v257
      %v1481 = vunpack.c.l.b16 %v258
      %v1482 = vunpack.c.l.b16 %v259
      %v1483 = vunpack.c.l.b16 %v260
      %v1484 = vunpack.c.l.b16 %v261
      %v1485 = vunpack.c.l.b16 %v262
      %v1486 = vunpack.c.l.b16 %v263
      %v1487 = vpack.c.b16 %v1424, %v1423
      %v1488 = vpack.c.b16 %v1426, %v1425
      %v1489 = vpack.c.b16 %v1428, %v1427
      %v1490 = vpack.c.b16 %v1430, %v1429
      %v1491 = vpack.c.b16 %v1432, %v1431
      %v1492 = vpack.c.b16 %v1434, %v1433
      %v1493 = vpack.c.b16 %v1436, %v1435
      %v1494 = vpack.c.b16 %v1438, %v1437
      %v1495 = vpack.c.b16 %v1440, %v1439
      %v1496 = vpack.c.b16 %v1442, %v1441
      %v1497 = vpack.c.b16 %v1444, %v1443
      %v1498 = vpack.c.b16 %v1446, %v1445
      %v1499 = vpack.c.b16 %v1448, %v1447
      %v1500 = vpack.c.b16 %v1450, %v1449
      %v1501 = vpack.c.b16 %v1452, %v1451
      %v1502 = vpack.c.b16 %v1454, %v1453
      %v1503 = vpack.c.b16 %v1456, %v1455
      %v1504 = vpack.c.b16 %v1458, %v1457
      %v1505 = vpack.c.b16 %v1460, %v1459
      %v1506 = vpack.c.b16 %v1462, %v1461
      %v1507 = vpack.c.b16 %v1464, %v1463
      %v1508 = vpack.c.b16 %v1466, %v1465
      %v1509 = vpack.c.b16 %v1468, %v1467
      %v1510 = vpack.c.b16 %v1470, %v1469
      %v1511 = vpack.c.b16 %v1472, %v1471
      %v1512 = vpack.c.b16 %v1474, %v1473
      %v1513 = vpack.c.b16 %v1476, %v1475
      %v1514 = vpack.c.b16 %v1478, %v1477
      %v1515 = vpack.c.b16 %v1480, %v1479
      %v1516 = vpack.c.b16 %v1482, %v1481
      %v1517 = vpack.c.b16 %v1484, %v1483
      %v1518 = vpack.c.b16 %v1486, %v1485
      %v1520 = vsel %vm1086, %v1487, 0
      %v1523 = vsel %vm1086, %v1488, 0
      %v1526 = vsel %vm1086, %v1489, 0
      %v1529 = vsel %vm1086, %v1490, 0
      %v1532 = vsel %vm1086, %v1491, 0
      %v1535 = vsel %vm1086, %v1492, 0
      %v1538 = vsel %vm1086, %v1493, 0
      %v1541 = vsel %vm1086, %v1494, 0
      %v1544 = vsel %vm1086, %v1495, 0
      %v1547 = vsel %vm1086, %v1496, 0
      %v1550 = vsel %vm1086, %v1497, 0
      %v1553 = vsel %vm1086, %v1498, 0
      %v1556 = vsel %vm1086, %v1499, 0
      %v1559 = vsel %vm1086, %v1500, 0
      %v1562 = vsel %vm1086, %v1501, 0
      %v1565 = vsel %vm1086, %v1502, 0
      %v1568 = vsel %vm1086, %v1503, 0
      %v1571 = vsel %vm1086, %v1504, 0
      %v1574 = vsel %vm1086, %v1505, 0
      %v1577 = vsel %vm1086, %v1506, 0
      %v1580 = vsel %vm1086, %v1507, 0
      %v1583 = vsel %vm1086, %v1508, 0
      %v1586 = vsel %vm1086, %v1509, 0
      %v1589 = vsel %vm1086, %v1510, 0
      %v1592 = vsel %vm1086, %v1511, 0
      %v1595 = vsel %vm1086, %v1512, 0
      %v1598 = vsel %vm1086, %v1513, 0
      %v1601 = vsel %vm1086, %v1514, 0
      %v1604 = vsel %vm1086, %v1515, 0
      %v1607 = vsel %vm1086, %v1516, 0
      %v1610 = vsel %vm1086, %v1517, 0
      %v1613 = vsel %vm1086, %v1518, 0
      %v1616 = vand.u32 %v264, %v1186
      %1618 = vmatpush.bf16.msra.mxu0 0
      %1619 = vmatpush.bf16.msra.mxu0 0
      %1620 = vmatpush.bf16.msra.mxu0 0
      %1621 = vmatpush.bf16.msra.mxu0 0
      %1622 = vmatpush.bf16.msra.mxu0 0
      %1623 = vmatpush.bf16.msra.mxu0 0
      %1624 = vmatpush.bf16.msra.mxu0 0
      %1625 = vmatpush.bf16.msra.mxu0 %v1616
      %1626 = vmatmul.bf16.gmra.mxu0 %v1520
      %v1627 = vpop.f32.mrf.mxu0
      %v1628 = vadd.f32 %v1200, %v1627
      %v1629 = vpop.f32.mrf.mxu0
      %v1630 = vadd.f32 %v1202, %v1629
      %1631 = vmatmul.bf16.gmra.mxu0 %v1523
      %v1632 = vpop.f32.mrf.mxu0
      %v1633 = vadd.f32 %v1205, %v1632
      %v1634 = vpop.f32.mrf.mxu0
      %v1635 = vadd.f32 %v1207, %v1634
      %1636 = vmatmul.bf16.gmra.mxu0 %v1526
      %v1637 = vpop.f32.mrf.mxu0
      %v1638 = vadd.f32 %v1210, %v1637
      %v1639 = vpop.f32.mrf.mxu0
      %v1640 = vadd.f32 %v1212, %v1639
      %1641 = vmatmul.bf16.gmra.mxu0 %v1529
      %v1642 = vpop.f32.mrf.mxu0
      %v1643 = vadd.f32 %v1215, %v1642
      %v1644 = vpop.f32.mrf.mxu0
      %v1645 = vadd.f32 %v1217, %v1644
      %1646 = vmatmul.bf16.gmra.mxu0 %v1532
      %v1647 = vpop.f32.mrf.mxu0
      %v1648 = vadd.f32 %v1220, %v1647
      %v1649 = vpop.f32.mrf.mxu0
      %v1650 = vadd.f32 %v1222, %v1649
      %1651 = vmatmul.bf16.gmra.mxu0 %v1535
      %v1652 = vpop.f32.mrf.mxu0
      %v1653 = vadd.f32 %v1225, %v1652
      %v1654 = vpop.f32.mrf.mxu0
      %v1655 = vadd.f32 %v1227, %v1654
      %1656 = vmatmul.bf16.gmra.mxu0 %v1538
      %v1657 = vpop.f32.mrf.mxu0
      %v1658 = vadd.f32 %v1230, %v1657
      %v1659 = vpop.f32.mrf.mxu0
      %v1660 = vadd.f32 %v1232, %v1659
      %1661 = vmatmul.bf16.gmra.mxu0 %v1541
      %v1662 = vpop.f32.mrf.mxu0
      %v1663 = vadd.f32 %v1235, %v1662
      %v1664 = vpop.f32.mrf.mxu0
      %v1665 = vadd.f32 %v1237, %v1664
      %1666 = vmatmul.bf16.gmra.mxu0 %v1544
      %v1667 = vpop.f32.mrf.mxu0
      %v1668 = vadd.f32 %v1240, %v1667
      %v1669 = vpop.f32.mrf.mxu0
      %v1670 = vadd.f32 %v1242, %v1669
      %1671 = vmatmul.bf16.gmra.mxu0 %v1547
      %v1672 = vpop.f32.mrf.mxu0
      %v1673 = vadd.f32 %v1245, %v1672
      %v1674 = vpop.f32.mrf.mxu0
      %v1675 = vadd.f32 %v1247, %v1674
      %1676 = vmatmul.bf16.gmra.mxu0 %v1550
      %v1677 = vpop.f32.mrf.mxu0
      %v1678 = vadd.f32 %v1250, %v1677
      %v1679 = vpop.f32.mrf.mxu0
      %v1680 = vadd.f32 %v1252, %v1679
      %1681 = vmatmul.bf16.gmra.mxu0 %v1553
      %v1682 = vpop.f32.mrf.mxu0
      %v1683 = vadd.f32 %v1255, %v1682
      %v1684 = vpop.f32.mrf.mxu0
      %v1685 = vadd.f32 %v1257, %v1684
      %1686 = vmatmul.bf16.gmra.mxu0 %v1556
      %v1687 = vpop.f32.mrf.mxu0
      %v1688 = vadd.f32 %v1260, %v1687
      %v1689 = vpop.f32.mrf.mxu0
      %v1690 = vadd.f32 %v1262, %v1689
      %1691 = vmatmul.bf16.gmra.mxu0 %v1559
      %v1692 = vpop.f32.mrf.mxu0
      %v1693 = vadd.f32 %v1265, %v1692
      %v1694 = vpop.f32.mrf.mxu0
      %v1695 = vadd.f32 %v1267, %v1694
      %1696 = vmatmul.bf16.gmra.mxu0 %v1562
      %v1697 = vpop.f32.mrf.mxu0
      %v1698 = vadd.f32 %v1270, %v1697
      %v1699 = vpop.f32.mrf.mxu0
      %v1700 = vadd.f32 %v1272, %v1699
      %1701 = vmatmul.bf16.gmra.mxu0 %v1565
      %v1702 = vpop.f32.mrf.mxu0
      %v1703 = vadd.f32 %v1275, %v1702
      %v1704 = vpop.f32.mrf.mxu0
      %v1705 = vadd.f32 %v1277, %v1704
      %1706 = vmatmul.bf16.gmra.mxu0 %v1568
      %v1707 = vpop.f32.mrf.mxu0
      %v1708 = vadd.f32 %v1280, %v1707
      %v1709 = vpop.f32.mrf.mxu0
      %v1710 = vadd.f32 %v1282, %v1709
      %1711 = vmatmul.bf16.gmra.mxu0 %v1571
      %v1712 = vpop.f32.mrf.mxu0
      %v1713 = vadd.f32 %v1285, %v1712
      %v1714 = vpop.f32.mrf.mxu0
      %v1715 = vadd.f32 %v1287, %v1714
      %1716 = vmatmul.bf16.gmra.mxu0 %v1574
      %v1717 = vpop.f32.mrf.mxu0
      %v1718 = vadd.f32 %v1290, %v1717
      %v1719 = vpop.f32.mrf.mxu0
      %v1720 = vadd.f32 %v1292, %v1719
      %1721 = vmatmul.bf16.gmra.mxu0 %v1577
      %v1722 = vpop.f32.mrf.mxu0
      %v1723 = vadd.f32 %v1295, %v1722
      %v1724 = vpop.f32.mrf.mxu0
      %v1725 = vadd.f32 %v1297, %v1724
      %1726 = vmatmul.bf16.gmra.mxu0 %v1580
      %v1727 = vpop.f32.mrf.mxu0
      %v1728 = vadd.f32 %v1300, %v1727
      %v1729 = vpop.f32.mrf.mxu0
      %v1730 = vadd.f32 %v1302, %v1729
      %1731 = vmatmul.bf16.gmra.mxu0 %v1583
      %v1732 = vpop.f32.mrf.mxu0
      %v1733 = vadd.f32 %v1305, %v1732
      %v1734 = vpop.f32.mrf.mxu0
      %v1735 = vadd.f32 %v1307, %v1734
      %1736 = vmatmul.bf16.gmra.mxu0 %v1586
      %v1737 = vpop.f32.mrf.mxu0
      %v1738 = vadd.f32 %v1310, %v1737
      %v1739 = vpop.f32.mrf.mxu0
      %v1740 = vadd.f32 %v1312, %v1739
      %1741 = vmatmul.bf16.gmra.mxu0 %v1589
      %v1742 = vpop.f32.mrf.mxu0
      %v1743 = vadd.f32 %v1315, %v1742
      %v1744 = vpop.f32.mrf.mxu0
      %v1745 = vadd.f32 %v1317, %v1744
      %1746 = vmatmul.bf16.gmra.mxu0 %v1592
      %v1747 = vpop.f32.mrf.mxu0
      %v1748 = vadd.f32 %v1320, %v1747
      %v1749 = vpop.f32.mrf.mxu0
      %v1750 = vadd.f32 %v1322, %v1749
      %1751 = vmatmul.bf16.gmra.mxu0 %v1595
      %v1752 = vpop.f32.mrf.mxu0
      %v1753 = vadd.f32 %v1325, %v1752
      %v1754 = vpop.f32.mrf.mxu0
      %v1755 = vadd.f32 %v1327, %v1754
      %1756 = vmatmul.bf16.gmra.mxu0 %v1598
      %v1757 = vpop.f32.mrf.mxu0
      %v1758 = vadd.f32 %v1330, %v1757
      %v1759 = vpop.f32.mrf.mxu0
      %v1760 = vadd.f32 %v1332, %v1759
      %1761 = vmatmul.bf16.gmra.mxu0 %v1601
      %v1762 = vpop.f32.mrf.mxu0
      %v1763 = vadd.f32 %v1335, %v1762
      %v1764 = vpop.f32.mrf.mxu0
      %v1765 = vadd.f32 %v1337, %v1764
      %1766 = vmatmul.bf16.gmra.mxu0 %v1604
      %v1767 = vpop.f32.mrf.mxu0
      %v1768 = vadd.f32 %v1340, %v1767
      %v1769 = vpop.f32.mrf.mxu0
      %v1770 = vadd.f32 %v1342, %v1769
      %1771 = vmatmul.bf16.gmra.mxu0 %v1607
      %v1772 = vpop.f32.mrf.mxu0
      %v1773 = vadd.f32 %v1345, %v1772
      %v1774 = vpop.f32.mrf.mxu0
      %v1775 = vadd.f32 %v1347, %v1774
      %1776 = vmatmul.bf16.gmra.mxu0 %v1610
      %v1777 = vpop.f32.mrf.mxu0
      %v1778 = vadd.f32 %v1350, %v1777
      %v1779 = vpop.f32.mrf.mxu0
      %v1780 = vadd.f32 %v1352, %v1779
      %1781 = vmatmul.bf16.gmra.mxu0 %v1613
      %v1782 = vpop.f32.mrf.mxu0
      %v1783 = vadd.f32 %v1355, %v1782
      %v1784 = vpop.f32.mrf.mxu0
      %v1785 = vadd.f32 %v1357, %v1784
      %1786 = vdwg.mxu0
      %v1787 = vld [vmem:[%s192] sm:$0xe]
      %v1788 = vld [vmem:[%s192 + $0x14] sm:$0xe]
      %v1789 = vld [vmem:[%s192 + $0x28] sm:$0xe]
      %v1790 = vld [vmem:[%s192 + $0x3c] sm:$0xe]
      %v1791 = vld [vmem:[%s192 + $0x50] sm:$0xe]
      %v1792 = vld [vmem:[%s192 + $0x64] sm:$0xe]
      %v1793 = vld [vmem:[%s192 + $0x78] sm:$0xe]
      %v1794 = vld [vmem:[%s192 + $0x8c] sm:$0xe]
      %v1795 = vld [vmem:[%s192 + $0xa0] sm:$0xe]
      %v1796 = vld [vmem:[%s192 + $0xb4] sm:$0xe]
      %v1797 = vld [vmem:[%s192 + $0xc8] sm:$0xe]
      %v1798 = vld [vmem:[%s192 + $0xdc] sm:$0xe]
      %v1799 = vld [vmem:[%s192 + $0xf0] sm:$0xe]
      %v1800 = vld [vmem:[%s192 + $0x104] sm:$0xe]
      %v1801 = vld [vmem:[%s192 + $0x118] sm:$0xe]
      %v1802 = vld [vmem:[%s192 + $0x12c] sm:$0xe]
      %vm1835 = vcmask 1042432
      %vm1836 = vcmask 1046532
      %vm1837 = vmor %vm1835, %vm1836
      %v1838 = vrot.slane %v1787, 5
      %v1839 = vrot.slane %v1838, 4
      %v1840 = vrot.slane %v201, 5
      %v1841 = vsel %vm1837, %v1839, %v1840
      %v1842 = vrot.slane %v1840, 4
      %v1843 = vrot.slane %v202, 5
      %v1844 = vsel %vm1837, %v1842, %v1843
      %v1845 = vrot.slane %v1843, 4
      %v1846 = vrot.slane %v203, 5
      %v1847 = vsel %vm1837, %v1845, %v1846
      %v1848 = vrot.slane %v1846, 4
      %v1849 = vrot.slane %v265, 5
      %v1850 = vsel %vm1837, %v1848, %v1849
      %v1851 = vrot.slane %v1788, 5
      %v1852 = vrot.slane %v1851, 4
      %v1853 = vrot.slane %v205, 5
      %v1854 = vsel %vm1837, %v1852, %v1853
      %v1855 = vrot.slane %v1853, 4
      %v1856 = vrot.slane %v206, 5
      %v1857 = vsel %vm1837, %v1855, %v1856
      %v1858 = vrot.slane %v1856, 4
      %v1859 = vrot.slane %v207, 5
      %v1860 = vsel %vm1837, %v1858, %v1859
      %v1861 = vrot.slane %v1859, 4
      %v1862 = vrot.slane %v266, 5
      %v1863 = vsel %vm1837, %v1861, %v1862
      %v1864 = vrot.slane %v1789, 5
      %v1865 = vrot.slane %v1864, 4
      %v1866 = vrot.slane %v209, 5
      %v1867 = vsel %vm1837, %v1865, %v1866
      %v1868 = vrot.slane %v1866, 4
      %v1869 = vrot.slane %v210, 5
      %v1870 = vsel %vm1837, %v1868, %v1869
      %v1871 = vrot.slane %v1869, 4
      %v1872 = vrot.slane %v211, 5
      %v1873 = vsel %vm1837, %v1871, %v1872
      %v1874 = vrot.slane %v1872, 4
      %v1875 = vrot.slane %v267, 5
      %v1876 = vsel %vm1837, %v1874, %v1875
      %v1877 = vrot.slane %v1790, 5
      %v1878 = vrot.slane %v1877, 4
      %v1879 = vrot.slane %v213, 5
      %v1880 = vsel %vm1837, %v1878, %v1879
      %v1881 = vrot.slane %v1879, 4
      %v1882 = vrot.slane %v214, 5
      %v1883 = vsel %vm1837, %v1881, %v1882
      %v1884 = vrot.slane %v1882, 4
      %v1885 = vrot.slane %v215, 5
      %v1886 = vsel %vm1837, %v1884, %v1885
      %v1887 = vrot.slane %v1885, 4
      %v1888 = vrot.slane %v268, 5
      %v1889 = vsel %vm1837, %v1887, %v1888
      %v1890 = vrot.slane %v1791, 5
      %v1891 = vrot.slane %v1890, 4
      %v1892 = vrot.slane %v217, 5
      %v1893 = vsel %vm1837, %v1891, %v1892
      %v1894 = vrot.slane %v1892, 4
      %v1895 = vrot.slane %v218, 5
      %v1896 = vsel %vm1837, %v1894, %v1895
      %v1897 = vrot.slane %v1895, 4
      %v1898 = vrot.slane %v219, 5
      %v1899 = vsel %vm1837, %v1897, %v1898
      %v1900 = vrot.slane %v1898, 4
      %v1901 = vrot.slane %v269, 5
      %v1902 = vsel %vm1837, %v1900, %v1901
      %v1903 = vrot.slane %v1792, 5
      %v1904 = vrot.slane %v1903, 4
      %v1905 = vrot.slane %v221, 5
      %v1906 = vsel %vm1837, %v1904, %v1905
      %v1907 = vrot.slane %v1905, 4
      %v1908 = vrot.slane %v222, 5
      %v1909 = vsel %vm1837, %v1907, %v1908
      %v1910 = vrot.slane %v1908, 4
      %v1911 = vrot.slane %v223, 5
      %v1912 = vsel %vm1837, %v1910, %v1911
      %v1913 = vrot.slane %v1911, 4
      %v1914 = vrot.slane %v270, 5
      %v1915 = vsel %vm1837, %v1913, %v1914
      %v1916 = vrot.slane %v1793, 5
      %v1917 = vrot.slane %v1916, 4
      %v1918 = vrot.slane %v225, 5
      %v1919 = vsel %vm1837, %v1917, %v1918
      %v1920 = vrot.slane %v1918, 4
      %v1921 = vrot.slane %v226, 5
      %v1922 = vsel %vm1837, %v1920, %v1921
      %v1923 = vrot.slane %v1921, 4
      %v1924 = vrot.slane %v227, 5
      %v1925 = vsel %vm1837, %v1923, %v1924
      %v1926 = vrot.slane %v1924, 4
      %v1927 = vrot.slane %v271, 5
      %v1928 = vsel %vm1837, %v1926, %v1927
      %v1929 = vrot.slane %v1794, 5
      %v1930 = vrot.slane %v1929, 4
      %v1931 = vrot.slane %v229, 5
      %v1932 = vsel %vm1837, %v1930, %v1931
      %v1933 = vrot.slane %v1931, 4
      %v1934 = vrot.slane %v230, 5
      %v1935 = vsel %vm1837, %v1933, %v1934
      %v1936 = vrot.slane %v1934, 4
      %v1937 = vrot.slane %v231, 5
      %v1938 = vsel %vm1837, %v1936, %v1937
      %v1939 = vrot.slane %v1937, 4
      %v1940 = vrot.slane %v272, 5
      %v1941 = vsel %vm1837, %v1939, %v1940
      %v1942 = vrot.slane %v1795, 5
      %v1943 = vrot.slane %v1942, 4
      %v1944 = vrot.slane %v233, 5
      %v1945 = vsel %vm1837, %v1943, %v1944
      %v1946 = vrot.slane %v1944, 4
      %v1947 = vrot.slane %v234, 5
      %v1948 = vsel %vm1837, %v1946, %v1947
      %v1949 = vrot.slane %v1947, 4
      %v1950 = vrot.slane %v235, 5
      %v1951 = vsel %vm1837, %v1949, %v1950
      %v1952 = vrot.slane %v1950, 4
      %v1953 = vrot.slane %v273, 5
      %v1954 = vsel %vm1837, %v1952, %v1953
      %v1955 = vrot.slane %v1796, 5
      %v1956 = vrot.slane %v1955, 4
      %v1957 = vrot.slane %v237, 5
      %v1958 = vsel %vm1837, %v1956, %v1957
      %v1959 = vrot.slane %v1957, 4
      %v1960 = vrot.slane %v238, 5
      %v1961 = vsel %vm1837, %v1959, %v1960
      %v1962 = vrot.slane %v1960, 4
      %v1963 = vrot.slane %v239, 5
      %v1964 = vsel %vm1837, %v1962, %v1963
      %v1965 = vrot.slane %v1963, 4
      %v1966 = vrot.slane %v274, 5
      %v1967 = vsel %vm1837, %v1965, %v1966
      %v1968 = vrot.slane %v1797, 5
      %v1969 = vrot.slane %v1968, 4
      %v1970 = vrot.slane %v241, 5
      %v1971 = vsel %vm1837, %v1969, %v1970
      %v1972 = vrot.slane %v1970, 4
      %v1973 = vrot.slane %v242, 5
      %v1974 = vsel %vm1837, %v1972, %v1973
      %v1975 = vrot.slane %v1973, 4
      %v1976 = vrot.slane %v243, 5
      %v1977 = vsel %vm1837, %v1975, %v1976
      %v1978 = vrot.slane %v1976, 4
      %v1979 = vrot.slane %v275, 5
      %v1980 = vsel %vm1837, %v1978, %v1979
      %v1981 = vrot.slane %v1798, 5
      %v1982 = vrot.slane %v1981, 4
      %v1983 = vrot.slane %v245, 5
      %v1984 = vsel %vm1837, %v1982, %v1983
      %v1985 = vrot.slane %v1983, 4
      %v1986 = vrot.slane %v246, 5
      %v1987 = vsel %vm1837, %v1985, %v1986
      %v1988 = vrot.slane %v1986, 4
      %v1989 = vrot.slane %v247, 5
      %v1990 = vsel %vm1837, %v1988, %v1989
      %v1991 = vrot.slane %v1989, 4
      %v1992 = vrot.slane %v276, 5
      %v1993 = vsel %vm1837, %v1991, %v1992
      %v1994 = vrot.slane %v1799, 5
      %v1995 = vrot.slane %v1994, 4
      %v1996 = vrot.slane %v249, 5
      %v1997 = vsel %vm1837, %v1995, %v1996
      %v1998 = vrot.slane %v1996, 4
      %v1999 = vrot.slane %v250, 5
      %v2000 = vsel %vm1837, %v1998, %v1999
      %v2001 = vrot.slane %v1999, 4
      %v2002 = vrot.slane %v251, 5
      %v2003 = vsel %vm1837, %v2001, %v2002
      %v2004 = vrot.slane %v2002, 4
      %v2005 = vrot.slane %v277, 5
      %v2006 = vsel %vm1837, %v2004, %v2005
      %v2007 = vrot.slane %v1800, 5
      %v2008 = vrot.slane %v2007, 4
      %v2009 = vrot.slane %v253, 5
      %v2010 = vsel %vm1837, %v2008, %v2009
      %v2011 = vrot.slane %v2009, 4
      %v2012 = vrot.slane %v254, 5
      %v2013 = vsel %vm1837, %v2011, %v2012
      %v2014 = vrot.slane %v2012, 4
      %v2015 = vrot.slane %v255, 5
      %v2016 = vsel %vm1837, %v2014, %v2015
      %v2017 = vrot.slane %v2015, 4
      %v2018 = vrot.slane %v278, 5
      %v2019 = vsel %vm1837, %v2017, %v2018
      %v2020 = vrot.slane %v1801, 5
      %v2021 = vrot.slane %v2020, 4
      %v2022 = vrot.slane %v257, 5
      %v2023 = vsel %vm1837, %v2021, %v2022
      %v2024 = vrot.slane %v2022, 4
      %v2025 = vrot.slane %v258, 5
      %v2026 = vsel %vm1837, %v2024, %v2025
      %v2027 = vrot.slane %v2025, 4
      %v2028 = vrot.slane %v259, 5
      %v2029 = vsel %vm1837, %v2027, %v2028
      %v2030 = vrot.slane %v2028, 4
      %v2031 = vrot.slane %v279, 5
      %v2032 = vsel %vm1837, %v2030, %v2031
      %v2033 = vrot.slane %v1802, 5
      %v2034 = vrot.slane %v2033, 4
      %v2035 = vrot.slane %v261, 5
      %v2036 = vsel %vm1837, %v2034, %v2035
      %v2037 = vrot.slane %v2035, 4
      %v2038 = vrot.slane %v262, 5
      %v2039 = vsel %vm1837, %v2037, %v2038
      %v2040 = vrot.slane %v2038, 4
      %v2041 = vrot.slane %v263, 5
      %v2042 = vsel %vm1837, %v2040, %v2041
      %v2043 = vrot.slane %v2041, 4
      %v2044 = vrot.slane %v280, 5
      %v2045 = vsel %vm1837, %v2043, %v2044
      %s2046 = scalar_lea.vmem %s1, 4
      %v2047 = vld [vmem:[%s2046] sm:$0x3]
      %v2048 = vunpack.c.l.b16 %v1841
      %v2049 = vunpack.c.l.b16 %v1844
      %v2050 = vunpack.c.l.b16 %v1847
      %v2051 = vunpack.c.l.b16 %v1850
      %v2052 = vunpack.c.l.b16 %v1854
      %v2053 = vunpack.c.l.b16 %v1857
      %v2054 = vunpack.c.l.b16 %v1860
      %v2055 = vunpack.c.l.b16 %v1863
      %v2056 = vunpack.c.l.b16 %v1867
      %v2057 = vunpack.c.l.b16 %v1870
      %v2058 = vunpack.c.l.b16 %v1873
      %v2059 = vunpack.c.l.b16 %v1876
      %v2060 = vunpack.c.l.b16 %v1880
      %v2061 = vunpack.c.l.b16 %v1883
      %v2062 = vunpack.c.l.b16 %v1886
      %v2063 = vunpack.c.l.b16 %v1889
      %v2064 = vunpack.c.l.b16 %v1893
      %v2065 = vunpack.c.l.b16 %v1896
      %v2066 = vunpack.c.l.b16 %v1899
      %v2067 = vunpack.c.l.b16 %v1902
      %v2068 = vunpack.c.l.b16 %v1906
      %v2069 = vunpack.c.l.b16 %v1909
      %v2070 = vunpack.c.l.b16 %v1912
      %v2071 = vunpack.c.l.b16 %v1915
      %v2072 = vunpack.c.l.b16 %v1919
      %v2073 = vunpack.c.l.b16 %v1922
      %v2074 = vunpack.c.l.b16 %v1925
      %v2075 = vunpack.c.l.b16 %v1928
      %v2076 = vunpack.c.l.b16 %v1932
      %v2077 = vunpack.c.l.b16 %v1935
      %v2078 = vunpack.c.l.b16 %v1938
      %v2079 = vunpack.c.l.b16 %v1941
      %v2080 = vunpack.c.l.b16 %v1945
      %v2081 = vunpack.c.l.b16 %v1948
      %v2082 = vunpack.c.l.b16 %v1951
      %v2083 = vunpack.c.l.b16 %v1954
      %v2084 = vunpack.c.l.b16 %v1958
      %v2085 = vunpack.c.l.b16 %v1961
      %v2086 = vunpack.c.l.b16 %v1964
      %v2087 = vunpack.c.l.b16 %v1967
      %v2088 = vunpack.c.l.b16 %v1971
      %v2089 = vunpack.c.l.b16 %v1974
      %v2090 = vunpack.c.l.b16 %v1977
      %v2091 = vunpack.c.l.b16 %v1980
      %v2092 = vunpack.c.l.b16 %v1984
      %v2093 = vunpack.c.l.b16 %v1987
      %v2094 = vunpack.c.l.b16 %v1990
      %v2095 = vunpack.c.l.b16 %v1993
      %v2096 = vunpack.c.l.b16 %v1997
      %v2097 = vunpack.c.l.b16 %v2000
      %v2098 = vunpack.c.l.b16 %v2003
      %v2099 = vunpack.c.l.b16 %v2006
      %v2100 = vunpack.c.l.b16 %v2010
      %v2101 = vunpack.c.l.b16 %v2013
      %v2102 = vunpack.c.l.b16 %v2016
      %v2103 = vunpack.c.l.b16 %v2019
      %v2104 = vunpack.c.l.b16 %v2023
      %v2105 = vunpack.c.l.b16 %v2026
      %v2106 = vunpack.c.l.b16 %v2029
      %v2107 = vunpack.c.l.b16 %v2032
      %v2108 = vunpack.c.l.b16 %v2036
      %v2109 = vunpack.c.l.b16 %v2039
      %v2110 = vunpack.c.l.b16 %v2042
      %v2111 = vunpack.c.l.b16 %v2045
      %v2112 = vpack.c.b16 %v2049, %v2048
      %v2113 = vpack.c.b16 %v2051, %v2050
      %v2114 = vpack.c.b16 %v2053, %v2052
      %v2115 = vpack.c.b16 %v2055, %v2054
      %v2116 = vpack.c.b16 %v2057, %v2056
      %v2117 = vpack.c.b16 %v2059, %v2058
      %v2118 = vpack.c.b16 %v2061, %v2060
      %v2119 = vpack.c.b16 %v2063, %v2062
      %v2120 = vpack.c.b16 %v2065, %v2064
      %v2121 = vpack.c.b16 %v2067, %v2066
      %v2122 = vpack.c.b16 %v2069, %v2068
      %v2123 = vpack.c.b16 %v2071, %v2070
      %v2124 = vpack.c.b16 %v2073, %v2072
      %v2125 = vpack.c.b16 %v2075, %v2074
      %v2126 = vpack.c.b16 %v2077, %v2076
      %v2127 = vpack.c.b16 %v2079, %v2078
      %v2128 = vpack.c.b16 %v2081, %v2080
      %v2129 = vpack.c.b16 %v2083, %v2082
      %v2130 = vpack.c.b16 %v2085, %v2084
      %v2131 = vpack.c.b16 %v2087, %v2086
      %v2132 = vpack.c.b16 %v2089, %v2088
      %v2133 = vpack.c.b16 %v2091, %v2090
      %v2134 = vpack.c.b16 %v2093, %v2092
      %v2135 = vpack.c.b16 %v2095, %v2094
      %v2136 = vpack.c.b16 %v2097, %v2096
      %v2137 = vpack.c.b16 %v2099, %v2098
      %v2138 = vpack.c.b16 %v2101, %v2100
      %v2139 = vpack.c.b16 %v2103, %v2102
      %v2140 = vpack.c.b16 %v2105, %v2104
      %v2141 = vpack.c.b16 %v2107, %v2106
      %v2142 = vpack.c.b16 %v2109, %v2108
      %v2143 = vpack.c.b16 %v2111, %v2110
      %v2145 = vsel %vm1086, %v2112, 0
      %v2148 = vsel %vm1086, %v2113, 0
      %v2151 = vsel %vm1086, %v2114, 0
      %v2154 = vsel %vm1086, %v2115, 0
      %v2157 = vsel %vm1086, %v2116, 0
      %v2160 = vsel %vm1086, %v2117, 0
      %v2163 = vsel %vm1086, %v2118, 0
      %v2166 = vsel %vm1086, %v2119, 0
      %v2169 = vsel %vm1086, %v2120, 0
      %v2172 = vsel %vm1086, %v2121, 0
      %v2175 = vsel %vm1086, %v2122, 0
      %v2178 = vsel %vm1086, %v2123, 0
      %v2181 = vsel %vm1086, %v2124, 0
      %v2184 = vsel %vm1086, %v2125, 0
      %v2187 = vsel %vm1086, %v2126, 0
      %v2190 = vsel %vm1086, %v2127, 0
      %v2193 = vsel %vm1086, %v2128, 0
      %v2196 = vsel %vm1086, %v2129, 0
      %v2199 = vsel %vm1086, %v2130, 0
      %v2202 = vsel %vm1086, %v2131, 0
      %v2205 = vsel %vm1086, %v2132, 0
      %v2208 = vsel %vm1086, %v2133, 0
      %v2211 = vsel %vm1086, %v2134, 0
      %v2214 = vsel %vm1086, %v2135, 0
      %v2217 = vsel %vm1086, %v2136, 0
      %v2220 = vsel %vm1086, %v2137, 0
      %v2223 = vsel %vm1086, %v2138, 0
      %v2226 = vsel %vm1086, %v2139, 0
      %v2229 = vsel %vm1086, %v2140, 0
      %v2232 = vsel %vm1086, %v2141, 0
      %v2235 = vsel %vm1086, %v2142, 0
      %v2238 = vsel %vm1086, %v2143, 0
      %v2241 = vand.u32 %v2047, %v1186
      %2243 = vmatpush.bf16.msra.mxu0 0
      %2244 = vmatpush.bf16.msra.mxu0 0
      %2245 = vmatpush.bf16.msra.mxu0 0
      %2246 = vmatpush.bf16.msra.mxu0 0
      %2247 = vmatpush.bf16.msra.mxu0 0
      %2248 = vmatpush.bf16.msra.mxu0 0
      %2249 = vmatpush.bf16.msra.mxu0 0
      %2250 = vmatpush.bf16.msra.mxu0 %v2241
      %2251 = vmatmul.bf16.gmra.mxu0 %v2145
      %v2252 = vpop.f32.mrf.mxu0
      %v2253 = vadd.f32 0.0, %v2252
      %v2254 = vpop.f32.mrf.mxu0
      %v2255 = vadd.f32 0.0, %v2254
      %2256 = vmatmul.bf16.gmra.mxu0 %v2148
      %v2257 = vpop.f32.mrf.mxu0
      %v2258 = vadd.f32 0.0, %v2257
      %v2259 = vpop.f32.mrf.mxu0
      %v2260 = vadd.f32 0.0, %v2259
      %2261 = vmatmul.bf16.gmra.mxu0 %v2151
      %v2262 = vpop.f32.mrf.mxu0
      %v2263 = vadd.f32 0.0, %v2262
      %v2264 = vpop.f32.mrf.mxu0
      %v2265 = vadd.f32 0.0, %v2264
      %2266 = vmatmul.bf16.gmra.mxu0 %v2154
      %v2267 = vpop.f32.mrf.mxu0
      %v2268 = vadd.f32 0.0, %v2267
      %v2269 = vpop.f32.mrf.mxu0
      %v2270 = vadd.f32 0.0, %v2269
      %2271 = vmatmul.bf16.gmra.mxu0 %v2157
      %v2272 = vpop.f32.mrf.mxu0
      %v2273 = vadd.f32 0.0, %v2272
      %v2274 = vpop.f32.mrf.mxu0
      %v2275 = vadd.f32 0.0, %v2274
      %2276 = vmatmul.bf16.gmra.mxu0 %v2160
      %v2277 = vpop.f32.mrf.mxu0
      %v2278 = vadd.f32 0.0, %v2277
      %v2279 = vpop.f32.mrf.mxu0
      %v2280 = vadd.f32 0.0, %v2279
      %2281 = vmatmul.bf16.gmra.mxu0 %v2163
      %v2282 = vpop.f32.mrf.mxu0
      %v2283 = vadd.f32 0.0, %v2282
      %v2284 = vpop.f32.mrf.mxu0
      %v2285 = vadd.f32 0.0, %v2284
      %2286 = vmatmul.bf16.gmra.mxu0 %v2166
      %v2287 = vpop.f32.mrf.mxu0
      %v2288 = vadd.f32 0.0, %v2287
      %v2289 = vpop.f32.mrf.mxu0
      %v2290 = vadd.f32 0.0, %v2289
      %2291 = vmatmul.bf16.gmra.mxu0 %v2169
      %v2292 = vpop.f32.mrf.mxu0
      %v2293 = vadd.f32 0.0, %v2292
      %v2294 = vpop.f32.mrf.mxu0
      %v2295 = vadd.f32 0.0, %v2294
      %2296 = vmatmul.bf16.gmra.mxu0 %v2172
      %v2297 = vpop.f32.mrf.mxu0
      %v2298 = vadd.f32 0.0, %v2297
      %v2299 = vpop.f32.mrf.mxu0
      %v2300 = vadd.f32 0.0, %v2299
      %2301 = vmatmul.bf16.gmra.mxu0 %v2175
      %v2302 = vpop.f32.mrf.mxu0
      %v2303 = vadd.f32 0.0, %v2302
      %v2304 = vpop.f32.mrf.mxu0
      %v2305 = vadd.f32 0.0, %v2304
      %2306 = vmatmul.bf16.gmra.mxu0 %v2178
      %v2307 = vpop.f32.mrf.mxu0
      %v2308 = vadd.f32 0.0, %v2307
      %v2309 = vpop.f32.mrf.mxu0
      %v2310 = vadd.f32 0.0, %v2309
      %2311 = vmatmul.bf16.gmra.mxu0 %v2181
      %v2312 = vpop.f32.mrf.mxu0
      %v2313 = vadd.f32 0.0, %v2312
      %v2314 = vpop.f32.mrf.mxu0
      %v2315 = vadd.f32 0.0, %v2314
      %2316 = vmatmul.bf16.gmra.mxu0 %v2184
      %v2317 = vpop.f32.mrf.mxu0
      %v2318 = vadd.f32 0.0, %v2317
      %v2319 = vpop.f32.mrf.mxu0
      %v2320 = vadd.f32 0.0, %v2319
      %2321 = vmatmul.bf16.gmra.mxu0 %v2187
      %v2322 = vpop.f32.mrf.mxu0
      %v2323 = vadd.f32 0.0, %v2322
      %v2324 = vpop.f32.mrf.mxu0
      %v2325 = vadd.f32 0.0, %v2324
      %2326 = vmatmul.bf16.gmra.mxu0 %v2190
      %v2327 = vpop.f32.mrf.mxu0
      %v2328 = vadd.f32 0.0, %v2327
      %v2329 = vpop.f32.mrf.mxu0
      %v2330 = vadd.f32 0.0, %v2329
      %2331 = vmatmul.bf16.gmra.mxu0 %v2193
      %v2332 = vpop.f32.mrf.mxu0
      %v2333 = vadd.f32 0.0, %v2332
      %v2334 = vpop.f32.mrf.mxu0
      %v2335 = vadd.f32 0.0, %v2334
      %2336 = vmatmul.bf16.gmra.mxu0 %v2196
      %v2337 = vpop.f32.mrf.mxu0
      %v2338 = vadd.f32 0.0, %v2337
      %v2339 = vpop.f32.mrf.mxu0
      %v2340 = vadd.f32 0.0, %v2339
      %2341 = vmatmul.bf16.gmra.mxu0 %v2199
      %v2342 = vpop.f32.mrf.mxu0
      %v2343 = vadd.f32 0.0, %v2342
      %v2344 = vpop.f32.mrf.mxu0
      %v2345 = vadd.f32 0.0, %v2344
      %2346 = vmatmul.bf16.gmra.mxu0 %v2202
      %v2347 = vpop.f32.mrf.mxu0
      %v2348 = vadd.f32 0.0, %v2347
      %v2349 = vpop.f32.mrf.mxu0
      %v2350 = vadd.f32 0.0, %v2349
      %2351 = vmatmul.bf16.gmra.mxu0 %v2205
      %v2352 = vpop.f32.mrf.mxu0
      %v2353 = vadd.f32 0.0, %v2352
      %v2354 = vpop.f32.mrf.mxu0
      %v2355 = vadd.f32 0.0, %v2354
      %2356 = vmatmul.bf16.gmra.mxu0 %v2208
      %v2357 = vpop.f32.mrf.mxu0
      %v2358 = vadd.f32 0.0, %v2357
      %v2359 = vpop.f32.mrf.mxu0
      %v2360 = vadd.f32 0.0, %v2359
      %2361 = vmatmul.bf16.gmra.mxu0 %v2211
      %v2362 = vpop.f32.mrf.mxu0
      %v2363 = vadd.f32 0.0, %v2362
      %v2364 = vpop.f32.mrf.mxu0
      %v2365 = vadd.f32 0.0, %v2364
      %2366 = vmatmul.bf16.gmra.mxu0 %v2214
      %v2367 = vpop.f32.mrf.mxu0
      %v2368 = vadd.f32 0.0, %v2367
      %v2369 = vpop.f32.mrf.mxu0
      %v2370 = vadd.f32 0.0, %v2369
      %2371 = vmatmul.bf16.gmra.mxu0 %v2217
      %v2372 = vpop.f32.mrf.mxu0
      %v2373 = vadd.f32 0.0, %v2372
      %v2374 = vpop.f32.mrf.mxu0
      %v2375 = vadd.f32 0.0, %v2374
      %2376 = vmatmul.bf16.gmra.mxu0 %v2220
      %v2377 = vpop.f32.mrf.mxu0
      %v2378 = vadd.f32 0.0, %v2377
      %v2379 = vpop.f32.mrf.mxu0
      %v2380 = vadd.f32 0.0, %v2379
      %2381 = vmatmul.bf16.gmra.mxu0 %v2223
      %v2382 = vpop.f32.mrf.mxu0
      %v2383 = vadd.f32 0.0, %v2382
      %v2384 = vpop.f32.mrf.mxu0
      %v2385 = vadd.f32 0.0, %v2384
      %2386 = vmatmul.bf16.gmra.mxu0 %v2226
      %v2387 = vpop.f32.mrf.mxu0
      %v2388 = vadd.f32 0.0, %v2387
      %v2389 = vpop.f32.mrf.mxu0
      %v2390 = vadd.f32 0.0, %v2389
      %2391 = vmatmul.bf16.gmra.mxu0 %v2229
      %v2392 = vpop.f32.mrf.mxu0
      %v2393 = vadd.f32 0.0, %v2392
      %v2394 = vpop.f32.mrf.mxu0
      %v2395 = vadd.f32 0.0, %v2394
      %2396 = vmatmul.bf16.gmra.mxu0 %v2232
      %v2397 = vpop.f32.mrf.mxu0
      %v2398 = vadd.f32 0.0, %v2397
      %v2399 = vpop.f32.mrf.mxu0
      %v2400 = vadd.f32 0.0, %v2399
      %2401 = vmatmul.bf16.gmra.mxu0 %v2235
      %v2402 = vpop.f32.mrf.mxu0
      %v2403 = vadd.f32 0.0, %v2402
      %v2404 = vpop.f32.mrf.mxu0
      %v2405 = vadd.f32 0.0, %v2404
      %2406 = vmatmul.bf16.gmra.mxu0 %v2238
      %v2407 = vpop.f32.mrf.mxu0
      %v2408 = vadd.f32 0.0, %v2407
      %v2409 = vpop.f32.mrf.mxu0
      %v2410 = vadd.f32 0.0, %v2409
      %2411 = vdwg.mxu0
      %v2412 = vadd.f32 %v1628, %v2253
      %v2413 = vadd.f32 %v1630, %v2255
      %v2414 = vadd.f32 %v1633, %v2258
      %v2415 = vadd.f32 %v1635, %v2260
      %v2416 = vadd.f32 %v1638, %v2263
      %v2417 = vadd.f32 %v1640, %v2265
      %v2418 = vadd.f32 %v1643, %v2268
      %v2419 = vadd.f32 %v1645, %v2270
      %v2420 = vadd.f32 %v1648, %v2273
      %v2421 = vadd.f32 %v1650, %v2275
      %v2422 = vadd.f32 %v1653, %v2278
      %v2423 = vadd.f32 %v1655, %v2280
      %v2424 = vadd.f32 %v1658, %v2283
      %v2425 = vadd.f32 %v1660, %v2285
      %v2426 = vadd.f32 %v1663, %v2288
      %v2427 = vadd.f32 %v1665, %v2290
      %v2428 = vadd.f32 %v1668, %v2293
      %v2429 = vadd.f32 %v1670, %v2295
      %v2430 = vadd.f32 %v1673, %v2298
      %v2431 = vadd.f32 %v1675, %v2300
      %v2432 = vadd.f32 %v1678, %v2303
      %v2433 = vadd.f32 %v1680, %v2305
      %v2434 = vadd.f32 %v1683, %v2308
      %v2435 = vadd.f32 %v1685, %v2310
      %v2436 = vadd.f32 %v1688, %v2313
      %v2437 = vadd.f32 %v1690, %v2315
      %v2438 = vadd.f32 %v1693, %v2318
      %v2439 = vadd.f32 %v1695, %v2320
      %v2440 = vadd.f32 %v1698, %v2323
      %v2441 = vadd.f32 %v1700, %v2325
      %v2442 = vadd.f32 %v1703, %v2328
      %v2443 = vadd.f32 %v1705, %v2330
      %v2444 = vadd.f32 %v1708, %v2333
      %v2445 = vadd.f32 %v1710, %v2335
      %v2446 = vadd.f32 %v1713, %v2338
      %v2447 = vadd.f32 %v1715, %v2340
      %v2448 = vadd.f32 %v1718, %v2343
      %v2449 = vadd.f32 %v1720, %v2345
      %v2450 = vadd.f32 %v1723, %v2348
      %v2451 = vadd.f32 %v1725, %v2350
      %v2452 = vadd.f32 %v1728, %v2353
      %v2453 = vadd.f32 %v1730, %v2355
      %v2454 = vadd.f32 %v1733, %v2358
      %v2455 = vadd.f32 %v1735, %v2360
      %v2456 = vadd.f32 %v1738, %v2363
      %v2457 = vadd.f32 %v1740, %v2365
      %v2458 = vadd.f32 %v1743, %v2368
      %v2459 = vadd.f32 %v1745, %v2370
      %v2460 = vadd.f32 %v1748, %v2373
      %v2461 = vadd.f32 %v1750, %v2375
      %v2462 = vadd.f32 %v1753, %v2378
      %v2463 = vadd.f32 %v1755, %v2380
      %v2464 = vadd.f32 %v1758, %v2383
      %v2465 = vadd.f32 %v1760, %v2385
      %v2466 = vadd.f32 %v1763, %v2388
      %v2467 = vadd.f32 %v1765, %v2390
      %v2468 = vadd.f32 %v1768, %v2393
      %v2469 = vadd.f32 %v1770, %v2395
      %v2470 = vadd.f32 %v1773, %v2398
      %v2471 = vadd.f32 %v1775, %v2400
      %v2472 = vadd.f32 %v1778, %v2403
      %v2473 = vadd.f32 %v1780, %v2405
      %v2474 = vadd.f32 %v1783, %v2408
      %v2475 = vadd.f32 %v1785, %v2410
      %s2476 = scalar_lea.vmem %s192, 20
      %v2477 = vld [vmem:[%s2476] sm:$0xf]
      %v2478 = vld [vmem:[%s2476 + $0x4] sm:$0xf]
      %v2479 = vld [vmem:[%s2476 + $0x8] sm:$0xf]
      %v2480 = vld [vmem:[%s2476 + $0xc] sm:$0xf]
      %v2481 = vld [vmem:[%s2476 + $0x14] sm:$0xf]
      %v2482 = vld [vmem:[%s2476 + $0x18] sm:$0xf]
      %v2483 = vld [vmem:[%s2476 + $0x1c] sm:$0xf]
      %v2484 = vld [vmem:[%s2476 + $0x20] sm:$0xf]
      %v2485 = vld [vmem:[%s2476 + $0x28] sm:$0xf]
      %v2486 = vld [vmem:[%s2476 + $0x2c] sm:$0xf]
      %v2487 = vld [vmem:[%s2476 + $0x30] sm:$0xf]
      %v2488 = vld [vmem:[%s2476 + $0x34] sm:$0xf]
      %v2489 = vld [vmem:[%s2476 + $0x3c] sm:$0xf]
      %v2490 = vld [vmem:[%s2476 + $0x40] sm:$0xf]
      %v2491 = vld [vmem:[%s2476 + $0x44] sm:$0xf]
      %v2492 = vld [vmem:[%s2476 + $0x48] sm:$0xf]
      %v2493 = vld [vmem:[%s2476 + $0x50] sm:$0xf]
      %v2494 = vld [vmem:[%s2476 + $0x54] sm:$0xf]
      %v2495 = vld [vmem:[%s2476 + $0x58] sm:$0xf]
      %v2496 = vld [vmem:[%s2476 + $0x5c] sm:$0xf]
      %v2497 = vld [vmem:[%s2476 + $0x64] sm:$0xf]
      %v2498 = vld [vmem:[%s2476 + $0x68] sm:$0xf]
      %v2499 = vld [vmem:[%s2476 + $0x6c] sm:$0xf]
      %v2500 = vld [vmem:[%s2476 + $0x70] sm:$0xf]
      %v2501 = vld [vmem:[%s2476 + $0x78] sm:$0xf]
      %v2502 = vld [vmem:[%s2476 + $0x7c] sm:$0xf]
      %v2503 = vld [vmem:[%s2476 + $0x80] sm:$0xf]
      %v2504 = vld [vmem:[%s2476 + $0x84] sm:$0xf]
      %v2505 = vld [vmem:[%s2476 + $0x8c] sm:$0xf]
      %v2506 = vld [vmem:[%s2476 + $0x90] sm:$0xf]
      %v2507 = vld [vmem:[%s2476 + $0x94] sm:$0xf]
      %v2508 = vld [vmem:[%s2476 + $0x98] sm:$0xf]
      %v2509 = vld [vmem:[%s2476 + $0xa0] sm:$0xf]
      %v2510 = vld [vmem:[%s2476 + $0xa4] sm:$0xf]
      %v2511 = vld [vmem:[%s2476 + $0xa8] sm:$0xf]
      %v2512 = vld [vmem:[%s2476 + $0xac] sm:$0xf]
      %v2513 = vld [vmem:[%s2476 + $0xb4] sm:$0xf]
      %v2514 = vld [vmem:[%s2476 + $0xb8] sm:$0xf]
      %v2515 = vld [vmem:[%s2476 + $0xbc] sm:$0xf]
      %v2516 = vld [vmem:[%s2476 + $0xc0] sm:$0xf]
      %v2517 = vld [vmem:[%s2476 + $0xc8] sm:$0xf]
      %v2518 = vld [vmem:[%s2476 + $0xcc] sm:$0xf]
      %v2519 = vld [vmem:[%s2476 + $0xd0] sm:$0xf]
      %v2520 = vld [vmem:[%s2476 + $0xd4] sm:$0xf]
      %v2521 = vld [vmem:[%s2476 + $0xdc] sm:$0xf]
      %v2522 = vld [vmem:[%s2476 + $0xe0] sm:$0xf]
      %v2523 = vld [vmem:[%s2476 + $0xe4] sm:$0xf]
      %v2524 = vld [vmem:[%s2476 + $0xe8] sm:$0xf]
      %v2525 = vld [vmem:[%s2476 + $0xf0] sm:$0xf]
      %v2526 = vld [vmem:[%s2476 + $0xf4] sm:$0xf]
      %v2527 = vld [vmem:[%s2476 + $0xf8] sm:$0xf]
      %v2528 = vld [vmem:[%s2476 + $0xfc] sm:$0xf]
      %v2529 = vld [vmem:[%s2476 + $0x104] sm:$0xf]
      %v2530 = vld [vmem:[%s2476 + $0x108] sm:$0xf]
      %v2531 = vld [vmem:[%s2476 + $0x10c] sm:$0xf]
      %v2532 = vld [vmem:[%s2476 + $0x110] sm:$0xf]
      %v2533 = vld [vmem:[%s2476 + $0x118] sm:$0xf]
      %v2534 = vld [vmem:[%s2476 + $0x11c] sm:$0xf]
      %v2535 = vld [vmem:[%s2476 + $0x120] sm:$0xf]
      %v2536 = vld [vmem:[%s2476 + $0x124] sm:$0xf]
      %v2537 = vld [vmem:[%s2476 + $0x12c] sm:$0xf]
      %v2538 = vld [vmem:[%s2476 + $0x130] sm:$0xf]
      %v2539 = vld [vmem:[%s2476 + $0x134] sm:$0xf]
      %v2540 = vld [vmem:[%s2476 + $0x138] sm:$0xf]
      %s2541 = scalar_lea.vmem %s1, 6
      %v2542 = vld [vmem:[%s2541] sm:$0x3]
      %v2607 = vunpack.c.l.b16 %v2477
      %v2608 = vunpack.c.l.b16 %v2478
      %v2609 = vunpack.c.l.b16 %v2479
      %v2610 = vunpack.c.l.b16 %v2480
      %v2611 = vunpack.c.l.b16 %v2481
      %v2612 = vunpack.c.l.b16 %v2482
      %v2613 = vunpack.c.l.b16 %v2483
      %v2614 = vunpack.c.l.b16 %v2484
      %v2615 = vunpack.c.l.b16 %v2485
      %v2616 = vunpack.c.l.b16 %v2486
      %v2617 = vunpack.c.l.b16 %v2487
      %v2618 = vunpack.c.l.b16 %v2488
      %v2619 = vunpack.c.l.b16 %v2489
      %v2620 = vunpack.c.l.b16 %v2490
      %v2621 = vunpack.c.l.b16 %v2491
      %v2622 = vunpack.c.l.b16 %v2492
      %v2623 = vunpack.c.l.b16 %v2493
      %v2624 = vunpack.c.l.b16 %v2494
      %v2625 = vunpack.c.l.b16 %v2495
      %v2626 = vunpack.c.l.b16 %v2496
      %v2627 = vunpack.c.l.b16 %v2497
      %v2628 = vunpack.c.l.b16 %v2498
      %v2629 = vunpack.c.l.b16 %v2499
      %v2630 = vunpack.c.l.b16 %v2500
      %v2631 = vunpack.c.l.b16 %v2501
      %v2632 = vunpack.c.l.b16 %v2502
      %v2633 = vunpack.c.l.b16 %v2503
      %v2634 = vunpack.c.l.b16 %v2504
      %v2635 = vunpack.c.l.b16 %v2505
      %v2636 = vunpack.c.l.b16 %v2506
      %v2637 = vunpack.c.l.b16 %v2507
      %v2638 = vunpack.c.l.b16 %v2508
      %v2639 = vunpack.c.l.b16 %v2509
      %v2640 = vunpack.c.l.b16 %v2510
      %v2641 = vunpack.c.l.b16 %v2511
      %v2642 = vunpack.c.l.b16 %v2512
      %v2643 = vunpack.c.l.b16 %v2513
      %v2644 = vunpack.c.l.b16 %v2514
      %v2645 = vunpack.c.l.b16 %v2515
      %v2646 = vunpack.c.l.b16 %v2516
      %v2647 = vunpack.c.l.b16 %v2517
      %v2648 = vunpack.c.l.b16 %v2518
      %v2649 = vunpack.c.l.b16 %v2519
      %v2650 = vunpack.c.l.b16 %v2520
      %v2651 = vunpack.c.l.b16 %v2521
      %v2652 = vunpack.c.l.b16 %v2522
      %v2653 = vunpack.c.l.b16 %v2523
      %v2654 = vunpack.c.l.b16 %v2524
      %v2655 = vunpack.c.l.b16 %v2525
      %v2656 = vunpack.c.l.b16 %v2526
      %v2657 = vunpack.c.l.b16 %v2527
      %v2658 = vunpack.c.l.b16 %v2528
      %v2659 = vunpack.c.l.b16 %v2529
      %v2660 = vunpack.c.l.b16 %v2530
      %v2661 = vunpack.c.l.b16 %v2531
      %v2662 = vunpack.c.l.b16 %v2532
      %v2663 = vunpack.c.l.b16 %v2533
      %v2664 = vunpack.c.l.b16 %v2534
      %v2665 = vunpack.c.l.b16 %v2535
      %v2666 = vunpack.c.l.b16 %v2536
      %v2667 = vunpack.c.l.b16 %v2537
      %v2668 = vunpack.c.l.b16 %v2538
      %v2669 = vunpack.c.l.b16 %v2539
      %v2670 = vunpack.c.l.b16 %v2540
      %v2671 = vpack.c.b16 %v2608, %v2607
      %v2672 = vpack.c.b16 %v2610, %v2609
      %v2673 = vpack.c.b16 %v2612, %v2611
      %v2674 = vpack.c.b16 %v2614, %v2613
      %v2675 = vpack.c.b16 %v2616, %v2615
      %v2676 = vpack.c.b16 %v2618, %v2617
      %v2677 = vpack.c.b16 %v2620, %v2619
      %v2678 = vpack.c.b16 %v2622, %v2621
      %v2679 = vpack.c.b16 %v2624, %v2623
      %v2680 = vpack.c.b16 %v2626, %v2625
      %v2681 = vpack.c.b16 %v2628, %v2627
      %v2682 = vpack.c.b16 %v2630, %v2629
      %v2683 = vpack.c.b16 %v2632, %v2631
      %v2684 = vpack.c.b16 %v2634, %v2633
      %v2685 = vpack.c.b16 %v2636, %v2635
      %v2686 = vpack.c.b16 %v2638, %v2637
      %v2687 = vpack.c.b16 %v2640, %v2639
      %v2688 = vpack.c.b16 %v2642, %v2641
      %v2689 = vpack.c.b16 %v2644, %v2643
      %v2690 = vpack.c.b16 %v2646, %v2645
      %v2691 = vpack.c.b16 %v2648, %v2647
      %v2692 = vpack.c.b16 %v2650, %v2649
      %v2693 = vpack.c.b16 %v2652, %v2651
      %v2694 = vpack.c.b16 %v2654, %v2653
      %v2695 = vpack.c.b16 %v2656, %v2655
      %v2696 = vpack.c.b16 %v2658, %v2657
      %v2697 = vpack.c.b16 %v2660, %v2659
      %v2698 = vpack.c.b16 %v2662, %v2661
      %v2699 = vpack.c.b16 %v2664, %v2663
      %v2700 = vpack.c.b16 %v2666, %v2665
      %v2701 = vpack.c.b16 %v2668, %v2667
      %v2702 = vpack.c.b16 %v2670, %v2669
      %v2704 = vsel %vm1086, %v2671, 0
      %v2707 = vsel %vm1086, %v2672, 0
      %v2710 = vsel %vm1086, %v2673, 0
      %v2713 = vsel %vm1086, %v2674, 0
      %v2716 = vsel %vm1086, %v2675, 0
      %v2719 = vsel %vm1086, %v2676, 0
      %v2722 = vsel %vm1086, %v2677, 0
      %v2725 = vsel %vm1086, %v2678, 0
      %v2728 = vsel %vm1086, %v2679, 0
      %v2731 = vsel %vm1086, %v2680, 0
      %v2734 = vsel %vm1086, %v2681, 0
      %v2737 = vsel %vm1086, %v2682, 0
      %v2740 = vsel %vm1086, %v2683, 0
      %v2743 = vsel %vm1086, %v2684, 0
      %v2746 = vsel %vm1086, %v2685, 0
      %v2749 = vsel %vm1086, %v2686, 0
      %v2752 = vsel %vm1086, %v2687, 0
      %v2755 = vsel %vm1086, %v2688, 0
      %v2758 = vsel %vm1086, %v2689, 0
      %v2761 = vsel %vm1086, %v2690, 0
      %v2764 = vsel %vm1086, %v2691, 0
      %v2767 = vsel %vm1086, %v2692, 0
      %v2770 = vsel %vm1086, %v2693, 0
      %v2773 = vsel %vm1086, %v2694, 0
      %v2776 = vsel %vm1086, %v2695, 0
      %v2779 = vsel %vm1086, %v2696, 0
      %v2782 = vsel %vm1086, %v2697, 0
      %v2785 = vsel %vm1086, %v2698, 0
      %v2788 = vsel %vm1086, %v2699, 0
      %v2791 = vsel %vm1086, %v2700, 0
      %v2794 = vsel %vm1086, %v2701, 0
      %v2797 = vsel %vm1086, %v2702, 0
      %v2800 = vand.u32 %v2542, %v1186
      %2802 = vmatpush.bf16.msra.mxu0 0
      %2803 = vmatpush.bf16.msra.mxu0 0
      %2804 = vmatpush.bf16.msra.mxu0 0
      %2805 = vmatpush.bf16.msra.mxu0 0
      %2806 = vmatpush.bf16.msra.mxu0 0
      %2807 = vmatpush.bf16.msra.mxu0 0
      %2808 = vmatpush.bf16.msra.mxu0 0
      %2809 = vmatpush.bf16.msra.mxu0 %v2800
      %2810 = vmatmul.bf16.gmra.mxu0 %v2704
      %v2811 = vpop.f32.mrf.mxu0
      %v2812 = vadd.f32 0.0, %v2811
      %v2813 = vpop.f32.mrf.mxu0
      %v2814 = vadd.f32 0.0, %v2813
      %2815 = vmatmul.bf16.gmra.mxu0 %v2707
      %v2816 = vpop.f32.mrf.mxu0
      %v2817 = vadd.f32 0.0, %v2816
      %v2818 = vpop.f32.mrf.mxu0
      %v2819 = vadd.f32 0.0, %v2818
      %2820 = vmatmul.bf16.gmra.mxu0 %v2710
      %v2821 = vpop.f32.mrf.mxu0
      %v2822 = vadd.f32 0.0, %v2821
      %v2823 = vpop.f32.mrf.mxu0
      %v2824 = vadd.f32 0.0, %v2823
      %2825 = vmatmul.bf16.gmra.mxu0 %v2713
      %v2826 = vpop.f32.mrf.mxu0
      %v2827 = vadd.f32 0.0, %v2826
      %v2828 = vpop.f32.mrf.mxu0
      %v2829 = vadd.f32 0.0, %v2828
      %2830 = vmatmul.bf16.gmra.mxu0 %v2716
      %v2831 = vpop.f32.mrf.mxu0
      %v2832 = vadd.f32 0.0, %v2831
      %v2833 = vpop.f32.mrf.mxu0
      %v2834 = vadd.f32 0.0, %v2833
      %2835 = vmatmul.bf16.gmra.mxu0 %v2719
      %v2836 = vpop.f32.mrf.mxu0
      %v2837 = vadd.f32 0.0, %v2836
      %v2838 = vpop.f32.mrf.mxu0
      %v2839 = vadd.f32 0.0, %v2838
      %2840 = vmatmul.bf16.gmra.mxu0 %v2722
      %v2841 = vpop.f32.mrf.mxu0
      %v2842 = vadd.f32 0.0, %v2841
      %v2843 = vpop.f32.mrf.mxu0
      %v2844 = vadd.f32 0.0, %v2843
      %2845 = vmatmul.bf16.gmra.mxu0 %v2725
      %v2846 = vpop.f32.mrf.mxu0
      %v2847 = vadd.f32 0.0, %v2846
      %v2848 = vpop.f32.mrf.mxu0
      %v2849 = vadd.f32 0.0, %v2848
      %2850 = vmatmul.bf16.gmra.mxu0 %v2728
      %v2851 = vpop.f32.mrf.mxu0
      %v2852 = vadd.f32 0.0, %v2851
      %v2853 = vpop.f32.mrf.mxu0
      %v2854 = vadd.f32 0.0, %v2853
      %2855 = vmatmul.bf16.gmra.mxu0 %v2731
      %v2856 = vpop.f32.mrf.mxu0
      %v2857 = vadd.f32 0.0, %v2856
      %v2858 = vpop.f32.mrf.mxu0
      %v2859 = vadd.f32 0.0, %v2858
      %2860 = vmatmul.bf16.gmra.mxu0 %v2734
      %v2861 = vpop.f32.mrf.mxu0
      %v2862 = vadd.f32 0.0, %v2861
      %v2863 = vpop.f32.mrf.mxu0
      %v2864 = vadd.f32 0.0, %v2863
      %2865 = vmatmul.bf16.gmra.mxu0 %v2737
      %v2866 = vpop.f32.mrf.mxu0
      %v2867 = vadd.f32 0.0, %v2866
      %v2868 = vpop.f32.mrf.mxu0
      %v2869 = vadd.f32 0.0, %v2868
      %2870 = vmatmul.bf16.gmra.mxu0 %v2740
      %v2871 = vpop.f32.mrf.mxu0
      %v2872 = vadd.f32 0.0, %v2871
      %v2873 = vpop.f32.mrf.mxu0
      %v2874 = vadd.f32 0.0, %v2873
      %2875 = vmatmul.bf16.gmra.mxu0 %v2743
      %v2876 = vpop.f32.mrf.mxu0
      %v2877 = vadd.f32 0.0, %v2876
      %v2878 = vpop.f32.mrf.mxu0
      %v2879 = vadd.f32 0.0, %v2878
      %2880 = vmatmul.bf16.gmra.mxu0 %v2746
      %v2881 = vpop.f32.mrf.mxu0
      %v2882 = vadd.f32 0.0, %v2881
      %v2883 = vpop.f32.mrf.mxu0
      %v2884 = vadd.f32 0.0, %v2883
      %2885 = vmatmul.bf16.gmra.mxu0 %v2749
      %v2886 = vpop.f32.mrf.mxu0
      %v2887 = vadd.f32 0.0, %v2886
      %v2888 = vpop.f32.mrf.mxu0
      %v2889 = vadd.f32 0.0, %v2888
      %2890 = vmatmul.bf16.gmra.mxu0 %v2752
      %v2891 = vpop.f32.mrf.mxu0
      %v2892 = vadd.f32 0.0, %v2891
      %v2893 = vpop.f32.mrf.mxu0
      %v2894 = vadd.f32 0.0, %v2893
      %2895 = vmatmul.bf16.gmra.mxu0 %v2755
      %v2896 = vpop.f32.mrf.mxu0
      %v2897 = vadd.f32 0.0, %v2896
      %v2898 = vpop.f32.mrf.mxu0
      %v2899 = vadd.f32 0.0, %v2898
      %2900 = vmatmul.bf16.gmra.mxu0 %v2758
      %v2901 = vpop.f32.mrf.mxu0
      %v2902 = vadd.f32 0.0, %v2901
      %v2903 = vpop.f32.mrf.mxu0
      %v2904 = vadd.f32 0.0, %v2903
      %2905 = vmatmul.bf16.gmra.mxu0 %v2761
      %v2906 = vpop.f32.mrf.mxu0
      %v2907 = vadd.f32 0.0, %v2906
      %v2908 = vpop.f32.mrf.mxu0
      %v2909 = vadd.f32 0.0, %v2908
      %2910 = vmatmul.bf16.gmra.mxu0 %v2764
      %v2911 = vpop.f32.mrf.mxu0
      %v2912 = vadd.f32 0.0, %v2911
      %v2913 = vpop.f32.mrf.mxu0
      %v2914 = vadd.f32 0.0, %v2913
      %2915 = vmatmul.bf16.gmra.mxu0 %v2767
      %v2916 = vpop.f32.mrf.mxu0
      %v2917 = vadd.f32 0.0, %v2916
      %v2918 = vpop.f32.mrf.mxu0
      %v2919 = vadd.f32 0.0, %v2918
      %2920 = vmatmul.bf16.gmra.mxu0 %v2770
      %v2921 = vpop.f32.mrf.mxu0
      %v2922 = vadd.f32 0.0, %v2921
      %v2923 = vpop.f32.mrf.mxu0
      %v2924 = vadd.f32 0.0, %v2923
      %2925 = vmatmul.bf16.gmra.mxu0 %v2773
      %v2926 = vpop.f32.mrf.mxu0
      %v2927 = vadd.f32 0.0, %v2926
      %v2928 = vpop.f32.mrf.mxu0
      %v2929 = vadd.f32 0.0, %v2928
      %2930 = vmatmul.bf16.gmra.mxu0 %v2776
      %v2931 = vpop.f32.mrf.mxu0
      %v2932 = vadd.f32 0.0, %v2931
      %v2933 = vpop.f32.mrf.mxu0
      %v2934 = vadd.f32 0.0, %v2933
      %2935 = vmatmul.bf16.gmra.mxu0 %v2779
      %v2936 = vpop.f32.mrf.mxu0
      %v2937 = vadd.f32 0.0, %v2936
      %v2938 = vpop.f32.mrf.mxu0
      %v2939 = vadd.f32 0.0, %v2938
      %2940 = vmatmul.bf16.gmra.mxu0 %v2782
      %v2941 = vpop.f32.mrf.mxu0
      %v2942 = vadd.f32 0.0, %v2941
      %v2943 = vpop.f32.mrf.mxu0
      %v2944 = vadd.f32 0.0, %v2943
      %2945 = vmatmul.bf16.gmra.mxu0 %v2785
      %v2946 = vpop.f32.mrf.mxu0
      %v2947 = vadd.f32 0.0, %v2946
      %v2948 = vpop.f32.mrf.mxu0
      %v2949 = vadd.f32 0.0, %v2948
      %2950 = vmatmul.bf16.gmra.mxu0 %v2788
      %v2951 = vpop.f32.mrf.mxu0
      %v2952 = vadd.f32 0.0, %v2951
      %v2953 = vpop.f32.mrf.mxu0
      %v2954 = vadd.f32 0.0, %v2953
      %2955 = vmatmul.bf16.gmra.mxu0 %v2791
      %v2956 = vpop.f32.mrf.mxu0
      %v2957 = vadd.f32 0.0, %v2956
      %v2958 = vpop.f32.mrf.mxu0
      %v2959 = vadd.f32 0.0, %v2958
      %2960 = vmatmul.bf16.gmra.mxu0 %v2794
      %v2961 = vpop.f32.mrf.mxu0
      %v2962 = vadd.f32 0.0, %v2961
      %v2963 = vpop.f32.mrf.mxu0
      %v2964 = vadd.f32 0.0, %v2963
      %2965 = vmatmul.bf16.gmra.mxu0 %v2797
      %v2966 = vpop.f32.mrf.mxu0
      %v2967 = vadd.f32 0.0, %v2966
      %v2968 = vpop.f32.mrf.mxu0
      %v2969 = vadd.f32 0.0, %v2968
      %2970 = vdwg.mxu0
      %v2971 = vadd.f32 %v2412, %v2812
      %v2972 = vadd.f32 %v2413, %v2814
      %v2973 = vadd.f32 %v2414, %v2817
      %v2974 = vadd.f32 %v2415, %v2819
      %v2975 = vadd.f32 %v2416, %v2822
      %v2976 = vadd.f32 %v2417, %v2824
      %v2977 = vadd.f32 %v2418, %v2827
      %v2978 = vadd.f32 %v2419, %v2829
      %v2979 = vadd.f32 %v2420, %v2832
      %v2980 = vadd.f32 %v2421, %v2834
      %v2981 = vadd.f32 %v2422, %v2837
      %v2982 = vadd.f32 %v2423, %v2839
      %v2983 = vadd.f32 %v2424, %v2842
      %v2984 = vadd.f32 %v2425, %v2844
      %v2985 = vadd.f32 %v2426, %v2847
      %v2986 = vadd.f32 %v2427, %v2849
      %v2987 = vadd.f32 %v2428, %v2852
      %v2988 = vadd.f32 %v2429, %v2854
      %v2989 = vadd.f32 %v2430, %v2857
      %v2990 = vadd.f32 %v2431, %v2859
      %v2991 = vadd.f32 %v2432, %v2862
      %v2992 = vadd.f32 %v2433, %v2864
      %v2993 = vadd.f32 %v2434, %v2867
      %v2994 = vadd.f32 %v2435, %v2869
      %v2995 = vadd.f32 %v2436, %v2872
      %v2996 = vadd.f32 %v2437, %v2874
      %v2997 = vadd.f32 %v2438, %v2877
      %v2998 = vadd.f32 %v2439, %v2879
      %v2999 = vadd.f32 %v2440, %v2882
      %v3000 = vadd.f32 %v2441, %v2884
      %v3001 = vadd.f32 %v2442, %v2887
      %v3002 = vadd.f32 %v2443, %v2889
      %v3003 = vadd.f32 %v2444, %v2892
      %v3004 = vadd.f32 %v2445, %v2894
      %v3005 = vadd.f32 %v2446, %v2897
      %v3006 = vadd.f32 %v2447, %v2899
      %v3007 = vadd.f32 %v2448, %v2902
      %v3008 = vadd.f32 %v2449, %v2904
      %v3009 = vadd.f32 %v2450, %v2907
      %v3010 = vadd.f32 %v2451, %v2909
      %v3011 = vadd.f32 %v2452, %v2912
      %v3012 = vadd.f32 %v2453, %v2914
      %v3013 = vadd.f32 %v2454, %v2917
      %v3014 = vadd.f32 %v2455, %v2919
      %v3015 = vadd.f32 %v2456, %v2922
      %v3016 = vadd.f32 %v2457, %v2924
      %v3017 = vadd.f32 %v2458, %v2927
      %v3018 = vadd.f32 %v2459, %v2929
      %v3019 = vadd.f32 %v2460, %v2932
      %v3020 = vadd.f32 %v2461, %v2934
      %v3021 = vadd.f32 %v2462, %v2937
      %v3022 = vadd.f32 %v2463, %v2939
      %v3023 = vadd.f32 %v2464, %v2942
      %v3024 = vadd.f32 %v2465, %v2944
      %v3025 = vadd.f32 %v2466, %v2947
      %v3026 = vadd.f32 %v2467, %v2949
      %v3027 = vadd.f32 %v2468, %v2952
      %v3028 = vadd.f32 %v2469, %v2954
      %v3029 = vadd.f32 %v2470, %v2957
      %v3030 = vadd.f32 %v2471, %v2959
      %v3031 = vadd.f32 %v2472, %v2962
      %v3032 = vadd.f32 %v2473, %v2964
      %v3033 = vadd.f32 %v2474, %v2967
      %v3034 = vadd.f32 %v2475, %v2969
      %v3035 = vld [vmem:[%s2476] sm:$0xf]
      %v3036 = vld [vmem:[%s2476 + $0x4] sm:$0xf]
      %v3037 = vld [vmem:[%s2476 + $0x8] sm:$0xf]
      %v3038 = vld [vmem:[%s2476 + $0xc] sm:$0xf]
      %v3039 = vld [vmem:[%s2476 + $0x10] sm:$0x1]
      %v3040 = vld [vmem:[%s2476 + $0x14] sm:$0xf]
      %v3041 = vld [vmem:[%s2476 + $0x18] sm:$0xf]
      %v3042 = vld [vmem:[%s2476 + $0x1c] sm:$0xf]
      %v3043 = vld [vmem:[%s2476 + $0x20] sm:$0xf]
      %v3044 = vld [vmem:[%s2476 + $0x24] sm:$0x1]
      %v3045 = vld [vmem:[%s2476 + $0x28] sm:$0xf]
      %v3046 = vld [vmem:[%s2476 + $0x2c] sm:$0xf]
      %v3047 = vld [vmem:[%s2476 + $0x30] sm:$0xf]
      %v3048 = vld [vmem:[%s2476 + $0x34] sm:$0xf]
      %v3049 = vld [vmem:[%s2476 + $0x38] sm:$0x1]
      %v3050 = vld [vmem:[%s2476 + $0x3c] sm:$0xf]
      %v3051 = vld [vmem:[%s2476 + $0x40] sm:$0xf]
      %v3052 = vld [vmem:[%s2476 + $0x44] sm:$0xf]
      %v3053 = vld [vmem:[%s2476 + $0x48] sm:$0xf]
      %v3054 = vld [vmem:[%s2476 + $0x4c] sm:$0x1]
      %v3055 = vld [vmem:[%s2476 + $0x50] sm:$0xf]
      %v3056 = vld [vmem:[%s2476 + $0x54] sm:$0xf]
      %v3057 = vld [vmem:[%s2476 + $0x58] sm:$0xf]
      %v3058 = vld [vmem:[%s2476 + $0x5c] sm:$0xf]
      %v3059 = vld [vmem:[%s2476 + $0x60] sm:$0x1]
      %v3060 = vld [vmem:[%s2476 + $0x64] sm:$0xf]
      %v3061 = vld [vmem:[%s2476 + $0x68] sm:$0xf]
      %v3062 = vld [vmem:[%s2476 + $0x6c] sm:$0xf]
      %v3063 = vld [vmem:[%s2476 + $0x70] sm:$0xf]
      %v3064 = vld [vmem:[%s2476 + $0x74] sm:$0x1]
      %v3065 = vld [vmem:[%s2476 + $0x78] sm:$0xf]
      %v3066 = vld [vmem:[%s2476 + $0x7c] sm:$0xf]
      %v3067 = vld [vmem:[%s2476 + $0x80] sm:$0xf]
      %v3068 = vld [vmem:[%s2476 + $0x84] sm:$0xf]
      %v3069 = vld [vmem:[%s2476 + $0x88] sm:$0x1]
      %v3070 = vld [vmem:[%s2476 + $0x8c] sm:$0xf]
      %v3071 = vld [vmem:[%s2476 + $0x90] sm:$0xf]
      %v3072 = vld [vmem:[%s2476 + $0x94] sm:$0xf]
      %v3073 = vld [vmem:[%s2476 + $0x98] sm:$0xf]
      %v3074 = vld [vmem:[%s2476 + $0x9c] sm:$0x1]
      %v3075 = vld [vmem:[%s2476 + $0xa0] sm:$0xf]
      %v3076 = vld [vmem:[%s2476 + $0xa4] sm:$0xf]
      %v3077 = vld [vmem:[%s2476 + $0xa8] sm:$0xf]
      %v3078 = vld [vmem:[%s2476 + $0xac] sm:$0xf]
      %v3079 = vld [vmem:[%s2476 + $0xb0] sm:$0x1]
      %v3080 = vld [vmem:[%s2476 + $0xb4] sm:$0xf]
      %v3081 = vld [vmem:[%s2476 + $0xb8] sm:$0xf]
      %v3082 = vld [vmem:[%s2476 + $0xbc] sm:$0xf]
      %v3083 = vld [vmem:[%s2476 + $0xc0] sm:$0xf]
      %v3084 = vld [vmem:[%s2476 + $0xc4] sm:$0x1]
      %v3085 = vld [vmem:[%s2476 + $0xc8] sm:$0xf]
      %v3086 = vld [vmem:[%s2476 + $0xcc] sm:$0xf]
      %v3087 = vld [vmem:[%s2476 + $0xd0] sm:$0xf]
      %v3088 = vld [vmem:[%s2476 + $0xd4] sm:$0xf]
      %v3089 = vld [vmem:[%s2476 + $0xd8] sm:$0x1]
      %v3090 = vld [vmem:[%s2476 + $0xdc] sm:$0xf]
      %v3091 = vld [vmem:[%s2476 + $0xe0] sm:$0xf]
      %v3092 = vld [vmem:[%s2476 + $0xe4] sm:$0xf]
      %v3093 = vld [vmem:[%s2476 + $0xe8] sm:$0xf]
      %v3094 = vld [vmem:[%s2476 + $0xec] sm:$0x1]
      %v3095 = vld [vmem:[%s2476 + $0xf0] sm:$0xf]
      %v3096 = vld [vmem:[%s2476 + $0xf4] sm:$0xf]
      %v3097 = vld [vmem:[%s2476 + $0xf8] sm:$0xf]
      %v3098 = vld [vmem:[%s2476 + $0xfc] sm:$0xf]
      %v3099 = vld [vmem:[%s2476 + $0x100] sm:$0x1]
      %v3100 = vld [vmem:[%s2476 + $0x104] sm:$0xf]
      %v3101 = vld [vmem:[%s2476 + $0x108] sm:$0xf]
      %v3102 = vld [vmem:[%s2476 + $0x10c] sm:$0xf]
      %v3103 = vld [vmem:[%s2476 + $0x110] sm:$0xf]
      %v3104 = vld [vmem:[%s2476 + $0x114] sm:$0x1]
      %v3105 = vld [vmem:[%s2476 + $0x118] sm:$0xf]
      %v3106 = vld [vmem:[%s2476 + $0x11c] sm:$0xf]
      %v3107 = vld [vmem:[%s2476 + $0x120] sm:$0xf]
      %v3108 = vld [vmem:[%s2476 + $0x124] sm:$0xf]
      %v3109 = vld [vmem:[%s2476 + $0x128] sm:$0x1]
      %v3110 = vld [vmem:[%s2476 + $0x12c] sm:$0xf]
      %v3111 = vld [vmem:[%s2476 + $0x130] sm:$0xf]
      %v3112 = vld [vmem:[%s2476 + $0x134] sm:$0xf]
      %v3113 = vld [vmem:[%s2476 + $0x138] sm:$0xf]
      %v3114 = vld [vmem:[%s2476 + $0x13c] sm:$0x1]
      %v3116 = vshrl.u32 %v3035, 16
      %v3118 = vrot.slane %v3116, 4
      %v3119 = vshll.u32 %v3035, 16
      %v3121 = vrot.slane %v3119, 5
      %v3122 = vor.u32 %v3118, %v3121
      %v3123 = vrot.slane %v3122, 4
      %v3125 = vshll.u32 %v3036, 16
      %v3127 = vrot.slane %v3125, 5
      %v3128 = vsel %vm283, %v3123, %v3127
      %v3129 = vshrl.u32 %v3036, 16
      %v3131 = vrot.slane %v3129, 4
      %v3132 = vor.u32 %v3131, %v3127
      %v3133 = vrot.slane %v3132, 4
      %v3135 = vshll.u32 %v3037, 16
      %v3137 = vrot.slane %v3135, 5
      %v3138 = vsel %vm283, %v3133, %v3137
      %v3139 = vshrl.u32 %v3037, 16
      %v3141 = vrot.slane %v3139, 4
      %v3142 = vor.u32 %v3141, %v3137
      %v3143 = vrot.slane %v3142, 4
      %v3145 = vshll.u32 %v3038, 16
      %v3147 = vrot.slane %v3145, 5
      %v3148 = vsel %vm283, %v3143, %v3147
      %v3149 = vshrl.u32 %v3038, 16
      %v3151 = vrot.slane %v3149, 4
      %v3152 = vor.u32 %v3151, %v3147
      %v3153 = vrot.slane %v3152, 4
      %v3155 = vshll.u32 %v3039, 16
      %v3157 = vrot.slane %v3155, 5
      %v3158 = vsel %vm283, %v3153, %v3157
      %v3160 = vshrl.u32 %v3040, 16
      %v3162 = vrot.slane %v3160, 4
      %v3163 = vshll.u32 %v3040, 16
      %v3165 = vrot.slane %v3163, 5
      %v3166 = vor.u32 %v3162, %v3165
      %v3167 = vrot.slane %v3166, 4
      %v3169 = vshll.u32 %v3041, 16
      %v3171 = vrot.slane %v3169, 5
      %v3172 = vsel %vm283, %v3167, %v3171
      %v3173 = vshrl.u32 %v3041, 16
      %v3175 = vrot.slane %v3173, 4
      %v3176 = vor.u32 %v3175, %v3171
      %v3177 = vrot.slane %v3176, 4
      %v3179 = vshll.u32 %v3042, 16
      %v3181 = vrot.slane %v3179, 5
      %v3182 = vsel %vm283, %v3177, %v3181
      %v3183 = vshrl.u32 %v3042, 16
      %v3185 = vrot.slane %v3183, 4
      %v3186 = vor.u32 %v3185, %v3181
      %v3187 = vrot.slane %v3186, 4
      %v3189 = vshll.u32 %v3043, 16
      %v3191 = vrot.slane %v3189, 5
      %v3192 = vsel %vm283, %v3187, %v3191
      %v3193 = vshrl.u32 %v3043, 16
      %v3195 = vrot.slane %v3193, 4
      %v3196 = vor.u32 %v3195, %v3191
      %v3197 = vrot.slane %v3196, 4
      %v3199 = vshll.u32 %v3044, 16
      %v3201 = vrot.slane %v3199, 5
      %v3202 = vsel %vm283, %v3197, %v3201
      %v3204 = vshrl.u32 %v3045, 16
      %v3206 = vrot.slane %v3204, 4
      %v3207 = vshll.u32 %v3045, 16
      %v3209 = vrot.slane %v3207, 5
      %v3210 = vor.u32 %v3206, %v3209
      %v3211 = vrot.slane %v3210, 4
      %v3213 = vshll.u32 %v3046, 16
      %v3215 = vrot.slane %v3213, 5
      %v3216 = vsel %vm283, %v3211, %v3215
      %v3217 = vshrl.u32 %v3046, 16
      %v3219 = vrot.slane %v3217, 4
      %v3220 = vor.u32 %v3219, %v3215
      %v3221 = vrot.slane %v3220, 4
      %v3223 = vshll.u32 %v3047, 16
      %v3225 = vrot.slane %v3223, 5
      %v3226 = vsel %vm283, %v3221, %v3225
      %v3227 = vshrl.u32 %v3047, 16
      %v3229 = vrot.slane %v3227, 4
      %v3230 = vor.u32 %v3229, %v3225
      %v3231 = vrot.slane %v3230, 4
      %v3233 = vshll.u32 %v3048, 16
      %v3235 = vrot.slane %v3233, 5
      %v3236 = vsel %vm283, %v3231, %v3235
      %v3237 = vshrl.u32 %v3048, 16
      %v3239 = vrot.slane %v3237, 4
      %v3240 = vor.u32 %v3239, %v3235
      %v3241 = vrot.slane %v3240, 4
      %v3243 = vshll.u32 %v3049, 16
      %v3245 = vrot.slane %v3243, 5
      %v3246 = vsel %vm283, %v3241, %v3245
      %v3248 = vshrl.u32 %v3050, 16
      %v3250 = vrot.slane %v3248, 4
      %v3251 = vshll.u32 %v3050, 16
      %v3253 = vrot.slane %v3251, 5
      %v3254 = vor.u32 %v3250, %v3253
      %v3255 = vrot.slane %v3254, 4
      %v3257 = vshll.u32 %v3051, 16
      %v3259 = vrot.slane %v3257, 5
      %v3260 = vsel %vm283, %v3255, %v3259
      %v3261 = vshrl.u32 %v3051, 16
      %v3263 = vrot.slane %v3261, 4
      %v3264 = vor.u32 %v3263, %v3259
      %v3265 = vrot.slane %v3264, 4
      %v3267 = vshll.u32 %v3052, 16
      %v3269 = vrot.slane %v3267, 5
      %v3270 = vsel %vm283, %v3265, %v3269
      %v3271 = vshrl.u32 %v3052, 16
      %v3273 = vrot.slane %v3271, 4
      %v3274 = vor.u32 %v3273, %v3269
      %v3275 = vrot.slane %v3274, 4
      %v3277 = vshll.u32 %v3053, 16
      %v3279 = vrot.slane %v3277, 5
      %v3280 = vsel %vm283, %v3275, %v3279
      %v3281 = vshrl.u32 %v3053, 16
      %v3283 = vrot.slane %v3281, 4
      %v3284 = vor.u32 %v3283, %v3279
      %v3285 = vrot.slane %v3284, 4
      %v3287 = vshll.u32 %v3054, 16
      %v3289 = vrot.slane %v3287, 5
      %v3290 = vsel %vm283, %v3285, %v3289
      %v3292 = vshrl.u32 %v3055, 16
      %v3294 = vrot.slane %v3292, 4
      %v3295 = vshll.u32 %v3055, 16
      %v3297 = vrot.slane %v3295, 5
      %v3298 = vor.u32 %v3294, %v3297
      %v3299 = vrot.slane %v3298, 4
      %v3301 = vshll.u32 %v3056, 16
      %v3303 = vrot.slane %v3301, 5
      %v3304 = vsel %vm283, %v3299, %v3303
      %v3305 = vshrl.u32 %v3056, 16
      %v3307 = vrot.slane %v3305, 4
      %v3308 = vor.u32 %v3307, %v3303
      %v3309 = vrot.slane %v3308, 4
      %v3311 = vshll.u32 %v3057, 16
      %v3313 = vrot.slane %v3311, 5
      %v3314 = vsel %vm283, %v3309, %v3313
      %v3315 = vshrl.u32 %v3057, 16
      %v3317 = vrot.slane %v3315, 4
      %v3318 = vor.u32 %v3317, %v3313
      %v3319 = vrot.slane %v3318, 4
      %v3321 = vshll.u32 %v3058, 16
      %v3323 = vrot.slane %v3321, 5
      %v3324 = vsel %vm283, %v3319, %v3323
      %v3325 = vshrl.u32 %v3058, 16
      %v3327 = vrot.slane %v3325, 4
      %v3328 = vor.u32 %v3327, %v3323
      %v3329 = vrot.slane %v3328, 4
      %v3331 = vshll.u32 %v3059, 16
      %v3333 = vrot.slane %v3331, 5
      %v3334 = vsel %vm283, %v3329, %v3333
      %v3336 = vshrl.u32 %v3060, 16
      %v3338 = vrot.slane %v3336, 4
      %v3339 = vshll.u32 %v3060, 16
      %v3341 = vrot.slane %v3339, 5
      %v3342 = vor.u32 %v3338, %v3341
      %v3343 = vrot.slane %v3342, 4
      %v3345 = vshll.u32 %v3061, 16
      %v3347 = vrot.slane %v3345, 5
      %v3348 = vsel %vm283, %v3343, %v3347
      %v3349 = vshrl.u32 %v3061, 16
      %v3351 = vrot.slane %v3349, 4
      %v3352 = vor.u32 %v3351, %v3347
      %v3353 = vrot.slane %v3352, 4
      %v3355 = vshll.u32 %v3062, 16
      %v3357 = vrot.slane %v3355, 5
      %v3358 = vsel %vm283, %v3353, %v3357
      %v3359 = vshrl.u32 %v3062, 16
      %v3361 = vrot.slane %v3359, 4
      %v3362 = vor.u32 %v3361, %v3357
      %v3363 = vrot.slane %v3362, 4
      %v3365 = vshll.u32 %v3063, 16
      %v3367 = vrot.slane %v3365, 5
      %v3368 = vsel %vm283, %v3363, %v3367
      %v3369 = vshrl.u32 %v3063, 16
      %v3371 = vrot.slane %v3369, 4
      %v3372 = vor.u32 %v3371, %v3367
      %v3373 = vrot.slane %v3372, 4
      %v3375 = vshll.u32 %v3064, 16
      %v3377 = vrot.slane %v3375, 5
      %v3378 = vsel %vm283, %v3373, %v3377
      %v3380 = vshrl.u32 %v3065, 16
      %v3382 = vrot.slane %v3380, 4
      %v3383 = vshll.u32 %v3065, 16
      %v3385 = vrot.slane %v3383, 5
      %v3386 = vor.u32 %v3382, %v3385
      %v3387 = vrot.slane %v3386, 4
      %v3389 = vshll.u32 %v3066, 16
      %v3391 = vrot.slane %v3389, 5
      %v3392 = vsel %vm283, %v3387, %v3391
      %v3393 = vshrl.u32 %v3066, 16
      %v3395 = vrot.slane %v3393, 4
      %v3396 = vor.u32 %v3395, %v3391
      %v3397 = vrot.slane %v3396, 4
      %v3399 = vshll.u32 %v3067, 16
      %v3401 = vrot.slane %v3399, 5
      %v3402 = vsel %vm283, %v3397, %v3401
      %v3403 = vshrl.u32 %v3067, 16
      %v3405 = vrot.slane %v3403, 4
      %v3406 = vor.u32 %v3405, %v3401
      %v3407 = vrot.slane %v3406, 4
      %v3409 = vshll.u32 %v3068, 16
      %v3411 = vrot.slane %v3409, 5
      %v3412 = vsel %vm283, %v3407, %v3411
      %v3413 = vshrl.u32 %v3068, 16
      %v3415 = vrot.slane %v3413, 4
      %v3416 = vor.u32 %v3415, %v3411
      %v3417 = vrot.slane %v3416, 4
      %v3419 = vshll.u32 %v3069, 16
      %v3421 = vrot.slane %v3419, 5
      %v3422 = vsel %vm283, %v3417, %v3421
      %v3424 = vshrl.u32 %v3070, 16
      %v3426 = vrot.slane %v3424, 4
      %v3427 = vshll.u32 %v3070, 16
      %v3429 = vrot.slane %v3427, 5
      %v3430 = vor.u32 %v3426, %v3429
      %v3431 = vrot.slane %v3430, 4
      %v3433 = vshll.u32 %v3071, 16
      %v3435 = vrot.slane %v3433, 5
      %v3436 = vsel %vm283, %v3431, %v3435
      %v3437 = vshrl.u32 %v3071, 16
      %v3439 = vrot.slane %v3437, 4
      %v3440 = vor.u32 %v3439, %v3435
      %v3441 = vrot.slane %v3440, 4
      %v3443 = vshll.u32 %v3072, 16
      %v3445 = vrot.slane %v3443, 5
      %v3446 = vsel %vm283, %v3441, %v3445
      %v3447 = vshrl.u32 %v3072, 16
      %v3449 = vrot.slane %v3447, 4
      %v3450 = vor.u32 %v3449, %v3445
      %v3451 = vrot.slane %v3450, 4
      %v3453 = vshll.u32 %v3073, 16
      %v3455 = vrot.slane %v3453, 5
      %v3456 = vsel %vm283, %v3451, %v3455
      %v3457 = vshrl.u32 %v3073, 16
      %v3459 = vrot.slane %v3457, 4
      %v3460 = vor.u32 %v3459, %v3455
      %v3461 = vrot.slane %v3460, 4
      %v3463 = vshll.u32 %v3074, 16
      %v3465 = vrot.slane %v3463, 5
      %v3466 = vsel %vm283, %v3461, %v3465
      %v3468 = vshrl.u32 %v3075, 16
      %v3470 = vrot.slane %v3468, 4
      %v3471 = vshll.u32 %v3075, 16
      %v3473 = vrot.slane %v3471, 5
      %v3474 = vor.u32 %v3470, %v3473
      %v3475 = vrot.slane %v3474, 4
      %v3477 = vshll.u32 %v3076, 16
      %v3479 = vrot.slane %v3477, 5
      %v3480 = vsel %vm283, %v3475, %v3479
      %v3481 = vshrl.u32 %v3076, 16
      %v3483 = vrot.slane %v3481, 4
      %v3484 = vor.u32 %v3483, %v3479
      %v3485 = vrot.slane %v3484, 4
      %v3487 = vshll.u32 %v3077, 16
      %v3489 = vrot.slane %v3487, 5
      %v3490 = vsel %vm283, %v3485, %v3489
      %v3491 = vshrl.u32 %v3077, 16
      %v3493 = vrot.slane %v3491, 4
      %v3494 = vor.u32 %v3493, %v3489
      %v3495 = vrot.slane %v3494, 4
      %v3497 = vshll.u32 %v3078, 16
      %v3499 = vrot.slane %v3497, 5
      %v3500 = vsel %vm283, %v3495, %v3499
      %v3501 = vshrl.u32 %v3078, 16
      %v3503 = vrot.slane %v3501, 4
      %v3504 = vor.u32 %v3503, %v3499
      %v3505 = vrot.slane %v3504, 4
      %v3507 = vshll.u32 %v3079, 16
      %v3509 = vrot.slane %v3507, 5
      %v3510 = vsel %vm283, %v3505, %v3509
      %v3512 = vshrl.u32 %v3080, 16
      %v3514 = vrot.slane %v3512, 4
      %v3515 = vshll.u32 %v3080, 16
      %v3517 = vrot.slane %v3515, 5
      %v3518 = vor.u32 %v3514, %v3517
      %v3519 = vrot.slane %v3518, 4
      %v3521 = vshll.u32 %v3081, 16
      %v3523 = vrot.slane %v3521, 5
      %v3524 = vsel %vm283, %v3519, %v3523
      %v3525 = vshrl.u32 %v3081, 16
      %v3527 = vrot.slane %v3525, 4
      %v3528 = vor.u32 %v3527, %v3523
      %v3529 = vrot.slane %v3528, 4
      %v3531 = vshll.u32 %v3082, 16
      %v3533 = vrot.slane %v3531, 5
      %v3534 = vsel %vm283, %v3529, %v3533
      %v3535 = vshrl.u32 %v3082, 16
      %v3537 = vrot.slane %v3535, 4
      %v3538 = vor.u32 %v3537, %v3533
      %v3539 = vrot.slane %v3538, 4
      %v3541 = vshll.u32 %v3083, 16
      %v3543 = vrot.slane %v3541, 5
      %v3544 = vsel %vm283, %v3539, %v3543
      %v3545 = vshrl.u32 %v3083, 16
      %v3547 = vrot.slane %v3545, 4
      %v3548 = vor.u32 %v3547, %v3543
      %v3549 = vrot.slane %v3548, 4
      %v3551 = vshll.u32 %v3084, 16
      %v3553 = vrot.slane %v3551, 5
      %v3554 = vsel %vm283, %v3549, %v3553
      %v3556 = vshrl.u32 %v3085, 16
      %v3558 = vrot.slane %v3556, 4
      %v3559 = vshll.u32 %v3085, 16
      %v3561 = vrot.slane %v3559, 5
      %v3562 = vor.u32 %v3558, %v3561
      %v3563 = vrot.slane %v3562, 4
      %v3565 = vshll.u32 %v3086, 16
      %v3567 = vrot.slane %v3565, 5
      %v3568 = vsel %vm283, %v3563, %v3567
      %v3569 = vshrl.u32 %v3086, 16
      %v3571 = vrot.slane %v3569, 4
      %v3572 = vor.u32 %v3571, %v3567
      %v3573 = vrot.slane %v3572, 4
      %v3575 = vshll.u32 %v3087, 16
      %v3577 = vrot.slane %v3575, 5
      %v3578 = vsel %vm283, %v3573, %v3577
      %v3579 = vshrl.u32 %v3087, 16
      %v3581 = vrot.slane %v3579, 4
      %v3582 = vor.u32 %v3581, %v3577
      %v3583 = vrot.slane %v3582, 4
      %v3585 = vshll.u32 %v3088, 16
      %v3587 = vrot.slane %v3585, 5
      %v3588 = vsel %vm283, %v3583, %v3587
      %v3589 = vshrl.u32 %v3088, 16
      %v3591 = vrot.slane %v3589, 4
      %v3592 = vor.u32 %v3591, %v3587
      %v3593 = vrot.slane %v3592, 4
      %v3595 = vshll.u32 %v3089, 16
      %v3597 = vrot.slane %v3595, 5
      %v3598 = vsel %vm283, %v3593, %v3597
      %v3600 = vshrl.u32 %v3090, 16
      %v3602 = vrot.slane %v3600, 4
      %v3603 = vshll.u32 %v3090, 16
      %v3605 = vrot.slane %v3603, 5
      %v3606 = vor.u32 %v3602, %v3605
      %v3607 = vrot.slane %v3606, 4
      %v3609 = vshll.u32 %v3091, 16
      %v3611 = vrot.slane %v3609, 5
      %v3612 = vsel %vm283, %v3607, %v3611
      %v3613 = vshrl.u32 %v3091, 16
      %v3615 = vrot.slane %v3613, 4
      %v3616 = vor.u32 %v3615, %v3611
      %v3617 = vrot.slane %v3616, 4
      %v3619 = vshll.u32 %v3092, 16
      %v3621 = vrot.slane %v3619, 5
      %v3622 = vsel %vm283, %v3617, %v3621
      %v3623 = vshrl.u32 %v3092, 16
      %v3625 = vrot.slane %v3623, 4
      %v3626 = vor.u32 %v3625, %v3621
      %v3627 = vrot.slane %v3626, 4
      %v3629 = vshll.u32 %v3093, 16
      %v3631 = vrot.slane %v3629, 5
      %v3632 = vsel %vm283, %v3627, %v3631
      %v3633 = vshrl.u32 %v3093, 16
      %v3635 = vrot.slane %v3633, 4
      %v3636 = vor.u32 %v3635, %v3631
      %v3637 = vrot.slane %v3636, 4
      %v3639 = vshll.u32 %v3094, 16
      %v3641 = vrot.slane %v3639, 5
      %v3642 = vsel %vm283, %v3637, %v3641
      %v3644 = vshrl.u32 %v3095, 16
      %v3646 = vrot.slane %v3644, 4
      %v3647 = vshll.u32 %v3095, 16
      %v3649 = vrot.slane %v3647, 5
      %v3650 = vor.u32 %v3646, %v3649
      %v3651 = vrot.slane %v3650, 4
      %v3653 = vshll.u32 %v3096, 16
      %v3655 = vrot.slane %v3653, 5
      %v3656 = vsel %vm283, %v3651, %v3655
      %v3657 = vshrl.u32 %v3096, 16
      %v3659 = vrot.slane %v3657, 4
      %v3660 = vor.u32 %v3659, %v3655
      %v3661 = vrot.slane %v3660, 4
      %v3663 = vshll.u32 %v3097, 16
      %v3665 = vrot.slane %v3663, 5
      %v3666 = vsel %vm283, %v3661, %v3665
      %v3667 = vshrl.u32 %v3097, 16
      %v3669 = vrot.slane %v3667, 4
      %v3670 = vor.u32 %v3669, %v3665
      %v3671 = vrot.slane %v3670, 4
      %v3673 = vshll.u32 %v3098, 16
      %v3675 = vrot.slane %v3673, 5
      %v3676 = vsel %vm283, %v3671, %v3675
      %v3677 = vshrl.u32 %v3098, 16
      %v3679 = vrot.slane %v3677, 4
      %v3680 = vor.u32 %v3679, %v3675
      %v3681 = vrot.slane %v3680, 4
      %v3683 = vshll.u32 %v3099, 16
      %v3685 = vrot.slane %v3683, 5
      %v3686 = vsel %vm283, %v3681, %v3685
      %v3688 = vshrl.u32 %v3100, 16
      %v3690 = vrot.slane %v3688, 4
      %v3691 = vshll.u32 %v3100, 16
      %v3693 = vrot.slane %v3691, 5
      %v3694 = vor.u32 %v3690, %v3693
      %v3695 = vrot.slane %v3694, 4
      %v3697 = vshll.u32 %v3101, 16
      %v3699 = vrot.slane %v3697, 5
      %v3700 = vsel %vm283, %v3695, %v3699
      %v3701 = vshrl.u32 %v3101, 16
      %v3703 = vrot.slane %v3701, 4
      %v3704 = vor.u32 %v3703, %v3699
      %v3705 = vrot.slane %v3704, 4
      %v3707 = vshll.u32 %v3102, 16
      %v3709 = vrot.slane %v3707, 5
      %v3710 = vsel %vm283, %v3705, %v3709
      %v3711 = vshrl.u32 %v3102, 16
      %v3713 = vrot.slane %v3711, 4
      %v3714 = vor.u32 %v3713, %v3709
      %v3715 = vrot.slane %v3714, 4
      %v3717 = vshll.u32 %v3103, 16
      %v3719 = vrot.slane %v3717, 5
      %v3720 = vsel %vm283, %v3715, %v3719
      %v3721 = vshrl.u32 %v3103, 16
      %v3723 = vrot.slane %v3721, 4
      %v3724 = vor.u32 %v3723, %v3719
      %v3725 = vrot.slane %v3724, 4
      %v3727 = vshll.u32 %v3104, 16
      %v3729 = vrot.slane %v3727, 5
      %v3730 = vsel %vm283, %v3725, %v3729
      %v3732 = vshrl.u32 %v3105, 16
      %v3734 = vrot.slane %v3732, 4
      %v3735 = vshll.u32 %v3105, 16
      %v3737 = vrot.slane %v3735, 5
      %v3738 = vor.u32 %v3734, %v3737
      %v3739 = vrot.slane %v3738, 4
      %v3741 = vshll.u32 %v3106, 16
      %v3743 = vrot.slane %v3741, 5
      %v3744 = vsel %vm283, %v3739, %v3743
      %v3745 = vshrl.u32 %v3106, 16
      %v3747 = vrot.slane %v3745, 4
      %v3748 = vor.u32 %v3747, %v3743
      %v3749 = vrot.slane %v3748, 4
      %v3751 = vshll.u32 %v3107, 16
      %v3753 = vrot.slane %v3751, 5
      %v3754 = vsel %vm283, %v3749, %v3753
      %v3755 = vshrl.u32 %v3107, 16
      %v3757 = vrot.slane %v3755, 4
      %v3758 = vor.u32 %v3757, %v3753
      %v3759 = vrot.slane %v3758, 4
      %v3761 = vshll.u32 %v3108, 16
      %v3763 = vrot.slane %v3761, 5
      %v3764 = vsel %vm283, %v3759, %v3763
      %v3765 = vshrl.u32 %v3108, 16
      %v3767 = vrot.slane %v3765, 4
      %v3768 = vor.u32 %v3767, %v3763
      %v3769 = vrot.slane %v3768, 4
      %v3771 = vshll.u32 %v3109, 16
      %v3773 = vrot.slane %v3771, 5
      %v3774 = vsel %vm283, %v3769, %v3773
      %v3776 = vshrl.u32 %v3110, 16
      %v3778 = vrot.slane %v3776, 4
      %v3779 = vshll.u32 %v3110, 16
      %v3781 = vrot.slane %v3779, 5
      %v3782 = vor.u32 %v3778, %v3781
      %v3783 = vrot.slane %v3782, 4
      %v3785 = vshll.u32 %v3111, 16
      %v3787 = vrot.slane %v3785, 5
      %v3788 = vsel %vm283, %v3783, %v3787
      %v3789 = vshrl.u32 %v3111, 16
      %v3791 = vrot.slane %v3789, 4
      %v3792 = vor.u32 %v3791, %v3787
      %v3793 = vrot.slane %v3792, 4
      %v3795 = vshll.u32 %v3112, 16
      %v3797 = vrot.slane %v3795, 5
      %v3798 = vsel %vm283, %v3793, %v3797
      %v3799 = vshrl.u32 %v3112, 16
      %v3801 = vrot.slane %v3799, 4
      %v3802 = vor.u32 %v3801, %v3797
      %v3803 = vrot.slane %v3802, 4
      %v3805 = vshll.u32 %v3113, 16
      %v3807 = vrot.slane %v3805, 5
      %v3808 = vsel %vm283, %v3803, %v3807
      %v3809 = vshrl.u32 %v3113, 16
      %v3811 = vrot.slane %v3809, 4
      %v3812 = vor.u32 %v3811, %v3807
      %v3813 = vrot.slane %v3812, 4
      %v3815 = vshll.u32 %v3114, 16
      %v3817 = vrot.slane %v3815, 5
      %v3818 = vsel %vm283, %v3813, %v3817
      %s3819 = scalar_lea.vmem %s1, 8
      %v3820 = vld [vmem:[%s3819] sm:$0x3]
      %v3821 = vunpack.c.l.b16 %v3128
      %v3822 = vunpack.c.l.b16 %v3138
      %v3823 = vunpack.c.l.b16 %v3148
      %v3824 = vunpack.c.l.b16 %v3158
      %v3825 = vunpack.c.l.b16 %v3172
      %v3826 = vunpack.c.l.b16 %v3182
      %v3827 = vunpack.c.l.b16 %v3192
      %v3828 = vunpack.c.l.b16 %v3202
      %v3829 = vunpack.c.l.b16 %v3216
      %v3830 = vunpack.c.l.b16 %v3226
      %v3831 = vunpack.c.l.b16 %v3236
      %v3832 = vunpack.c.l.b16 %v3246
      %v3833 = vunpack.c.l.b16 %v3260
      %v3834 = vunpack.c.l.b16 %v3270
      %v3835 = vunpack.c.l.b16 %v3280
      %v3836 = vunpack.c.l.b16 %v3290
      %v3837 = vunpack.c.l.b16 %v3304
      %v3838 = vunpack.c.l.b16 %v3314
      %v3839 = vunpack.c.l.b16 %v3324
      %v3840 = vunpack.c.l.b16 %v3334
      %v3841 = vunpack.c.l.b16 %v3348
      %v3842 = vunpack.c.l.b16 %v3358
      %v3843 = vunpack.c.l.b16 %v3368
      %v3844 = vunpack.c.l.b16 %v3378
      %v3845 = vunpack.c.l.b16 %v3392
      %v3846 = vunpack.c.l.b16 %v3402
      %v3847 = vunpack.c.l.b16 %v3412
      %v3848 = vunpack.c.l.b16 %v3422
      %v3849 = vunpack.c.l.b16 %v3436
      %v3850 = vunpack.c.l.b16 %v3446
      %v3851 = vunpack.c.l.b16 %v3456
      %v3852 = vunpack.c.l.b16 %v3466
      %v3853 = vunpack.c.l.b16 %v3480
      %v3854 = vunpack.c.l.b16 %v3490
      %v3855 = vunpack.c.l.b16 %v3500
      %v3856 = vunpack.c.l.b16 %v3510
      %v3857 = vunpack.c.l.b16 %v3524
      %v3858 = vunpack.c.l.b16 %v3534
      %v3859 = vunpack.c.l.b16 %v3544
      %v3860 = vunpack.c.l.b16 %v3554
      %v3861 = vunpack.c.l.b16 %v3568
      %v3862 = vunpack.c.l.b16 %v3578
      %v3863 = vunpack.c.l.b16 %v3588
      %v3864 = vunpack.c.l.b16 %v3598
      %v3865 = vunpack.c.l.b16 %v3612
      %v3866 = vunpack.c.l.b16 %v3622
      %v3867 = vunpack.c.l.b16 %v3632
      %v3868 = vunpack.c.l.b16 %v3642
      %v3869 = vunpack.c.l.b16 %v3656
      %v3870 = vunpack.c.l.b16 %v3666
      %v3871 = vunpack.c.l.b16 %v3676
      %v3872 = vunpack.c.l.b16 %v3686
      %v3873 = vunpack.c.l.b16 %v3700
      %v3874 = vunpack.c.l.b16 %v3710
      %v3875 = vunpack.c.l.b16 %v3720
      %v3876 = vunpack.c.l.b16 %v3730
      %v3877 = vunpack.c.l.b16 %v3744
      %v3878 = vunpack.c.l.b16 %v3754
      %v3879 = vunpack.c.l.b16 %v3764
      %v3880 = vunpack.c.l.b16 %v3774
      %v3881 = vunpack.c.l.b16 %v3788
      %v3882 = vunpack.c.l.b16 %v3798
      %v3883 = vunpack.c.l.b16 %v3808
      %v3884 = vunpack.c.l.b16 %v3818
      %v3885 = vpack.c.b16 %v3822, %v3821
      %v3886 = vpack.c.b16 %v3824, %v3823
      %v3887 = vpack.c.b16 %v3826, %v3825
      %v3888 = vpack.c.b16 %v3828, %v3827
      %v3889 = vpack.c.b16 %v3830, %v3829
      %v3890 = vpack.c.b16 %v3832, %v3831
      %v3891 = vpack.c.b16 %v3834, %v3833
      %v3892 = vpack.c.b16 %v3836, %v3835
      %v3893 = vpack.c.b16 %v3838, %v3837
      %v3894 = vpack.c.b16 %v3840, %v3839
      %v3895 = vpack.c.b16 %v3842, %v3841
      %v3896 = vpack.c.b16 %v3844, %v3843
      %v3897 = vpack.c.b16 %v3846, %v3845
      %v3898 = vpack.c.b16 %v3848, %v3847
      %v3899 = vpack.c.b16 %v3850, %v3849
      %v3900 = vpack.c.b16 %v3852, %v3851
      %v3901 = vpack.c.b16 %v3854, %v3853
      %v3902 = vpack.c.b16 %v3856, %v3855
      %v3903 = vpack.c.b16 %v3858, %v3857
      %v3904 = vpack.c.b16 %v3860, %v3859
      %v3905 = vpack.c.b16 %v3862, %v3861
      %v3906 = vpack.c.b16 %v3864, %v3863
      %v3907 = vpack.c.b16 %v3866, %v3865
      %v3908 = vpack.c.b16 %v3868, %v3867
      %v3909 = vpack.c.b16 %v3870, %v3869
      %v3910 = vpack.c.b16 %v3872, %v3871
      %v3911 = vpack.c.b16 %v3874, %v3873
      %v3912 = vpack.c.b16 %v3876, %v3875
      %v3913 = vpack.c.b16 %v3878, %v3877
      %v3914 = vpack.c.b16 %v3880, %v3879
      %v3915 = vpack.c.b16 %v3882, %v3881
      %v3916 = vpack.c.b16 %v3884, %v3883
      %v3918 = vsel %vm1086, %v3885, 0
      %v3921 = vsel %vm1086, %v3886, 0
      %v3924 = vsel %vm1086, %v3887, 0
      %v3927 = vsel %vm1086, %v3888, 0
      %v3930 = vsel %vm1086, %v3889, 0
      %v3933 = vsel %vm1086, %v3890, 0
      %v3936 = vsel %vm1086, %v3891, 0
      %v3939 = vsel %vm1086, %v3892, 0
      %v3942 = vsel %vm1086, %v3893, 0
      %v3945 = vsel %vm1086, %v3894, 0
      %v3948 = vsel %vm1086, %v3895, 0
      %v3951 = vsel %vm1086, %v3896, 0
      %v3954 = vsel %vm1086, %v3897, 0
      %v3957 = vsel %vm1086, %v3898, 0
      %v3960 = vsel %vm1086, %v3899, 0
      %v3963 = vsel %vm1086, %v3900, 0
      %v3966 = vsel %vm1086, %v3901, 0
      %v3969 = vsel %vm1086, %v3902, 0
      %v3972 = vsel %vm1086, %v3903, 0
      %v3975 = vsel %vm1086, %v3904, 0
      %v3978 = vsel %vm1086, %v3905, 0
      %v3981 = vsel %vm1086, %v3906, 0
      %v3984 = vsel %vm1086, %v3907, 0
      %v3987 = vsel %vm1086, %v3908, 0
      %v3990 = vsel %vm1086, %v3909, 0
      %v3993 = vsel %vm1086, %v3910, 0
      %v3996 = vsel %vm1086, %v3911, 0
      %v3999 = vsel %vm1086, %v3912, 0
      %v4002 = vsel %vm1086, %v3913, 0
      %v4005 = vsel %vm1086, %v3914, 0
      %v4008 = vsel %vm1086, %v3915, 0
      %v4011 = vsel %vm1086, %v3916, 0
      %v4014 = vand.u32 %v3820, %v1186
      %4016 = vmatpush.bf16.msra.mxu0 0
      %4017 = vmatpush.bf16.msra.mxu0 0
      %4018 = vmatpush.bf16.msra.mxu0 0
      %4019 = vmatpush.bf16.msra.mxu0 0
      %4020 = vmatpush.bf16.msra.mxu0 0
      %4021 = vmatpush.bf16.msra.mxu0 0
      %4022 = vmatpush.bf16.msra.mxu0 0
      %4023 = vmatpush.bf16.msra.mxu0 %v4014
      %4024 = vmatmul.bf16.gmra.mxu0 %v3918
      %v4025 = vpop.f32.mrf.mxu0
      %v4026 = vadd.f32 0.0, %v4025
      %v4027 = vpop.f32.mrf.mxu0
      %v4028 = vadd.f32 0.0, %v4027
      %4029 = vmatmul.bf16.gmra.mxu0 %v3921
      %v4030 = vpop.f32.mrf.mxu0
      %v4031 = vadd.f32 0.0, %v4030
      %v4032 = vpop.f32.mrf.mxu0
      %v4033 = vadd.f32 0.0, %v4032
      %4034 = vmatmul.bf16.gmra.mxu0 %v3924
      %v4035 = vpop.f32.mrf.mxu0
      %v4036 = vadd.f32 0.0, %v4035
      %v4037 = vpop.f32.mrf.mxu0
      %v4038 = vadd.f32 0.0, %v4037
      %4039 = vmatmul.bf16.gmra.mxu0 %v3927
      %v4040 = vpop.f32.mrf.mxu0
      %v4041 = vadd.f32 0.0, %v4040
      %v4042 = vpop.f32.mrf.mxu0
      %v4043 = vadd.f32 0.0, %v4042
      %4044 = vmatmul.bf16.gmra.mxu0 %v3930
      %v4045 = vpop.f32.mrf.mxu0
      %v4046 = vadd.f32 0.0, %v4045
      %v4047 = vpop.f32.mrf.mxu0
      %v4048 = vadd.f32 0.0, %v4047
      %4049 = vmatmul.bf16.gmra.mxu0 %v3933
      %v4050 = vpop.f32.mrf.mxu0
      %v4051 = vadd.f32 0.0, %v4050
      %v4052 = vpop.f32.mrf.mxu0
      %v4053 = vadd.f32 0.0, %v4052
      %4054 = vmatmul.bf16.gmra.mxu0 %v3936
      %v4055 = vpop.f32.mrf.mxu0
      %v4056 = vadd.f32 0.0, %v4055
      %v4057 = vpop.f32.mrf.mxu0
      %v4058 = vadd.f32 0.0, %v4057
      %4059 = vmatmul.bf16.gmra.mxu0 %v3939
      %v4060 = vpop.f32.mrf.mxu0
      %v4061 = vadd.f32 0.0, %v4060
      %v4062 = vpop.f32.mrf.mxu0
      %v4063 = vadd.f32 0.0, %v4062
      %4064 = vmatmul.bf16.gmra.mxu0 %v3942
      %v4065 = vpop.f32.mrf.mxu0
      %v4066 = vadd.f32 0.0, %v4065
      %v4067 = vpop.f32.mrf.mxu0
      %v4068 = vadd.f32 0.0, %v4067
      %4069 = vmatmul.bf16.gmra.mxu0 %v3945
      %v4070 = vpop.f32.mrf.mxu0
      %v4071 = vadd.f32 0.0, %v4070
      %v4072 = vpop.f32.mrf.mxu0
      %v4073 = vadd.f32 0.0, %v4072
      %4074 = vmatmul.bf16.gmra.mxu0 %v3948
      %v4075 = vpop.f32.mrf.mxu0
      %v4076 = vadd.f32 0.0, %v4075
      %v4077 = vpop.f32.mrf.mxu0
      %v4078 = vadd.f32 0.0, %v4077
      %4079 = vmatmul.bf16.gmra.mxu0 %v3951
      %v4080 = vpop.f32.mrf.mxu0
      %v4081 = vadd.f32 0.0, %v4080
      %v4082 = vpop.f32.mrf.mxu0
      %v4083 = vadd.f32 0.0, %v4082
      %4084 = vmatmul.bf16.gmra.mxu0 %v3954
      %v4085 = vpop.f32.mrf.mxu0
      %v4086 = vadd.f32 0.0, %v4085
      %v4087 = vpop.f32.mrf.mxu0
      %v4088 = vadd.f32 0.0, %v4087
      %4089 = vmatmul.bf16.gmra.mxu0 %v3957
      %v4090 = vpop.f32.mrf.mxu0
      %v4091 = vadd.f32 0.0, %v4090
      %v4092 = vpop.f32.mrf.mxu0
      %v4093 = vadd.f32 0.0, %v4092
      %4094 = vmatmul.bf16.gmra.mxu0 %v3960
      %v4095 = vpop.f32.mrf.mxu0
      %v4096 = vadd.f32 0.0, %v4095
      %v4097 = vpop.f32.mrf.mxu0
      %v4098 = vadd.f32 0.0, %v4097
      %4099 = vmatmul.bf16.gmra.mxu0 %v3963
      %v4100 = vpop.f32.mrf.mxu0
      %v4101 = vadd.f32 0.0, %v4100
      %v4102 = vpop.f32.mrf.mxu0
      %v4103 = vadd.f32 0.0, %v4102
      %4104 = vmatmul.bf16.gmra.mxu0 %v3966
      %v4105 = vpop.f32.mrf.mxu0
      %v4106 = vadd.f32 0.0, %v4105
      %v4107 = vpop.f32.mrf.mxu0
      %v4108 = vadd.f32 0.0, %v4107
      %4109 = vmatmul.bf16.gmra.mxu0 %v3969
      %v4110 = vpop.f32.mrf.mxu0
      %v4111 = vadd.f32 0.0, %v4110
      %v4112 = vpop.f32.mrf.mxu0
      %v4113 = vadd.f32 0.0, %v4112
      %4114 = vmatmul.bf16.gmra.mxu0 %v3972
      %v4115 = vpop.f32.mrf.mxu0
      %v4116 = vadd.f32 0.0, %v4115
      %v4117 = vpop.f32.mrf.mxu0
      %v4118 = vadd.f32 0.0, %v4117
      %4119 = vmatmul.bf16.gmra.mxu0 %v3975
      %v4120 = vpop.f32.mrf.mxu0
      %v4121 = vadd.f32 0.0, %v4120
      %v4122 = vpop.f32.mrf.mxu0
      %v4123 = vadd.f32 0.0, %v4122
      %4124 = vmatmul.bf16.gmra.mxu0 %v3978
      %v4125 = vpop.f32.mrf.mxu0
      %v4126 = vadd.f32 0.0, %v4125
      %v4127 = vpop.f32.mrf.mxu0
      %v4128 = vadd.f32 0.0, %v4127
      %4129 = vmatmul.bf16.gmra.mxu0 %v3981
      %v4130 = vpop.f32.mrf.mxu0
      %v4131 = vadd.f32 0.0, %v4130
      %v4132 = vpop.f32.mrf.mxu0
      %v4133 = vadd.f32 0.0, %v4132
      %4134 = vmatmul.bf16.gmra.mxu0 %v3984
      %v4135 = vpop.f32.mrf.mxu0
      %v4136 = vadd.f32 0.0, %v4135
      %v4137 = vpop.f32.mrf.mxu0
      %v4138 = vadd.f32 0.0, %v4137
      %4139 = vmatmul.bf16.gmra.mxu0 %v3987
      %v4140 = vpop.f32.mrf.mxu0
      %v4141 = vadd.f32 0.0, %v4140
      %v4142 = vpop.f32.mrf.mxu0
      %v4143 = vadd.f32 0.0, %v4142
      %4144 = vmatmul.bf16.gmra.mxu0 %v3990
      %v4145 = vpop.f32.mrf.mxu0
      %v4146 = vadd.f32 0.0, %v4145
      %v4147 = vpop.f32.mrf.mxu0
      %v4148 = vadd.f32 0.0, %v4147
      %4149 = vmatmul.bf16.gmra.mxu0 %v3993
      %v4150 = vpop.f32.mrf.mxu0
      %v4151 = vadd.f32 0.0, %v4150
      %v4152 = vpop.f32.mrf.mxu0
      %v4153 = vadd.f32 0.0, %v4152
      %4154 = vmatmul.bf16.gmra.mxu0 %v3996
      %v4155 = vpop.f32.mrf.mxu0
      %v4156 = vadd.f32 0.0, %v4155
      %v4157 = vpop.f32.mrf.mxu0
      %v4158 = vadd.f32 0.0, %v4157
      %4159 = vmatmul.bf16.gmra.mxu0 %v3999
      %v4160 = vpop.f32.mrf.mxu0
      %v4161 = vadd.f32 0.0, %v4160
      %v4162 = vpop.f32.mrf.mxu0
      %v4163 = vadd.f32 0.0, %v4162
      %4164 = vmatmul.bf16.gmra.mxu0 %v4002
      %v4165 = vpop.f32.mrf.mxu0
      %v4166 = vadd.f32 0.0, %v4165
      %v4167 = vpop.f32.mrf.mxu0
      %v4168 = vadd.f32 0.0, %v4167
      %4169 = vmatmul.bf16.gmra.mxu0 %v4005
      %v4170 = vpop.f32.mrf.mxu0
      %v4171 = vadd.f32 0.0, %v4170
      %v4172 = vpop.f32.mrf.mxu0
      %v4173 = vadd.f32 0.0, %v4172
      %4174 = vmatmul.bf16.gmra.mxu0 %v4008
      %v4175 = vpop.f32.mrf.mxu0
      %v4176 = vadd.f32 0.0, %v4175
      %v4177 = vpop.f32.mrf.mxu0
      %v4178 = vadd.f32 0.0, %v4177
      %4179 = vmatmul.bf16.gmra.mxu0 %v4011
      %v4180 = vpop.f32.mrf.mxu0
      %v4181 = vadd.f32 0.0, %v4180
      %v4182 = vpop.f32.mrf.mxu0
      %v4183 = vadd.f32 0.0, %v4182
      %4184 = vdwg.mxu0
      %v4185 = vadd.f32 %v2971, %v4026
      %v4186 = vadd.f32 %v2972, %v4028
      %v4187 = vadd.f32 %v2973, %v4031
      %v4188 = vadd.f32 %v2974, %v4033
      %v4189 = vadd.f32 %v2975, %v4036
      %v4190 = vadd.f32 %v2976, %v4038
      %v4191 = vadd.f32 %v2977, %v4041
      %v4192 = vadd.f32 %v2978, %v4043
      %v4193 = vadd.f32 %v2979, %v4046
      %v4194 = vadd.f32 %v2980, %v4048
      %v4195 = vadd.f32 %v2981, %v4051
      %v4196 = vadd.f32 %v2982, %v4053
      %v4197 = vadd.f32 %v2983, %v4056
      %v4198 = vadd.f32 %v2984, %v4058
      %v4199 = vadd.f32 %v2985, %v4061
      %v4200 = vadd.f32 %v2986, %v4063
      %v4201 = vadd.f32 %v2987, %v4066
      %v4202 = vadd.f32 %v2988, %v4068
      %v4203 = vadd.f32 %v2989, %v4071
      %v4204 = vadd.f32 %v2990, %v4073
      %v4205 = vadd.f32 %v2991, %v4076
      %v4206 = vadd.f32 %v2992, %v4078
      %v4207 = vadd.f32 %v2993, %v4081
      %v4208 = vadd.f32 %v2994, %v4083
      %v4209 = vadd.f32 %v2995, %v4086
      %v4210 = vadd.f32 %v2996, %v4088
      %v4211 = vadd.f32 %v2997, %v4091
      %v4212 = vadd.f32 %v2998, %v4093
      %v4213 = vadd.f32 %v2999, %v4096
      %v4214 = vadd.f32 %v3000, %v4098
      %v4215 = vadd.f32 %v3001, %v4101
      %v4216 = vadd.f32 %v3002, %v4103
      %v4217 = vadd.f32 %v3003, %v4106
      %v4218 = vadd.f32 %v3004, %v4108
      %v4219 = vadd.f32 %v3005, %v4111
      %v4220 = vadd.f32 %v3006, %v4113
      %v4221 = vadd.f32 %v3007, %v4116
      %v4222 = vadd.f32 %v3008, %v4118
      %v4223 = vadd.f32 %v3009, %v4121
      %v4224 = vadd.f32 %v3010, %v4123
      %v4225 = vadd.f32 %v3011, %v4126
      %v4226 = vadd.f32 %v3012, %v4128
      %v4227 = vadd.f32 %v3013, %v4131
      %v4228 = vadd.f32 %v3014, %v4133
      %v4229 = vadd.f32 %v3015, %v4136
      %v4230 = vadd.f32 %v3016, %v4138
      %v4231 = vadd.f32 %v3017, %v4141
      %v4232 = vadd.f32 %v3018, %v4143
      %v4233 = vadd.f32 %v3019, %v4146
      %v4234 = vadd.f32 %v3020, %v4148
      %v4235 = vadd.f32 %v3021, %v4151
      %v4236 = vadd.f32 %v3022, %v4153
      %v4237 = vadd.f32 %v3023, %v4156
      %v4238 = vadd.f32 %v3024, %v4158
      %v4239 = vadd.f32 %v3025, %v4161
      %v4240 = vadd.f32 %v3026, %v4163
      %v4241 = vadd.f32 %v3027, %v4166
      %v4242 = vadd.f32 %v3028, %v4168
      %v4243 = vadd.f32 %v3029, %v4171
      %v4244 = vadd.f32 %v3030, %v4173
      %v4245 = vadd.f32 %v3031, %v4176
      %v4246 = vadd.f32 %v3032, %v4178
      %v4247 = vadd.f32 %v3033, %v4181
      %v4248 = vadd.f32 %v3034, %v4183
      %v4249 = vld [vmem:[%s2476] sm:$0xe]
      %v4250 = vld [vmem:[%s2476 + $0x14] sm:$0xe]
      %v4251 = vld [vmem:[%s2476 + $0x28] sm:$0xe]
      %v4252 = vld [vmem:[%s2476 + $0x3c] sm:$0xe]
      %v4253 = vld [vmem:[%s2476 + $0x50] sm:$0xe]
      %v4254 = vld [vmem:[%s2476 + $0x64] sm:$0xe]
      %v4255 = vld [vmem:[%s2476 + $0x78] sm:$0xe]
      %v4256 = vld [vmem:[%s2476 + $0x8c] sm:$0xe]
      %v4257 = vld [vmem:[%s2476 + $0xa0] sm:$0xe]
      %v4258 = vld [vmem:[%s2476 + $0xb4] sm:$0xe]
      %v4259 = vld [vmem:[%s2476 + $0xc8] sm:$0xe]
      %v4260 = vld [vmem:[%s2476 + $0xdc] sm:$0xe]
      %v4261 = vld [vmem:[%s2476 + $0xf0] sm:$0xe]
      %v4262 = vld [vmem:[%s2476 + $0x104] sm:$0xe]
      %v4263 = vld [vmem:[%s2476 + $0x118] sm:$0xe]
      %v4264 = vld [vmem:[%s2476 + $0x12c] sm:$0xe]
      %v4345 = vrot.slane %v4249, 5
      %v4346 = vrot.slane %v4345, 4
      %v4347 = vrot.slane %v3036, 5
      %v4348 = vsel %vm1837, %v4346, %v4347
      %v4349 = vrot.slane %v4347, 4
      %v4350 = vrot.slane %v3037, 5
      %v4351 = vsel %vm1837, %v4349, %v4350
      %v4352 = vrot.slane %v4350, 4
      %v4353 = vrot.slane %v3038, 5
      %v4354 = vsel %vm1837, %v4352, %v4353
      %v4355 = vrot.slane %v4353, 4
      %v4356 = vrot.slane %v3039, 5
      %v4357 = vsel %vm1837, %v4355, %v4356
      %v4358 = vrot.slane %v4250, 5
      %v4359 = vrot.slane %v4358, 4
      %v4360 = vrot.slane %v3041, 5
      %v4361 = vsel %vm1837, %v4359, %v4360
      %v4362 = vrot.slane %v4360, 4
      %v4363 = vrot.slane %v3042, 5
      %v4364 = vsel %vm1837, %v4362, %v4363
      %v4365 = vrot.slane %v4363, 4
      %v4366 = vrot.slane %v3043, 5
      %v4367 = vsel %vm1837, %v4365, %v4366
      %v4368 = vrot.slane %v4366, 4
      %v4369 = vrot.slane %v3044, 5
      %v4370 = vsel %vm1837, %v4368, %v4369
      %v4371 = vrot.slane %v4251, 5
      %v4372 = vrot.slane %v4371, 4
      %v4373 = vrot.slane %v3046, 5
      %v4374 = vsel %vm1837, %v4372, %v4373
      %v4375 = vrot.slane %v4373, 4
      %v4376 = vrot.slane %v3047, 5
      %v4377 = vsel %vm1837, %v4375, %v4376
      %v4378 = vrot.slane %v4376, 4
      %v4379 = vrot.slane %v3048, 5
      %v4380 = vsel %vm1837, %v4378, %v4379
      %v4381 = vrot.slane %v4379, 4
      %v4382 = vrot.slane %v3049, 5
      %v4383 = vsel %vm1837, %v4381, %v4382
      %v4384 = vrot.slane %v4252, 5
      %v4385 = vrot.slane %v4384, 4
      %v4386 = vrot.slane %v3051, 5
      %v4387 = vsel %vm1837, %v4385, %v4386
      %v4388 = vrot.slane %v4386, 4
      %v4389 = vrot.slane %v3052, 5
      %v4390 = vsel %vm1837, %v4388, %v4389
      %v4391 = vrot.slane %v4389, 4
      %v4392 = vrot.slane %v3053, 5
      %v4393 = vsel %vm1837, %v4391, %v4392
      %v4394 = vrot.slane %v4392, 4
      %v4395 = vrot.slane %v3054, 5
      %v4396 = vsel %vm1837, %v4394, %v4395
      %v4397 = vrot.slane %v4253, 5
      %v4398 = vrot.slane %v4397, 4
      %v4399 = vrot.slane %v3056, 5
      %v4400 = vsel %vm1837, %v4398, %v4399
      %v4401 = vrot.slane %v4399, 4
      %v4402 = vrot.slane %v3057, 5
      %v4403 = vsel %vm1837, %v4401, %v4402
      %v4404 = vrot.slane %v4402, 4
      %v4405 = vrot.slane %v3058, 5
      %v4406 = vsel %vm1837, %v4404, %v4405
      %v4407 = vrot.slane %v4405, 4
      %v4408 = vrot.slane %v3059, 5
      %v4409 = vsel %vm1837, %v4407, %v4408
      %v4410 = vrot.slane %v4254, 5
      %v4411 = vrot.slane %v4410, 4
      %v4412 = vrot.slane %v3061, 5
      %v4413 = vsel %vm1837, %v4411, %v4412
      %v4414 = vrot.slane %v4412, 4
      %v4415 = vrot.slane %v3062, 5
      %v4416 = vsel %vm1837, %v4414, %v4415
      %v4417 = vrot.slane %v4415, 4
      %v4418 = vrot.slane %v3063, 5
      %v4419 = vsel %vm1837, %v4417, %v4418
      %v4420 = vrot.slane %v4418, 4
      %v4421 = vrot.slane %v3064, 5
      %v4422 = vsel %vm1837, %v4420, %v4421
      %v4423 = vrot.slane %v4255, 5
      %v4424 = vrot.slane %v4423, 4
      %v4425 = vrot.slane %v3066, 5
      %v4426 = vsel %vm1837, %v4424, %v4425
      %v4427 = vrot.slane %v4425, 4
      %v4428 = vrot.slane %v3067, 5
      %v4429 = vsel %vm1837, %v4427, %v4428
      %v4430 = vrot.slane %v4428, 4
      %v4431 = vrot.slane %v3068, 5
      %v4432 = vsel %vm1837, %v4430, %v4431
      %v4433 = vrot.slane %v4431, 4
      %v4434 = vrot.slane %v3069, 5
      %v4435 = vsel %vm1837, %v4433, %v4434
      %v4436 = vrot.slane %v4256, 5
      %v4437 = vrot.slane %v4436, 4
      %v4438 = vrot.slane %v3071, 5
      %v4439 = vsel %vm1837, %v4437, %v4438
      %v4440 = vrot.slane %v4438, 4
      %v4441 = vrot.slane %v3072, 5
      %v4442 = vsel %vm1837, %v4440, %v4441
      %v4443 = vrot.slane %v4441, 4
      %v4444 = vrot.slane %v3073, 5
      %v4445 = vsel %vm1837, %v4443, %v4444
      %v4446 = vrot.slane %v4444, 4
      %v4447 = vrot.slane %v3074, 5
      %v4448 = vsel %vm1837, %v4446, %v4447
      %v4449 = vrot.slane %v4257, 5
      %v4450 = vrot.slane %v4449, 4
      %v4451 = vrot.slane %v3076, 5
      %v4452 = vsel %vm1837, %v4450, %v4451
      %v4453 = vrot.slane %v4451, 4
      %v4454 = vrot.slane %v3077, 5
      %v4455 = vsel %vm1837, %v4453, %v4454
      %v4456 = vrot.slane %v4454, 4
      %v4457 = vrot.slane %v3078, 5
      %v4458 = vsel %vm1837, %v4456, %v4457
      %v4459 = vrot.slane %v4457, 4
      %v4460 = vrot.slane %v3079, 5
      %v4461 = vsel %vm1837, %v4459, %v4460
      %v4462 = vrot.slane %v4258, 5
      %v4463 = vrot.slane %v4462, 4
      %v4464 = vrot.slane %v3081, 5
      %v4465 = vsel %vm1837, %v4463, %v4464
      %v4466 = vrot.slane %v4464, 4
      %v4467 = vrot.slane %v3082, 5
      %v4468 = vsel %vm1837, %v4466, %v4467
      %v4469 = vrot.slane %v4467, 4
      %v4470 = vrot.slane %v3083, 5
      %v4471 = vsel %vm1837, %v4469, %v4470
      %v4472 = vrot.slane %v4470, 4
      %v4473 = vrot.slane %v3084, 5
      %v4474 = vsel %vm1837, %v4472, %v4473
      %v4475 = vrot.slane %v4259, 5
      %v4476 = vrot.slane %v4475, 4
      %v4477 = vrot.slane %v3086, 5
      %v4478 = vsel %vm1837, %v4476, %v4477
      %v4479 = vrot.slane %v4477, 4
      %v4480 = vrot.slane %v3087, 5
      %v4481 = vsel %vm1837, %v4479, %v4480
      %v4482 = vrot.slane %v4480, 4
      %v4483 = vrot.slane %v3088, 5
      %v4484 = vsel %vm1837, %v4482, %v4483
      %v4485 = vrot.slane %v4483, 4
      %v4486 = vrot.slane %v3089, 5
      %v4487 = vsel %vm1837, %v4485, %v4486
      %v4488 = vrot.slane %v4260, 5
      %v4489 = vrot.slane %v4488, 4
      %v4490 = vrot.slane %v3091, 5
      %v4491 = vsel %vm1837, %v4489, %v4490
      %v4492 = vrot.slane %v4490, 4
      %v4493 = vrot.slane %v3092, 5
      %v4494 = vsel %vm1837, %v4492, %v4493
      %v4495 = vrot.slane %v4493, 4
      %v4496 = vrot.slane %v3093, 5
      %v4497 = vsel %vm1837, %v4495, %v4496
      %v4498 = vrot.slane %v4496, 4
      %v4499 = vrot.slane %v3094, 5
      %v4500 = vsel %vm1837, %v4498, %v4499
      %v4501 = vrot.slane %v4261, 5
      %v4502 = vrot.slane %v4501, 4
      %v4503 = vrot.slane %v3096, 5
      %v4504 = vsel %vm1837, %v4502, %v4503
      %v4505 = vrot.slane %v4503, 4
      %v4506 = vrot.slane %v3097, 5
      %v4507 = vsel %vm1837, %v4505, %v4506
      %v4508 = vrot.slane %v4506, 4
      %v4509 = vrot.slane %v3098, 5
      %v4510 = vsel %vm1837, %v4508, %v4509
      %v4511 = vrot.slane %v4509, 4
      %v4512 = vrot.slane %v3099, 5
      %v4513 = vsel %vm1837, %v4511, %v4512
      %v4514 = vrot.slane %v4262, 5
      %v4515 = vrot.slane %v4514, 4
      %v4516 = vrot.slane %v3101, 5
      %v4517 = vsel %vm1837, %v4515, %v4516
      %v4518 = vrot.slane %v4516, 4
      %v4519 = vrot.slane %v3102, 5
      %v4520 = vsel %vm1837, %v4518, %v4519
      %v4521 = vrot.slane %v4519, 4
      %v4522 = vrot.slane %v3103, 5
      %v4523 = vsel %vm1837, %v4521, %v4522
      %v4524 = vrot.slane %v4522, 4
      %v4525 = vrot.slane %v3104, 5
      %v4526 = vsel %vm1837, %v4524, %v4525
      %v4527 = vrot.slane %v4263, 5
      %v4528 = vrot.slane %v4527, 4
      %v4529 = vrot.slane %v3106, 5
      %v4530 = vsel %vm1837, %v4528, %v4529
      %v4531 = vrot.slane %v4529, 4
      %v4532 = vrot.slane %v3107, 5
      %v4533 = vsel %vm1837, %v4531, %v4532
      %v4534 = vrot.slane %v4532, 4
      %v4535 = vrot.slane %v3108, 5
      %v4536 = vsel %vm1837, %v4534, %v4535
      %v4537 = vrot.slane %v4535, 4
      %v4538 = vrot.slane %v3109, 5
      %v4539 = vsel %vm1837, %v4537, %v4538
      %v4540 = vrot.slane %v4264, 5
      %v4541 = vrot.slane %v4540, 4
      %v4542 = vrot.slane %v3111, 5
      %v4543 = vsel %vm1837, %v4541, %v4542
      %v4544 = vrot.slane %v4542, 4
      %v4545 = vrot.slane %v3112, 5
      %v4546 = vsel %vm1837, %v4544, %v4545
      %v4547 = vrot.slane %v4545, 4
      %v4548 = vrot.slane %v3113, 5
      %v4549 = vsel %vm1837, %v4547, %v4548
      %v4550 = vrot.slane %v4548, 4
      %v4551 = vrot.slane %v3114, 5
      %v4552 = vsel %vm1837, %v4550, %v4551
      %s4553 = scalar_lea.vmem %s1, 10
      %v4554 = vld [vmem:[%s4553] sm:$0x3]
      %v4555 = vunpack.c.l.b16 %v4348
      %v4556 = vunpack.c.l.b16 %v4351
      %v4557 = vunpack.c.l.b16 %v4354
      %v4558 = vunpack.c.l.b16 %v4357
      %v4559 = vunpack.c.l.b16 %v4361
      %v4560 = vunpack.c.l.b16 %v4364
      %v4561 = vunpack.c.l.b16 %v4367
      %v4562 = vunpack.c.l.b16 %v4370
      %v4563 = vunpack.c.l.b16 %v4374
      %v4564 = vunpack.c.l.b16 %v4377
      %v4565 = vunpack.c.l.b16 %v4380
      %v4566 = vunpack.c.l.b16 %v4383
      %v4567 = vunpack.c.l.b16 %v4387
      %v4568 = vunpack.c.l.b16 %v4390
      %v4569 = vunpack.c.l.b16 %v4393
      %v4570 = vunpack.c.l.b16 %v4396
      %v4571 = vunpack.c.l.b16 %v4400
      %v4572 = vunpack.c.l.b16 %v4403
      %v4573 = vunpack.c.l.b16 %v4406
      %v4574 = vunpack.c.l.b16 %v4409
      %v4575 = vunpack.c.l.b16 %v4413
      %v4576 = vunpack.c.l.b16 %v4416
      %v4577 = vunpack.c.l.b16 %v4419
      %v4578 = vunpack.c.l.b16 %v4422
      %v4579 = vunpack.c.l.b16 %v4426
      %v4580 = vunpack.c.l.b16 %v4429
      %v4581 = vunpack.c.l.b16 %v4432
      %v4582 = vunpack.c.l.b16 %v4435
      %v4583 = vunpack.c.l.b16 %v4439
      %v4584 = vunpack.c.l.b16 %v4442
      %v4585 = vunpack.c.l.b16 %v4445
      %v4586 = vunpack.c.l.b16 %v4448
      %v4587 = vunpack.c.l.b16 %v4452
      %v4588 = vunpack.c.l.b16 %v4455
      %v4589 = vunpack.c.l.b16 %v4458
      %v4590 = vunpack.c.l.b16 %v4461
      %v4591 = vunpack.c.l.b16 %v4465
      %v4592 = vunpack.c.l.b16 %v4468
      %v4593 = vunpack.c.l.b16 %v4471
      %v4594 = vunpack.c.l.b16 %v4474
      %v4595 = vunpack.c.l.b16 %v4478
      %v4596 = vunpack.c.l.b16 %v4481
      %v4597 = vunpack.c.l.b16 %v4484
      %v4598 = vunpack.c.l.b16 %v4487
      %v4599 = vunpack.c.l.b16 %v4491
      %v4600 = vunpack.c.l.b16 %v4494
      %v4601 = vunpack.c.l.b16 %v4497
      %v4602 = vunpack.c.l.b16 %v4500
      %v4603 = vunpack.c.l.b16 %v4504
      %v4604 = vunpack.c.l.b16 %v4507
      %v4605 = vunpack.c.l.b16 %v4510
      %v4606 = vunpack.c.l.b16 %v4513
      %v4607 = vunpack.c.l.b16 %v4517
      %v4608 = vunpack.c.l.b16 %v4520
      %v4609 = vunpack.c.l.b16 %v4523
      %v4610 = vunpack.c.l.b16 %v4526
      %v4611 = vunpack.c.l.b16 %v4530
      %v4612 = vunpack.c.l.b16 %v4533
      %v4613 = vunpack.c.l.b16 %v4536
      %v4614 = vunpack.c.l.b16 %v4539
      %v4615 = vunpack.c.l.b16 %v4543
      %v4616 = vunpack.c.l.b16 %v4546
      %v4617 = vunpack.c.l.b16 %v4549
      %v4618 = vunpack.c.l.b16 %v4552
      %v4619 = vpack.c.b16 %v4556, %v4555
      %v4620 = vpack.c.b16 %v4558, %v4557
      %v4621 = vpack.c.b16 %v4560, %v4559
      %v4622 = vpack.c.b16 %v4562, %v4561
      %v4623 = vpack.c.b16 %v4564, %v4563
      %v4624 = vpack.c.b16 %v4566, %v4565
      %v4625 = vpack.c.b16 %v4568, %v4567
      %v4626 = vpack.c.b16 %v4570, %v4569
      %v4627 = vpack.c.b16 %v4572, %v4571
      %v4628 = vpack.c.b16 %v4574, %v4573
      %v4629 = vpack.c.b16 %v4576, %v4575
      %v4630 = vpack.c.b16 %v4578, %v4577
      %v4631 = vpack.c.b16 %v4580, %v4579
      %v4632 = vpack.c.b16 %v4582, %v4581
      %v4633 = vpack.c.b16 %v4584, %v4583
      %v4634 = vpack.c.b16 %v4586, %v4585
      %v4635 = vpack.c.b16 %v4588, %v4587
      %v4636 = vpack.c.b16 %v4590, %v4589
      %v4637 = vpack.c.b16 %v4592, %v4591
      %v4638 = vpack.c.b16 %v4594, %v4593
      %v4639 = vpack.c.b16 %v4596, %v4595
      %v4640 = vpack.c.b16 %v4598, %v4597
      %v4641 = vpack.c.b16 %v4600, %v4599
      %v4642 = vpack.c.b16 %v4602, %v4601
      %v4643 = vpack.c.b16 %v4604, %v4603
      %v4644 = vpack.c.b16 %v4606, %v4605
      %v4645 = vpack.c.b16 %v4608, %v4607
      %v4646 = vpack.c.b16 %v4610, %v4609
      %v4647 = vpack.c.b16 %v4612, %v4611
      %v4648 = vpack.c.b16 %v4614, %v4613
      %v4649 = vpack.c.b16 %v4616, %v4615
      %v4650 = vpack.c.b16 %v4618, %v4617
      %v4652 = vsel %vm1086, %v4619, 0
      %v4655 = vsel %vm1086, %v4620, 0
      %v4658 = vsel %vm1086, %v4621, 0
      %v4661 = vsel %vm1086, %v4622, 0
      %v4664 = vsel %vm1086, %v4623, 0
      %v4667 = vsel %vm1086, %v4624, 0
      %v4670 = vsel %vm1086, %v4625, 0
      %v4673 = vsel %vm1086, %v4626, 0
      %v4676 = vsel %vm1086, %v4627, 0
      %v4679 = vsel %vm1086, %v4628, 0
      %v4682 = vsel %vm1086, %v4629, 0
      %v4685 = vsel %vm1086, %v4630, 0
      %v4688 = vsel %vm1086, %v4631, 0
      %v4691 = vsel %vm1086, %v4632, 0
      %v4694 = vsel %vm1086, %v4633, 0
      %v4697 = vsel %vm1086, %v4634, 0
      %v4700 = vsel %vm1086, %v4635, 0
      %v4703 = vsel %vm1086, %v4636, 0
      %v4706 = vsel %vm1086, %v4637, 0
      %v4709 = vsel %vm1086, %v4638, 0
      %v4712 = vsel %vm1086, %v4639, 0
      %v4715 = vsel %vm1086, %v4640, 0
      %v4718 = vsel %vm1086, %v4641, 0
      %v4721 = vsel %vm1086, %v4642, 0
      %v4724 = vsel %vm1086, %v4643, 0
      %v4727 = vsel %vm1086, %v4644, 0
      %v4730 = vsel %vm1086, %v4645, 0
      %v4733 = vsel %vm1086, %v4646, 0
      %v4736 = vsel %vm1086, %v4647, 0
      %v4739 = vsel %vm1086, %v4648, 0
      %v4742 = vsel %vm1086, %v4649, 0
      %v4745 = vsel %vm1086, %v4650, 0
      %v4748 = vand.u32 %v4554, %v1186
      %4750 = vmatpush.bf16.msra.mxu0 0
      %4751 = vmatpush.bf16.msra.mxu0 0
      %4752 = vmatpush.bf16.msra.mxu0 0
      %4753 = vmatpush.bf16.msra.mxu0 0
      %4754 = vmatpush.bf16.msra.mxu0 0
      %4755 = vmatpush.bf16.msra.mxu0 0
      %4756 = vmatpush.bf16.msra.mxu0 0
      %4757 = vmatpush.bf16.msra.mxu0 %v4748
      %4758 = vmatmul.bf16.gmra.mxu0 %v4652
      %v4759 = vpop.f32.mrf.mxu0
      %v4760 = vadd.f32 0.0, %v4759
      %v4761 = vpop.f32.mrf.mxu0
      %v4762 = vadd.f32 0.0, %v4761
      %4763 = vmatmul.bf16.gmra.mxu0 %v4655
      %v4764 = vpop.f32.mrf.mxu0
      %v4765 = vadd.f32 0.0, %v4764
      %v4766 = vpop.f32.mrf.mxu0
      %v4767 = vadd.f32 0.0, %v4766
      %4768 = vmatmul.bf16.gmra.mxu0 %v4658
      %v4769 = vpop.f32.mrf.mxu0
      %v4770 = vadd.f32 0.0, %v4769
      %v4771 = vpop.f32.mrf.mxu0
      %v4772 = vadd.f32 0.0, %v4771
      %4773 = vmatmul.bf16.gmra.mxu0 %v4661
      %v4774 = vpop.f32.mrf.mxu0
      %v4775 = vadd.f32 0.0, %v4774
      %v4776 = vpop.f32.mrf.mxu0
      %v4777 = vadd.f32 0.0, %v4776
      %4778 = vmatmul.bf16.gmra.mxu0 %v4664
      %v4779 = vpop.f32.mrf.mxu0
      %v4780 = vadd.f32 0.0, %v4779
      %v4781 = vpop.f32.mrf.mxu0
      %v4782 = vadd.f32 0.0, %v4781
      %4783 = vmatmul.bf16.gmra.mxu0 %v4667
      %v4784 = vpop.f32.mrf.mxu0
      %v4785 = vadd.f32 0.0, %v4784
      %v4786 = vpop.f32.mrf.mxu0
      %v4787 = vadd.f32 0.0, %v4786
      %4788 = vmatmul.bf16.gmra.mxu0 %v4670
      %v4789 = vpop.f32.mrf.mxu0
      %v4790 = vadd.f32 0.0, %v4789
      %v4791 = vpop.f32.mrf.mxu0
      %v4792 = vadd.f32 0.0, %v4791
      %4793 = vmatmul.bf16.gmra.mxu0 %v4673
      %v4794 = vpop.f32.mrf.mxu0
      %v4795 = vadd.f32 0.0, %v4794
      %v4796 = vpop.f32.mrf.mxu0
      %v4797 = vadd.f32 0.0, %v4796
      %4798 = vmatmul.bf16.gmra.mxu0 %v4676
      %v4799 = vpop.f32.mrf.mxu0
      %v4800 = vadd.f32 0.0, %v4799
      %v4801 = vpop.f32.mrf.mxu0
      %v4802 = vadd.f32 0.0, %v4801
      %4803 = vmatmul.bf16.gmra.mxu0 %v4679
      %v4804 = vpop.f32.mrf.mxu0
      %v4805 = vadd.f32 0.0, %v4804
      %v4806 = vpop.f32.mrf.mxu0
      %v4807 = vadd.f32 0.0, %v4806
      %4808 = vmatmul.bf16.gmra.mxu0 %v4682
      %v4809 = vpop.f32.mrf.mxu0
      %v4810 = vadd.f32 0.0, %v4809
      %v4811 = vpop.f32.mrf.mxu0
      %v4812 = vadd.f32 0.0, %v4811
      %4813 = vmatmul.bf16.gmra.mxu0 %v4685
      %v4814 = vpop.f32.mrf.mxu0
      %v4815 = vadd.f32 0.0, %v4814
      %v4816 = vpop.f32.mrf.mxu0
      %v4817 = vadd.f32 0.0, %v4816
      %4818 = vmatmul.bf16.gmra.mxu0 %v4688
      %v4819 = vpop.f32.mrf.mxu0
      %v4820 = vadd.f32 0.0, %v4819
      %v4821 = vpop.f32.mrf.mxu0
      %v4822 = vadd.f32 0.0, %v4821
      %4823 = vmatmul.bf16.gmra.mxu0 %v4691
      %v4824 = vpop.f32.mrf.mxu0
      %v4825 = vadd.f32 0.0, %v4824
      %v4826 = vpop.f32.mrf.mxu0
      %v4827 = vadd.f32 0.0, %v4826
      %4828 = vmatmul.bf16.gmra.mxu0 %v4694
      %v4829 = vpop.f32.mrf.mxu0
      %v4830 = vadd.f32 0.0, %v4829
      %v4831 = vpop.f32.mrf.mxu0
      %v4832 = vadd.f32 0.0, %v4831
      %4833 = vmatmul.bf16.gmra.mxu0 %v4697
      %v4834 = vpop.f32.mrf.mxu0
      %v4835 = vadd.f32 0.0, %v4834
      %v4836 = vpop.f32.mrf.mxu0
      %v4837 = vadd.f32 0.0, %v4836
      %4838 = vmatmul.bf16.gmra.mxu0 %v4700
      %v4839 = vpop.f32.mrf.mxu0
      %v4840 = vadd.f32 0.0, %v4839
      %v4841 = vpop.f32.mrf.mxu0
      %v4842 = vadd.f32 0.0, %v4841
      %4843 = vmatmul.bf16.gmra.mxu0 %v4703
      %v4844 = vpop.f32.mrf.mxu0
      %v4845 = vadd.f32 0.0, %v4844
      %v4846 = vpop.f32.mrf.mxu0
      %v4847 = vadd.f32 0.0, %v4846
      %4848 = vmatmul.bf16.gmra.mxu0 %v4706
      %v4849 = vpop.f32.mrf.mxu0
      %v4850 = vadd.f32 0.0, %v4849
      %v4851 = vpop.f32.mrf.mxu0
      %v4852 = vadd.f32 0.0, %v4851
      %4853 = vmatmul.bf16.gmra.mxu0 %v4709
      %v4854 = vpop.f32.mrf.mxu0
      %v4855 = vadd.f32 0.0, %v4854
      %v4856 = vpop.f32.mrf.mxu0
      %v4857 = vadd.f32 0.0, %v4856
      %4858 = vmatmul.bf16.gmra.mxu0 %v4712
      %v4859 = vpop.f32.mrf.mxu0
      %v4860 = vadd.f32 0.0, %v4859
      %v4861 = vpop.f32.mrf.mxu0
      %v4862 = vadd.f32 0.0, %v4861
      %4863 = vmatmul.bf16.gmra.mxu0 %v4715
      %v4864 = vpop.f32.mrf.mxu0
      %v4865 = vadd.f32 0.0, %v4864
      %v4866 = vpop.f32.mrf.mxu0
      %v4867 = vadd.f32 0.0, %v4866
      %4868 = vmatmul.bf16.gmra.mxu0 %v4718
      %v4869 = vpop.f32.mrf.mxu0
      %v4870 = vadd.f32 0.0, %v4869
      %v4871 = vpop.f32.mrf.mxu0
      %v4872 = vadd.f32 0.0, %v4871
      %4873 = vmatmul.bf16.gmra.mxu0 %v4721
      %v4874 = vpop.f32.mrf.mxu0
      %v4875 = vadd.f32 0.0, %v4874
      %v4876 = vpop.f32.mrf.mxu0
      %v4877 = vadd.f32 0.0, %v4876
      %4878 = vmatmul.bf16.gmra.mxu0 %v4724
      %v4879 = vpop.f32.mrf.mxu0
      %v4880 = vadd.f32 0.0, %v4879
      %v4881 = vpop.f32.mrf.mxu0
      %v4882 = vadd.f32 0.0, %v4881
      %4883 = vmatmul.bf16.gmra.mxu0 %v4727
      %v4884 = vpop.f32.mrf.mxu0
      %v4885 = vadd.f32 0.0, %v4884
      %v4886 = vpop.f32.mrf.mxu0
      %v4887 = vadd.f32 0.0, %v4886
      %4888 = vmatmul.bf16.gmra.mxu0 %v4730
      %v4889 = vpop.f32.mrf.mxu0
      %v4890 = vadd.f32 0.0, %v4889
      %v4891 = vpop.f32.mrf.mxu0
      %v4892 = vadd.f32 0.0, %v4891
      %4893 = vmatmul.bf16.gmra.mxu0 %v4733
      %v4894 = vpop.f32.mrf.mxu0
      %v4895 = vadd.f32 0.0, %v4894
      %v4896 = vpop.f32.mrf.mxu0
      %v4897 = vadd.f32 0.0, %v4896
      %4898 = vmatmul.bf16.gmra.mxu0 %v4736
      %v4899 = vpop.f32.mrf.mxu0
      %v4900 = vadd.f32 0.0, %v4899
      %v4901 = vpop.f32.mrf.mxu0
      %v4902 = vadd.f32 0.0, %v4901
      %4903 = vmatmul.bf16.gmra.mxu0 %v4739
      %v4904 = vpop.f32.mrf.mxu0
      %v4905 = vadd.f32 0.0, %v4904
      %v4906 = vpop.f32.mrf.mxu0
      %v4907 = vadd.f32 0.0, %v4906
      %4908 = vmatmul.bf16.gmra.mxu0 %v4742
      %v4909 = vpop.f32.mrf.mxu0
      %v4910 = vadd.f32 0.0, %v4909
      %v4911 = vpop.f32.mrf.mxu0
      %v4912 = vadd.f32 0.0, %v4911
      %4913 = vmatmul.bf16.gmra.mxu0 %v4745
      %v4914 = vpop.f32.mrf.mxu0
      %v4915 = vadd.f32 0.0, %v4914
      %v4916 = vpop.f32.mrf.mxu0
      %v4917 = vadd.f32 0.0, %v4916
      %4918 = vdwg.mxu0
      %v4919 = vadd.f32 %v4185, %v4760
      %v4920 = vadd.f32 %v4186, %v4762
      %v4921 = vadd.f32 %v4187, %v4765
      %v4922 = vadd.f32 %v4188, %v4767
      %v4923 = vadd.f32 %v4189, %v4770
      %v4924 = vadd.f32 %v4190, %v4772
      %v4925 = vadd.f32 %v4191, %v4775
      %v4926 = vadd.f32 %v4192, %v4777
      %v4927 = vadd.f32 %v4193, %v4780
      %v4928 = vadd.f32 %v4194, %v4782
      %v4929 = vadd.f32 %v4195, %v4785
      %v4930 = vadd.f32 %v4196, %v4787
      %v4931 = vadd.f32 %v4197, %v4790
      %v4932 = vadd.f32 %v4198, %v4792
      %v4933 = vadd.f32 %v4199, %v4795
      %v4934 = vadd.f32 %v4200, %v4797
      %v4935 = vadd.f32 %v4201, %v4800
      %v4936 = vadd.f32 %v4202, %v4802
      %v4937 = vadd.f32 %v4203, %v4805
      %v4938 = vadd.f32 %v4204, %v4807
      %v4939 = vadd.f32 %v4205, %v4810
      %v4940 = vadd.f32 %v4206, %v4812
      %v4941 = vadd.f32 %v4207, %v4815
      %v4942 = vadd.f32 %v4208, %v4817
      %v4943 = vadd.f32 %v4209, %v4820
      %v4944 = vadd.f32 %v4210, %v4822
      %v4945 = vadd.f32 %v4211, %v4825
      %v4946 = vadd.f32 %v4212, %v4827
      %v4947 = vadd.f32 %v4213, %v4830
      %v4948 = vadd.f32 %v4214, %v4832
      %v4949 = vadd.f32 %v4215, %v4835
      %v4950 = vadd.f32 %v4216, %v4837
      %v4951 = vadd.f32 %v4217, %v4840
      %v4952 = vadd.f32 %v4218, %v4842
      %v4953 = vadd.f32 %v4219, %v4845
      %v4954 = vadd.f32 %v4220, %v4847
      %v4955 = vadd.f32 %v4221, %v4850
      %v4956 = vadd.f32 %v4222, %v4852
      %v4957 = vadd.f32 %v4223, %v4855
      %v4958 = vadd.f32 %v4224, %v4857
      %v4959 = vadd.f32 %v4225, %v4860
      %v4960 = vadd.f32 %v4226, %v4862
      %v4961 = vadd.f32 %v4227, %v4865
      %v4962 = vadd.f32 %v4228, %v4867
      %v4963 = vadd.f32 %v4229, %v4870
      %v4964 = vadd.f32 %v4230, %v4872
      %v4965 = vadd.f32 %v4231, %v4875
      %v4966 = vadd.f32 %v4232, %v4877
      %v4967 = vadd.f32 %v4233, %v4880
      %v4968 = vadd.f32 %v4234, %v4882
      %v4969 = vadd.f32 %v4235, %v4885
      %v4970 = vadd.f32 %v4236, %v4887
      %v4971 = vadd.f32 %v4237, %v4890
      %v4972 = vadd.f32 %v4238, %v4892
      %v4973 = vadd.f32 %v4239, %v4895
      %v4974 = vadd.f32 %v4240, %v4897
      %v4975 = vadd.f32 %v4241, %v4900
      %v4976 = vadd.f32 %v4242, %v4902
      %v4977 = vadd.f32 %v4243, %v4905
      %v4978 = vadd.f32 %v4244, %v4907
      %v4979 = vadd.f32 %v4245, %v4910
      %v4980 = vadd.f32 %v4246, %v4912
      %v4981 = vadd.f32 %v4247, %v4915
      %v4982 = vadd.f32 %v4248, %v4917
      %s4983 = scalar_lea.vmem %s192, 40
      %v4984 = vld [vmem:[%s4983] sm:$0xf]
      %v4985 = vld [vmem:[%s4983 + $0x4] sm:$0xf]
      %v4986 = vld [vmem:[%s4983 + $0x8] sm:$0xf]
      %v4987 = vld [vmem:[%s4983 + $0xc] sm:$0xf]
      %v4988 = vld [vmem:[%s4983 + $0x14] sm:$0xf]
      %v4989 = vld [vmem:[%s4983 + $0x18] sm:$0xf]
      %v4990 = vld [vmem:[%s4983 + $0x1c] sm:$0xf]
      %v4991 = vld [vmem:[%s4983 + $0x20] sm:$0xf]
      %v4992 = vld [vmem:[%s4983 + $0x28] sm:$0xf]
      %v4993 = vld [vmem:[%s4983 + $0x2c] sm:$0xf]
      %v4994 = vld [vmem:[%s4983 + $0x30] sm:$0xf]
      %v4995 = vld [vmem:[%s4983 + $0x34] sm:$0xf]
      %v4996 = vld [vmem:[%s4983 + $0x3c] sm:$0xf]
      %v4997 = vld [vmem:[%s4983 + $0x40] sm:$0xf]
      %v4998 = vld [vmem:[%s4983 + $0x44] sm:$0xf]
      %v4999 = vld [vmem:[%s4983 + $0x48] sm:$0xf]
      %v5000 = vld [vmem:[%s4983 + $0x50] sm:$0xf]
      %v5001 = vld [vmem:[%s4983 + $0x54] sm:$0xf]
      %v5002 = vld [vmem:[%s4983 + $0x58] sm:$0xf]
      %v5003 = vld [vmem:[%s4983 + $0x5c] sm:$0xf]
      %v5004 = vld [vmem:[%s4983 + $0x64] sm:$0xf]
      %v5005 = vld [vmem:[%s4983 + $0x68] sm:$0xf]
      %v5006 = vld [vmem:[%s4983 + $0x6c] sm:$0xf]
      %v5007 = vld [vmem:[%s4983 + $0x70] sm:$0xf]
      %v5008 = vld [vmem:[%s4983 + $0x78] sm:$0xf]
      %v5009 = vld [vmem:[%s4983 + $0x7c] sm:$0xf]
      %v5010 = vld [vmem:[%s4983 + $0x80] sm:$0xf]
      %v5011 = vld [vmem:[%s4983 + $0x84] sm:$0xf]
      %v5012 = vld [vmem:[%s4983 + $0x8c] sm:$0xf]
      %v5013 = vld [vmem:[%s4983 + $0x90] sm:$0xf]
      %v5014 = vld [vmem:[%s4983 + $0x94] sm:$0xf]
      %v5015 = vld [vmem:[%s4983 + $0x98] sm:$0xf]
      %v5016 = vld [vmem:[%s4983 + $0xa0] sm:$0xf]
      %v5017 = vld [vmem:[%s4983 + $0xa4] sm:$0xf]
      %v5018 = vld [vmem:[%s4983 + $0xa8] sm:$0xf]
      %v5019 = vld [vmem:[%s4983 + $0xac] sm:$0xf]
      %v5020 = vld [vmem:[%s4983 + $0xb4] sm:$0xf]
      %v5021 = vld [vmem:[%s4983 + $0xb8] sm:$0xf]
      %v5022 = vld [vmem:[%s4983 + $0xbc] sm:$0xf]
      %v5023 = vld [vmem:[%s4983 + $0xc0] sm:$0xf]
      %v5024 = vld [vmem:[%s4983 + $0xc8] sm:$0xf]
      %v5025 = vld [vmem:[%s4983 + $0xcc] sm:$0xf]
      %v5026 = vld [vmem:[%s4983 + $0xd0] sm:$0xf]
      %v5027 = vld [vmem:[%s4983 + $0xd4] sm:$0xf]
      %v5028 = vld [vmem:[%s4983 + $0xdc] sm:$0xf]
      %v5029 = vld [vmem:[%s4983 + $0xe0] sm:$0xf]
      %v5030 = vld [vmem:[%s4983 + $0xe4] sm:$0xf]
      %v5031 = vld [vmem:[%s4983 + $0xe8] sm:$0xf]
      %v5032 = vld [vmem:[%s4983 + $0xf0] sm:$0xf]
      %v5033 = vld [vmem:[%s4983 + $0xf4] sm:$0xf]
      %v5034 = vld [vmem:[%s4983 + $0xf8] sm:$0xf]
      %v5035 = vld [vmem:[%s4983 + $0xfc] sm:$0xf]
      %v5036 = vld [vmem:[%s4983 + $0x104] sm:$0xf]
      %v5037 = vld [vmem:[%s4983 + $0x108] sm:$0xf]
      %v5038 = vld [vmem:[%s4983 + $0x10c] sm:$0xf]
      %v5039 = vld [vmem:[%s4983 + $0x110] sm:$0xf]
      %v5040 = vld [vmem:[%s4983 + $0x118] sm:$0xf]
      %v5041 = vld [vmem:[%s4983 + $0x11c] sm:$0xf]
      %v5042 = vld [vmem:[%s4983 + $0x120] sm:$0xf]
      %v5043 = vld [vmem:[%s4983 + $0x124] sm:$0xf]
      %v5044 = vld [vmem:[%s4983 + $0x12c] sm:$0xf]
      %v5045 = vld [vmem:[%s4983 + $0x130] sm:$0xf]
      %v5046 = vld [vmem:[%s4983 + $0x134] sm:$0xf]
      %v5047 = vld [vmem:[%s4983 + $0x138] sm:$0xf]
      %s5048 = scalar_lea.vmem %s1, 12
      %v5049 = vld [vmem:[%s5048] sm:$0x3]
      %v5114 = vunpack.c.l.b16 %v4984
      %v5115 = vunpack.c.l.b16 %v4985
      %v5116 = vunpack.c.l.b16 %v4986
      %v5117 = vunpack.c.l.b16 %v4987
      %v5118 = vunpack.c.l.b16 %v4988
      %v5119 = vunpack.c.l.b16 %v4989
      %v5120 = vunpack.c.l.b16 %v4990
      %v5121 = vunpack.c.l.b16 %v4991
      %v5122 = vunpack.c.l.b16 %v4992
      %v5123 = vunpack.c.l.b16 %v4993
      %v5124 = vunpack.c.l.b16 %v4994
      %v5125 = vunpack.c.l.b16 %v4995
      %v5126 = vunpack.c.l.b16 %v4996
      %v5127 = vunpack.c.l.b16 %v4997
      %v5128 = vunpack.c.l.b16 %v4998
      %v5129 = vunpack.c.l.b16 %v4999
      %v5130 = vunpack.c.l.b16 %v5000
      %v5131 = vunpack.c.l.b16 %v5001
      %v5132 = vunpack.c.l.b16 %v5002
      %v5133 = vunpack.c.l.b16 %v5003
      %v5134 = vunpack.c.l.b16 %v5004
      %v5135 = vunpack.c.l.b16 %v5005
      %v5136 = vunpack.c.l.b16 %v5006
      %v5137 = vunpack.c.l.b16 %v5007
      %v5138 = vunpack.c.l.b16 %v5008
      %v5139 = vunpack.c.l.b16 %v5009
      %v5140 = vunpack.c.l.b16 %v5010
      %v5141 = vunpack.c.l.b16 %v5011
      %v5142 = vunpack.c.l.b16 %v5012
      %v5143 = vunpack.c.l.b16 %v5013
      %v5144 = vunpack.c.l.b16 %v5014
      %v5145 = vunpack.c.l.b16 %v5015
      %v5146 = vunpack.c.l.b16 %v5016
      %v5147 = vunpack.c.l.b16 %v5017
      %v5148 = vunpack.c.l.b16 %v5018
      %v5149 = vunpack.c.l.b16 %v5019
      %v5150 = vunpack.c.l.b16 %v5020
      %v5151 = vunpack.c.l.b16 %v5021
      %v5152 = vunpack.c.l.b16 %v5022
      %v5153 = vunpack.c.l.b16 %v5023
      %v5154 = vunpack.c.l.b16 %v5024
      %v5155 = vunpack.c.l.b16 %v5025
      %v5156 = vunpack.c.l.b16 %v5026
      %v5157 = vunpack.c.l.b16 %v5027
      %v5158 = vunpack.c.l.b16 %v5028
      %v5159 = vunpack.c.l.b16 %v5029
      %v5160 = vunpack.c.l.b16 %v5030
      %v5161 = vunpack.c.l.b16 %v5031
      %v5162 = vunpack.c.l.b16 %v5032
      %v5163 = vunpack.c.l.b16 %v5033
      %v5164 = vunpack.c.l.b16 %v5034
      %v5165 = vunpack.c.l.b16 %v5035
      %v5166 = vunpack.c.l.b16 %v5036
      %v5167 = vunpack.c.l.b16 %v5037
      %v5168 = vunpack.c.l.b16 %v5038
      %v5169 = vunpack.c.l.b16 %v5039
      %v5170 = vunpack.c.l.b16 %v5040
      %v5171 = vunpack.c.l.b16 %v5041
      %v5172 = vunpack.c.l.b16 %v5042
      %v5173 = vunpack.c.l.b16 %v5043
      %v5174 = vunpack.c.l.b16 %v5044
      %v5175 = vunpack.c.l.b16 %v5045
      %v5176 = vunpack.c.l.b16 %v5046
      %v5177 = vunpack.c.l.b16 %v5047
      %v5178 = vpack.c.b16 %v5115, %v5114
      %v5179 = vpack.c.b16 %v5117, %v5116
      %v5180 = vpack.c.b16 %v5119, %v5118
      %v5181 = vpack.c.b16 %v5121, %v5120
      %v5182 = vpack.c.b16 %v5123, %v5122
      %v5183 = vpack.c.b16 %v5125, %v5124
      %v5184 = vpack.c.b16 %v5127, %v5126
      %v5185 = vpack.c.b16 %v5129, %v5128
      %v5186 = vpack.c.b16 %v5131, %v5130
      %v5187 = vpack.c.b16 %v5133, %v5132
      %v5188 = vpack.c.b16 %v5135, %v5134
      %v5189 = vpack.c.b16 %v5137, %v5136
      %v5190 = vpack.c.b16 %v5139, %v5138
      %v5191 = vpack.c.b16 %v5141, %v5140
      %v5192 = vpack.c.b16 %v5143, %v5142
      %v5193 = vpack.c.b16 %v5145, %v5144
      %v5194 = vpack.c.b16 %v5147, %v5146
      %v5195 = vpack.c.b16 %v5149, %v5148
      %v5196 = vpack.c.b16 %v5151, %v5150
      %v5197 = vpack.c.b16 %v5153, %v5152
      %v5198 = vpack.c.b16 %v5155, %v5154
      %v5199 = vpack.c.b16 %v5157, %v5156
      %v5200 = vpack.c.b16 %v5159, %v5158
      %v5201 = vpack.c.b16 %v5161, %v5160
      %v5202 = vpack.c.b16 %v5163, %v5162
      %v5203 = vpack.c.b16 %v5165, %v5164
      %v5204 = vpack.c.b16 %v5167, %v5166
      %v5205 = vpack.c.b16 %v5169, %v5168
      %v5206 = vpack.c.b16 %v5171, %v5170
      %v5207 = vpack.c.b16 %v5173, %v5172
      %v5208 = vpack.c.b16 %v5175, %v5174
      %v5209 = vpack.c.b16 %v5177, %v5176
      %v5211 = vsel %vm1086, %v5178, 0
      %v5214 = vsel %vm1086, %v5179, 0
      %v5217 = vsel %vm1086, %v5180, 0
      %v5220 = vsel %vm1086, %v5181, 0
      %v5223 = vsel %vm1086, %v5182, 0
      %v5226 = vsel %vm1086, %v5183, 0
      %v5229 = vsel %vm1086, %v5184, 0
      %v5232 = vsel %vm1086, %v5185, 0
      %v5235 = vsel %vm1086, %v5186, 0
      %v5238 = vsel %vm1086, %v5187, 0
      %v5241 = vsel %vm1086, %v5188, 0
      %v5244 = vsel %vm1086, %v5189, 0
      %v5247 = vsel %vm1086, %v5190, 0
      %v5250 = vsel %vm1086, %v5191, 0
      %v5253 = vsel %vm1086, %v5192, 0
      %v5256 = vsel %vm1086, %v5193, 0
      %v5259 = vsel %vm1086, %v5194, 0
      %v5262 = vsel %vm1086, %v5195, 0
      %v5265 = vsel %vm1086, %v5196, 0
      %v5268 = vsel %vm1086, %v5197, 0
      %v5271 = vsel %vm1086, %v5198, 0
      %v5274 = vsel %vm1086, %v5199, 0
      %v5277 = vsel %vm1086, %v5200, 0
      %v5280 = vsel %vm1086, %v5201, 0
      %v5283 = vsel %vm1086, %v5202, 0
      %v5286 = vsel %vm1086, %v5203, 0
      %v5289 = vsel %vm1086, %v5204, 0
      %v5292 = vsel %vm1086, %v5205, 0
      %v5295 = vsel %vm1086, %v5206, 0
      %v5298 = vsel %vm1086, %v5207, 0
      %v5301 = vsel %vm1086, %v5208, 0
      %v5304 = vsel %vm1086, %v5209, 0
      %v5307 = vand.u32 %v5049, %v1186
      %5309 = vmatpush.bf16.msra.mxu0 0
      %5310 = vmatpush.bf16.msra.mxu0 0
      %5311 = vmatpush.bf16.msra.mxu0 0
      %5312 = vmatpush.bf16.msra.mxu0 0
      %5313 = vmatpush.bf16.msra.mxu0 0
      %5314 = vmatpush.bf16.msra.mxu0 0
      %5315 = vmatpush.bf16.msra.mxu0 0
      %5316 = vmatpush.bf16.msra.mxu0 %v5307
      %5317 = vmatmul.bf16.gmra.mxu0 %v5211
      %v5318 = vpop.f32.mrf.mxu0
      %v5319 = vadd.f32 0.0, %v5318
      %v5320 = vpop.f32.mrf.mxu0
      %v5321 = vadd.f32 0.0, %v5320
      %5322 = vmatmul.bf16.gmra.mxu0 %v5214
      %v5323 = vpop.f32.mrf.mxu0
      %v5324 = vadd.f32 0.0, %v5323
      %v5325 = vpop.f32.mrf.mxu0
      %v5326 = vadd.f32 0.0, %v5325
      %5327 = vmatmul.bf16.gmra.mxu0 %v5217
      %v5328 = vpop.f32.mrf.mxu0
      %v5329 = vadd.f32 0.0, %v5328
      %v5330 = vpop.f32.mrf.mxu0
      %v5331 = vadd.f32 0.0, %v5330
      %5332 = vmatmul.bf16.gmra.mxu0 %v5220
      %v5333 = vpop.f32.mrf.mxu0
      %v5334 = vadd.f32 0.0, %v5333
      %v5335 = vpop.f32.mrf.mxu0
      %v5336 = vadd.f32 0.0, %v5335
      %5337 = vmatmul.bf16.gmra.mxu0 %v5223
      %v5338 = vpop.f32.mrf.mxu0
      %v5339 = vadd.f32 0.0, %v5338
      %v5340 = vpop.f32.mrf.mxu0
      %v5341 = vadd.f32 0.0, %v5340
      %5342 = vmatmul.bf16.gmra.mxu0 %v5226
      %v5343 = vpop.f32.mrf.mxu0
      %v5344 = vadd.f32 0.0, %v5343
      %v5345 = vpop.f32.mrf.mxu0
      %v5346 = vadd.f32 0.0, %v5345
      %5347 = vmatmul.bf16.gmra.mxu0 %v5229
      %v5348 = vpop.f32.mrf.mxu0
      %v5349 = vadd.f32 0.0, %v5348
      %v5350 = vpop.f32.mrf.mxu0
      %v5351 = vadd.f32 0.0, %v5350
      %5352 = vmatmul.bf16.gmra.mxu0 %v5232
      %v5353 = vpop.f32.mrf.mxu0
      %v5354 = vadd.f32 0.0, %v5353
      %v5355 = vpop.f32.mrf.mxu0
      %v5356 = vadd.f32 0.0, %v5355
      %5357 = vmatmul.bf16.gmra.mxu0 %v5235
      %v5358 = vpop.f32.mrf.mxu0
      %v5359 = vadd.f32 0.0, %v5358
      %v5360 = vpop.f32.mrf.mxu0
      %v5361 = vadd.f32 0.0, %v5360
      %5362 = vmatmul.bf16.gmra.mxu0 %v5238
      %v5363 = vpop.f32.mrf.mxu0
      %v5364 = vadd.f32 0.0, %v5363
      %v5365 = vpop.f32.mrf.mxu0
      %v5366 = vadd.f32 0.0, %v5365
      %5367 = vmatmul.bf16.gmra.mxu0 %v5241
      %v5368 = vpop.f32.mrf.mxu0
      %v5369 = vadd.f32 0.0, %v5368
      %v5370 = vpop.f32.mrf.mxu0
      %v5371 = vadd.f32 0.0, %v5370
      %5372 = vmatmul.bf16.gmra.mxu0 %v5244
      %v5373 = vpop.f32.mrf.mxu0
      %v5374 = vadd.f32 0.0, %v5373
      %v5375 = vpop.f32.mrf.mxu0
      %v5376 = vadd.f32 0.0, %v5375
      %5377 = vmatmul.bf16.gmra.mxu0 %v5247
      %v5378 = vpop.f32.mrf.mxu0
      %v5379 = vadd.f32 0.0, %v5378
      %v5380 = vpop.f32.mrf.mxu0
      %v5381 = vadd.f32 0.0, %v5380
      %5382 = vmatmul.bf16.gmra.mxu0 %v5250
      %v5383 = vpop.f32.mrf.mxu0
      %v5384 = vadd.f32 0.0, %v5383
      %v5385 = vpop.f32.mrf.mxu0
      %v5386 = vadd.f32 0.0, %v5385
      %5387 = vmatmul.bf16.gmra.mxu0 %v5253
      %v5388 = vpop.f32.mrf.mxu0
      %v5389 = vadd.f32 0.0, %v5388
      %v5390 = vpop.f32.mrf.mxu0
      %v5391 = vadd.f32 0.0, %v5390
      %5392 = vmatmul.bf16.gmra.mxu0 %v5256
      %v5393 = vpop.f32.mrf.mxu0
      %v5394 = vadd.f32 0.0, %v5393
      %v5395 = vpop.f32.mrf.mxu0
      %v5396 = vadd.f32 0.0, %v5395
      %5397 = vmatmul.bf16.gmra.mxu0 %v5259
      %v5398 = vpop.f32.mrf.mxu0
      %v5399 = vadd.f32 0.0, %v5398
      %v5400 = vpop.f32.mrf.mxu0
      %v5401 = vadd.f32 0.0, %v5400
      %5402 = vmatmul.bf16.gmra.mxu0 %v5262
      %v5403 = vpop.f32.mrf.mxu0
      %v5404 = vadd.f32 0.0, %v5403
      %v5405 = vpop.f32.mrf.mxu0
      %v5406 = vadd.f32 0.0, %v5405
      %5407 = vmatmul.bf16.gmra.mxu0 %v5265
      %v5408 = vpop.f32.mrf.mxu0
      %v5409 = vadd.f32 0.0, %v5408
      %v5410 = vpop.f32.mrf.mxu0
      %v5411 = vadd.f32 0.0, %v5410
      %5412 = vmatmul.bf16.gmra.mxu0 %v5268
      %v5413 = vpop.f32.mrf.mxu0
      %v5414 = vadd.f32 0.0, %v5413
      %v5415 = vpop.f32.mrf.mxu0
      %v5416 = vadd.f32 0.0, %v5415
      %5417 = vmatmul.bf16.gmra.mxu0 %v5271
      %v5418 = vpop.f32.mrf.mxu0
      %v5419 = vadd.f32 0.0, %v5418
      %v5420 = vpop.f32.mrf.mxu0
      %v5421 = vadd.f32 0.0, %v5420
      %5422 = vmatmul.bf16.gmra.mxu0 %v5274
      %v5423 = vpop.f32.mrf.mxu0
      %v5424 = vadd.f32 0.0, %v5423
      %v5425 = vpop.f32.mrf.mxu0
      %v5426 = vadd.f32 0.0, %v5425
      %5427 = vmatmul.bf16.gmra.mxu0 %v5277
      %v5428 = vpop.f32.mrf.mxu0
      %v5429 = vadd.f32 0.0, %v5428
      %v5430 = vpop.f32.mrf.mxu0
      %v5431 = vadd.f32 0.0, %v5430
      %5432 = vmatmul.bf16.gmra.mxu0 %v5280
      %v5433 = vpop.f32.mrf.mxu0
      %v5434 = vadd.f32 0.0, %v5433
      %v5435 = vpop.f32.mrf.mxu0
      %v5436 = vadd.f32 0.0, %v5435
      %5437 = vmatmul.bf16.gmra.mxu0 %v5283
      %v5438 = vpop.f32.mrf.mxu0
      %v5439 = vadd.f32 0.0, %v5438
      %v5440 = vpop.f32.mrf.mxu0
      %v5441 = vadd.f32 0.0, %v5440
      %5442 = vmatmul.bf16.gmra.mxu0 %v5286
      %v5443 = vpop.f32.mrf.mxu0
      %v5444 = vadd.f32 0.0, %v5443
      %v5445 = vpop.f32.mrf.mxu0
      %v5446 = vadd.f32 0.0, %v5445
      %5447 = vmatmul.bf16.gmra.mxu0 %v5289
      %v5448 = vpop.f32.mrf.mxu0
      %v5449 = vadd.f32 0.0, %v5448
      %v5450 = vpop.f32.mrf.mxu0
      %v5451 = vadd.f32 0.0, %v5450
      %5452 = vmatmul.bf16.gmra.mxu0 %v5292
      %v5453 = vpop.f32.mrf.mxu0
      %v5454 = vadd.f32 0.0, %v5453
      %v5455 = vpop.f32.mrf.mxu0
      %v5456 = vadd.f32 0.0, %v5455
      %5457 = vmatmul.bf16.gmra.mxu0 %v5295
      %v5458 = vpop.f32.mrf.mxu0
      %v5459 = vadd.f32 0.0, %v5458
      %v5460 = vpop.f32.mrf.mxu0
      %v5461 = vadd.f32 0.0, %v5460
      %5462 = vmatmul.bf16.gmra.mxu0 %v5298
      %v5463 = vpop.f32.mrf.mxu0
      %v5464 = vadd.f32 0.0, %v5463
      %v5465 = vpop.f32.mrf.mxu0
      %v5466 = vadd.f32 0.0, %v5465
      %5467 = vmatmul.bf16.gmra.mxu0 %v5301
      %v5468 = vpop.f32.mrf.mxu0
      %v5469 = vadd.f32 0.0, %v5468
      %v5470 = vpop.f32.mrf.mxu0
      %v5471 = vadd.f32 0.0, %v5470
      %5472 = vmatmul.bf16.gmra.mxu0 %v5304
      %v5473 = vpop.f32.mrf.mxu0
      %v5474 = vadd.f32 0.0, %v5473
      %v5475 = vpop.f32.mrf.mxu0
      %v5476 = vadd.f32 0.0, %v5475
      %5477 = vdwg.mxu0
      %v5478 = vadd.f32 %v4919, %v5319
      %v5479 = vadd.f32 %v4920, %v5321
      %v5480 = vadd.f32 %v4921, %v5324
      %v5481 = vadd.f32 %v4922, %v5326
      %v5482 = vadd.f32 %v4923, %v5329
      %v5483 = vadd.f32 %v4924, %v5331
      %v5484 = vadd.f32 %v4925, %v5334
      %v5485 = vadd.f32 %v4926, %v5336
      %v5486 = vadd.f32 %v4927, %v5339
      %v5487 = vadd.f32 %v4928, %v5341
      %v5488 = vadd.f32 %v4929, %v5344
      %v5489 = vadd.f32 %v4930, %v5346
      %v5490 = vadd.f32 %v4931, %v5349
      %v5491 = vadd.f32 %v4932, %v5351
      %v5492 = vadd.f32 %v4933, %v5354
      %v5493 = vadd.f32 %v4934, %v5356
      %v5494 = vadd.f32 %v4935, %v5359
      %v5495 = vadd.f32 %v4936, %v5361
      %v5496 = vadd.f32 %v4937, %v5364
      %v5497 = vadd.f32 %v4938, %v5366
      %v5498 = vadd.f32 %v4939, %v5369
      %v5499 = vadd.f32 %v4940, %v5371
      %v5500 = vadd.f32 %v4941, %v5374
      %v5501 = vadd.f32 %v4942, %v5376
      %v5502 = vadd.f32 %v4943, %v5379
      %v5503 = vadd.f32 %v4944, %v5381
      %v5504 = vadd.f32 %v4945, %v5384
      %v5505 = vadd.f32 %v4946, %v5386
      %v5506 = vadd.f32 %v4947, %v5389
      %v5507 = vadd.f32 %v4948, %v5391
      %v5508 = vadd.f32 %v4949, %v5394
      %v5509 = vadd.f32 %v4950, %v5396
      %v5510 = vadd.f32 %v4951, %v5399
      %v5511 = vadd.f32 %v4952, %v5401
      %v5512 = vadd.f32 %v4953, %v5404
      %v5513 = vadd.f32 %v4954, %v5406
      %v5514 = vadd.f32 %v4955, %v5409
      %v5515 = vadd.f32 %v4956, %v5411
      %v5516 = vadd.f32 %v4957, %v5414
      %v5517 = vadd.f32 %v4958, %v5416
      %v5518 = vadd.f32 %v4959, %v5419
      %v5519 = vadd.f32 %v4960, %v5421
      %v5520 = vadd.f32 %v4961, %v5424
      %v5521 = vadd.f32 %v4962, %v5426
      %v5522 = vadd.f32 %v4963, %v5429
      %v5523 = vadd.f32 %v4964, %v5431
      %v5524 = vadd.f32 %v4965, %v5434
      %v5525 = vadd.f32 %v4966, %v5436
      %v5526 = vadd.f32 %v4967, %v5439
      %v5527 = vadd.f32 %v4968, %v5441
      %v5528 = vadd.f32 %v4969, %v5444
      %v5529 = vadd.f32 %v4970, %v5446
      %v5530 = vadd.f32 %v4971, %v5449
      %v5531 = vadd.f32 %v4972, %v5451
      %v5532 = vadd.f32 %v4973, %v5454
      %v5533 = vadd.f32 %v4974, %v5456
      %v5534 = vadd.f32 %v4975, %v5459
      %v5535 = vadd.f32 %v4976, %v5461
      %v5536 = vadd.f32 %v4977, %v5464
      %v5537 = vadd.f32 %v4978, %v5466
      %v5538 = vadd.f32 %v4979, %v5469
      %v5539 = vadd.f32 %v4980, %v5471
      %v5540 = vadd.f32 %v4981, %v5474
      %v5541 = vadd.f32 %v4982, %v5476
      %v5542 = vld [vmem:[%s4983] sm:$0xf]
      %v5543 = vld [vmem:[%s4983 + $0x4] sm:$0xf]
      %v5544 = vld [vmem:[%s4983 + $0x8] sm:$0xf]
      %v5545 = vld [vmem:[%s4983 + $0xc] sm:$0xf]
      %v5546 = vld [vmem:[%s4983 + $0x10] sm:$0x1]
      %v5547 = vld [vmem:[%s4983 + $0x14] sm:$0xf]
      %v5548 = vld [vmem:[%s4983 + $0x18] sm:$0xf]
      %v5549 = vld [vmem:[%s4983 + $0x1c] sm:$0xf]
      %v5550 = vld [vmem:[%s4983 + $0x20] sm:$0xf]
      %v5551 = vld [vmem:[%s4983 + $0x24] sm:$0x1]
      %v5552 = vld [vmem:[%s4983 + $0x28] sm:$0xf]
      %v5553 = vld [vmem:[%s4983 + $0x2c] sm:$0xf]
      %v5554 = vld [vmem:[%s4983 + $0x30] sm:$0xf]
      %v5555 = vld [vmem:[%s4983 + $0x34] sm:$0xf]
      %v5556 = vld [vmem:[%s4983 + $0x38] sm:$0x1]
      %v5557 = vld [vmem:[%s4983 + $0x3c] sm:$0xf]
      %v5558 = vld [vmem:[%s4983 + $0x40] sm:$0xf]
      %v5559 = vld [vmem:[%s4983 + $0x44] sm:$0xf]
      %v5560 = vld [vmem:[%s4983 + $0x48] sm:$0xf]
      %v5561 = vld [vmem:[%s4983 + $0x4c] sm:$0x1]
      %v5562 = vld [vmem:[%s4983 + $0x50] sm:$0xf]
      %v5563 = vld [vmem:[%s4983 + $0x54] sm:$0xf]
      %v5564 = vld [vmem:[%s4983 + $0x58] sm:$0xf]
      %v5565 = vld [vmem:[%s4983 + $0x5c] sm:$0xf]
      %v5566 = vld [vmem:[%s4983 + $0x60] sm:$0x1]
      %v5567 = vld [vmem:[%s4983 + $0x64] sm:$0xf]
      %v5568 = vld [vmem:[%s4983 + $0x68] sm:$0xf]
      %v5569 = vld [vmem:[%s4983 + $0x6c] sm:$0xf]
      %v5570 = vld [vmem:[%s4983 + $0x70] sm:$0xf]
      %v5571 = vld [vmem:[%s4983 + $0x74] sm:$0x1]
      %v5572 = vld [vmem:[%s4983 + $0x78] sm:$0xf]
      %v5573 = vld [vmem:[%s4983 + $0x7c] sm:$0xf]
      %v5574 = vld [vmem:[%s4983 + $0x80] sm:$0xf]
      %v5575 = vld [vmem:[%s4983 + $0x84] sm:$0xf]
      %v5576 = vld [vmem:[%s4983 + $0x88] sm:$0x1]
      %v5577 = vld [vmem:[%s4983 + $0x8c] sm:$0xf]
      %v5578 = vld [vmem:[%s4983 + $0x90] sm:$0xf]
      %v5579 = vld [vmem:[%s4983 + $0x94] sm:$0xf]
      %v5580 = vld [vmem:[%s4983 + $0x98] sm:$0xf]
      %v5581 = vld [vmem:[%s4983 + $0x9c] sm:$0x1]
      %v5582 = vld [vmem:[%s4983 + $0xa0] sm:$0xf]
      %v5583 = vld [vmem:[%s4983 + $0xa4] sm:$0xf]
      %v5584 = vld [vmem:[%s4983 + $0xa8] sm:$0xf]
      %v5585 = vld [vmem:[%s4983 + $0xac] sm:$0xf]
      %v5586 = vld [vmem:[%s4983 + $0xb0] sm:$0x1]
      %v5587 = vld [vmem:[%s4983 + $0xb4] sm:$0xf]
      %v5588 = vld [vmem:[%s4983 + $0xb8] sm:$0xf]
      %v5589 = vld [vmem:[%s4983 + $0xbc] sm:$0xf]
      %v5590 = vld [vmem:[%s4983 + $0xc0] sm:$0xf]
      %v5591 = vld [vmem:[%s4983 + $0xc4] sm:$0x1]
      %v5592 = vld [vmem:[%s4983 + $0xc8] sm:$0xf]
      %v5593 = vld [vmem:[%s4983 + $0xcc] sm:$0xf]
      %v5594 = vld [vmem:[%s4983 + $0xd0] sm:$0xf]
      %v5595 = vld [vmem:[%s4983 + $0xd4] sm:$0xf]
      %v5596 = vld [vmem:[%s4983 + $0xd8] sm:$0x1]
      %v5597 = vld [vmem:[%s4983 + $0xdc] sm:$0xf]
      %v5598 = vld [vmem:[%s4983 + $0xe0] sm:$0xf]
      %v5599 = vld [vmem:[%s4983 + $0xe4] sm:$0xf]
      %v5600 = vld [vmem:[%s4983 + $0xe8] sm:$0xf]
      %v5601 = vld [vmem:[%s4983 + $0xec] sm:$0x1]
      %v5602 = vld [vmem:[%s4983 + $0xf0] sm:$0xf]
      %v5603 = vld [vmem:[%s4983 + $0xf4] sm:$0xf]
      %v5604 = vld [vmem:[%s4983 + $0xf8] sm:$0xf]
      %v5605 = vld [vmem:[%s4983 + $0xfc] sm:$0xf]
      %v5606 = vld [vmem:[%s4983 + $0x100] sm:$0x1]
      %v5607 = vld [vmem:[%s4983 + $0x104] sm:$0xf]
      %v5608 = vld [vmem:[%s4983 + $0x108] sm:$0xf]
      %v5609 = vld [vmem:[%s4983 + $0x10c] sm:$0xf]
      %v5610 = vld [vmem:[%s4983 + $0x110] sm:$0xf]
      %v5611 = vld [vmem:[%s4983 + $0x114] sm:$0x1]
      %v5612 = vld [vmem:[%s4983 + $0x118] sm:$0xf]
      %v5613 = vld [vmem:[%s4983 + $0x11c] sm:$0xf]
      %v5614 = vld [vmem:[%s4983 + $0x120] sm:$0xf]
      %v5615 = vld [vmem:[%s4983 + $0x124] sm:$0xf]
      %v5616 = vld [vmem:[%s4983 + $0x128] sm:$0x1]
      %v5617 = vld [vmem:[%s4983 + $0x12c] sm:$0xf]
      %v5618 = vld [vmem:[%s4983 + $0x130] sm:$0xf]
      %v5619 = vld [vmem:[%s4983 + $0x134] sm:$0xf]
      %v5620 = vld [vmem:[%s4983 + $0x138] sm:$0xf]
      %v5621 = vld [vmem:[%s4983 + $0x13c] sm:$0x1]
      %v5623 = vshrl.u32 %v5542, 16
      %v5625 = vrot.slane %v5623, 4
      %v5626 = vshll.u32 %v5542, 16
      %v5628 = vrot.slane %v5626, 5
      %v5629 = vor.u32 %v5625, %v5628
      %v5630 = vrot.slane %v5629, 4
      %v5632 = vshll.u32 %v5543, 16
      %v5634 = vrot.slane %v5632, 5
      %v5635 = vsel %vm283, %v5630, %v5634
      %v5636 = vshrl.u32 %v5543, 16
      %v5638 = vrot.slane %v5636, 4
      %v5639 = vor.u32 %v5638, %v5634
      %v5640 = vrot.slane %v5639, 4
      %v5642 = vshll.u32 %v5544, 16
      %v5644 = vrot.slane %v5642, 5
      %v5645 = vsel %vm283, %v5640, %v5644
      %v5646 = vshrl.u32 %v5544, 16
      %v5648 = vrot.slane %v5646, 4
      %v5649 = vor.u32 %v5648, %v5644
      %v5650 = vrot.slane %v5649, 4
      %v5652 = vshll.u32 %v5545, 16
      %v5654 = vrot.slane %v5652, 5
      %v5655 = vsel %vm283, %v5650, %v5654
      %v5656 = vshrl.u32 %v5545, 16
      %v5658 = vrot.slane %v5656, 4
      %v5659 = vor.u32 %v5658, %v5654
      %v5660 = vrot.slane %v5659, 4
      %v5662 = vshll.u32 %v5546, 16
      %v5664 = vrot.slane %v5662, 5
      %v5665 = vsel %vm283, %v5660, %v5664
      %v5667 = vshrl.u32 %v5547, 16
      %v5669 = vrot.slane %v5667, 4
      %v5670 = vshll.u32 %v5547, 16
      %v5672 = vrot.slane %v5670, 5
      %v5673 = vor.u32 %v5669, %v5672
      %v5674 = vrot.slane %v5673, 4
      %v5676 = vshll.u32 %v5548, 16
      %v5678 = vrot.slane %v5676, 5
      %v5679 = vsel %vm283, %v5674, %v5678
      %v5680 = vshrl.u32 %v5548, 16
      %v5682 = vrot.slane %v5680, 4
      %v5683 = vor.u32 %v5682, %v5678
      %v5684 = vrot.slane %v5683, 4
      %v5686 = vshll.u32 %v5549, 16
      %v5688 = vrot.slane %v5686, 5
      %v5689 = vsel %vm283, %v5684, %v5688
      %v5690 = vshrl.u32 %v5549, 16
      %v5692 = vrot.slane %v5690, 4
      %v5693 = vor.u32 %v5692, %v5688
      %v5694 = vrot.slane %v5693, 4
      %v5696 = vshll.u32 %v5550, 16
      %v5698 = vrot.slane %v5696, 5
      %v5699 = vsel %vm283, %v5694, %v5698
      %v5700 = vshrl.u32 %v5550, 16
      %v5702 = vrot.slane %v5700, 4
      %v5703 = vor.u32 %v5702, %v5698
      %v5704 = vrot.slane %v5703, 4
      %v5706 = vshll.u32 %v5551, 16
      %v5708 = vrot.slane %v5706, 5
      %v5709 = vsel %vm283, %v5704, %v5708
      %v5711 = vshrl.u32 %v5552, 16
      %v5713 = vrot.slane %v5711, 4
      %v5714 = vshll.u32 %v5552, 16
      %v5716 = vrot.slane %v5714, 5
      %v5717 = vor.u32 %v5713, %v5716
      %v5718 = vrot.slane %v5717, 4
      %v5720 = vshll.u32 %v5553, 16
      %v5722 = vrot.slane %v5720, 5
      %v5723 = vsel %vm283, %v5718, %v5722
      %v5724 = vshrl.u32 %v5553, 16
      %v5726 = vrot.slane %v5724, 4
      %v5727 = vor.u32 %v5726, %v5722
      %v5728 = vrot.slane %v5727, 4
      %v5730 = vshll.u32 %v5554, 16
      %v5732 = vrot.slane %v5730, 5
      %v5733 = vsel %vm283, %v5728, %v5732
      %v5734 = vshrl.u32 %v5554, 16
      %v5736 = vrot.slane %v5734, 4
      %v5737 = vor.u32 %v5736, %v5732
      %v5738 = vrot.slane %v5737, 4
      %v5740 = vshll.u32 %v5555, 16
      %v5742 = vrot.slane %v5740, 5
      %v5743 = vsel %vm283, %v5738, %v5742
      %v5744 = vshrl.u32 %v5555, 16
      %v5746 = vrot.slane %v5744, 4
      %v5747 = vor.u32 %v5746, %v5742
      %v5748 = vrot.slane %v5747, 4
      %v5750 = vshll.u32 %v5556, 16
      %v5752 = vrot.slane %v5750, 5
      %v5753 = vsel %vm283, %v5748, %v5752
      %v5755 = vshrl.u32 %v5557, 16
      %v5757 = vrot.slane %v5755, 4
      %v5758 = vshll.u32 %v5557, 16
      %v5760 = vrot.slane %v5758, 5
      %v5761 = vor.u32 %v5757, %v5760
      %v5762 = vrot.slane %v5761, 4
      %v5764 = vshll.u32 %v5558, 16
      %v5766 = vrot.slane %v5764, 5
      %v5767 = vsel %vm283, %v5762, %v5766
      %v5768 = vshrl.u32 %v5558, 16
      %v5770 = vrot.slane %v5768, 4
      %v5771 = vor.u32 %v5770, %v5766
      %v5772 = vrot.slane %v5771, 4
      %v5774 = vshll.u32 %v5559, 16
      %v5776 = vrot.slane %v5774, 5
      %v5777 = vsel %vm283, %v5772, %v5776
      %v5778 = vshrl.u32 %v5559, 16
      %v5780 = vrot.slane %v5778, 4
      %v5781 = vor.u32 %v5780, %v5776
      %v5782 = vrot.slane %v5781, 4
      %v5784 = vshll.u32 %v5560, 16
      %v5786 = vrot.slane %v5784, 5
      %v5787 = vsel %vm283, %v5782, %v5786
      %v5788 = vshrl.u32 %v5560, 16
      %v5790 = vrot.slane %v5788, 4
      %v5791 = vor.u32 %v5790, %v5786
      %v5792 = vrot.slane %v5791, 4
      %v5794 = vshll.u32 %v5561, 16
      %v5796 = vrot.slane %v5794, 5
      %v5797 = vsel %vm283, %v5792, %v5796
      %v5799 = vshrl.u32 %v5562, 16
      %v5801 = vrot.slane %v5799, 4
      %v5802 = vshll.u32 %v5562, 16
      %v5804 = vrot.slane %v5802, 5
      %v5805 = vor.u32 %v5801, %v5804
      %v5806 = vrot.slane %v5805, 4
      %v5808 = vshll.u32 %v5563, 16
      %v5810 = vrot.slane %v5808, 5
      %v5811 = vsel %vm283, %v5806, %v5810
      %v5812 = vshrl.u32 %v5563, 16
      %v5814 = vrot.slane %v5812, 4
      %v5815 = vor.u32 %v5814, %v5810
      %v5816 = vrot.slane %v5815, 4
      %v5818 = vshll.u32 %v5564, 16
      %v5820 = vrot.slane %v5818, 5
      %v5821 = vsel %vm283, %v5816, %v5820
      %v5822 = vshrl.u32 %v5564, 16
      %v5824 = vrot.slane %v5822, 4
      %v5825 = vor.u32 %v5824, %v5820
      %v5826 = vrot.slane %v5825, 4
      %v5828 = vshll.u32 %v5565, 16
      %v5830 = vrot.slane %v5828, 5
      %v5831 = vsel %vm283, %v5826, %v5830
      %v5832 = vshrl.u32 %v5565, 16
      %v5834 = vrot.slane %v5832, 4
      %v5835 = vor.u32 %v5834, %v5830
      %v5836 = vrot.slane %v5835, 4
      %v5838 = vshll.u32 %v5566, 16
      %v5840 = vrot.slane %v5838, 5
      %v5841 = vsel %vm283, %v5836, %v5840
      %v5843 = vshrl.u32 %v5567, 16
      %v5845 = vrot.slane %v5843, 4
      %v5846 = vshll.u32 %v5567, 16
      %v5848 = vrot.slane %v5846, 5
      %v5849 = vor.u32 %v5845, %v5848
      %v5850 = vrot.slane %v5849, 4
      %v5852 = vshll.u32 %v5568, 16
      %v5854 = vrot.slane %v5852, 5
      %v5855 = vsel %vm283, %v5850, %v5854
      %v5856 = vshrl.u32 %v5568, 16
      %v5858 = vrot.slane %v5856, 4
      %v5859 = vor.u32 %v5858, %v5854
      %v5860 = vrot.slane %v5859, 4
      %v5862 = vshll.u32 %v5569, 16
      %v5864 = vrot.slane %v5862, 5
      %v5865 = vsel %vm283, %v5860, %v5864
      %v5866 = vshrl.u32 %v5569, 16
      %v5868 = vrot.slane %v5866, 4
      %v5869 = vor.u32 %v5868, %v5864
      %v5870 = vrot.slane %v5869, 4
      %v5872 = vshll.u32 %v5570, 16
      %v5874 = vrot.slane %v5872, 5
      %v5875 = vsel %vm283, %v5870, %v5874
      %v5876 = vshrl.u32 %v5570, 16
      %v5878 = vrot.slane %v5876, 4
      %v5879 = vor.u32 %v5878, %v5874
      %v5880 = vrot.slane %v5879, 4
      %v5882 = vshll.u32 %v5571, 16
      %v5884 = vrot.slane %v5882, 5
      %v5885 = vsel %vm283, %v5880, %v5884
      %v5887 = vshrl.u32 %v5572, 16
      %v5889 = vrot.slane %v5887, 4
      %v5890 = vshll.u32 %v5572, 16
      %v5892 = vrot.slane %v5890, 5
      %v5893 = vor.u32 %v5889, %v5892
      %v5894 = vrot.slane %v5893, 4
      %v5896 = vshll.u32 %v5573, 16
      %v5898 = vrot.slane %v5896, 5
      %v5899 = vsel %vm283, %v5894, %v5898
      %v5900 = vshrl.u32 %v5573, 16
      %v5902 = vrot.slane %v5900, 4
      %v5903 = vor.u32 %v5902, %v5898
      %v5904 = vrot.slane %v5903, 4
      %v5906 = vshll.u32 %v5574, 16
      %v5908 = vrot.slane %v5906, 5
      %v5909 = vsel %vm283, %v5904, %v5908
      %v5910 = vshrl.u32 %v5574, 16
      %v5912 = vrot.slane %v5910, 4
      %v5913 = vor.u32 %v5912, %v5908
      %v5914 = vrot.slane %v5913, 4
      %v5916 = vshll.u32 %v5575, 16
      %v5918 = vrot.slane %v5916, 5
      %v5919 = vsel %vm283, %v5914, %v5918
      %v5920 = vshrl.u32 %v5575, 16
      %v5922 = vrot.slane %v5920, 4
      %v5923 = vor.u32 %v5922, %v5918
      %v5924 = vrot.slane %v5923, 4
      %v5926 = vshll.u32 %v5576, 16
      %v5928 = vrot.slane %v5926, 5
      %v5929 = vsel %vm283, %v5924, %v5928
      %v5931 = vshrl.u32 %v5577, 16
      %v5933 = vrot.slane %v5931, 4
      %v5934 = vshll.u32 %v5577, 16
      %v5936 = vrot.slane %v5934, 5
      %v5937 = vor.u32 %v5933, %v5936
      %v5938 = vrot.slane %v5937, 4
      %v5940 = vshll.u32 %v5578, 16
      %v5942 = vrot.slane %v5940, 5
      %v5943 = vsel %vm283, %v5938, %v5942
      %v5944 = vshrl.u32 %v5578, 16
      %v5946 = vrot.slane %v5944, 4
      %v5947 = vor.u32 %v5946, %v5942
      %v5948 = vrot.slane %v5947, 4
      %v5950 = vshll.u32 %v5579, 16
      %v5952 = vrot.slane %v5950, 5
      %v5953 = vsel %vm283, %v5948, %v5952
      %v5954 = vshrl.u32 %v5579, 16
      %v5956 = vrot.slane %v5954, 4
      %v5957 = vor.u32 %v5956, %v5952
      %v5958 = vrot.slane %v5957, 4
      %v5960 = vshll.u32 %v5580, 16
      %v5962 = vrot.slane %v5960, 5
      %v5963 = vsel %vm283, %v5958, %v5962
      %v5964 = vshrl.u32 %v5580, 16
      %v5966 = vrot.slane %v5964, 4
      %v5967 = vor.u32 %v5966, %v5962
      %v5968 = vrot.slane %v5967, 4
      %v5970 = vshll.u32 %v5581, 16
      %v5972 = vrot.slane %v5970, 5
      %v5973 = vsel %vm283, %v5968, %v5972
      %v5975 = vshrl.u32 %v5582, 16
      %v5977 = vrot.slane %v5975, 4
      %v5978 = vshll.u32 %v5582, 16
      %v5980 = vrot.slane %v5978, 5
      %v5981 = vor.u32 %v5977, %v5980
      %v5982 = vrot.slane %v5981, 4
      %v5984 = vshll.u32 %v5583, 16
      %v5986 = vrot.slane %v5984, 5
      %v5987 = vsel %vm283, %v5982, %v5986
      %v5988 = vshrl.u32 %v5583, 16
      %v5990 = vrot.slane %v5988, 4
      %v5991 = vor.u32 %v5990, %v5986
      %v5992 = vrot.slane %v5991, 4
      %v5994 = vshll.u32 %v5584, 16
      %v5996 = vrot.slane %v5994, 5
      %v5997 = vsel %vm283, %v5992, %v5996
      %v5998 = vshrl.u32 %v5584, 16
      %v6000 = vrot.slane %v5998, 4
      %v6001 = vor.u32 %v6000, %v5996
      %v6002 = vrot.slane %v6001, 4
      %v6004 = vshll.u32 %v5585, 16
      %v6006 = vrot.slane %v6004, 5
      %v6007 = vsel %vm283, %v6002, %v6006
      %v6008 = vshrl.u32 %v5585, 16
      %v6010 = vrot.slane %v6008, 4
      %v6011 = vor.u32 %v6010, %v6006
      %v6012 = vrot.slane %v6011, 4
      %v6014 = vshll.u32 %v5586, 16
      %v6016 = vrot.slane %v6014, 5
      %v6017 = vsel %vm283, %v6012, %v6016
      %v6019 = vshrl.u32 %v5587, 16
      %v6021 = vrot.slane %v6019, 4
      %v6022 = vshll.u32 %v5587, 16
      %v6024 = vrot.slane %v6022, 5
      %v6025 = vor.u32 %v6021, %v6024
      %v6026 = vrot.slane %v6025, 4
      %v6028 = vshll.u32 %v5588, 16
      %v6030 = vrot.slane %v6028, 5
      %v6031 = vsel %vm283, %v6026, %v6030
      %v6032 = vshrl.u32 %v5588, 16
      %v6034 = vrot.slane %v6032, 4
      %v6035 = vor.u32 %v6034, %v6030
      %v6036 = vrot.slane %v6035, 4
      %v6038 = vshll.u32 %v5589, 16
      %v6040 = vrot.slane %v6038, 5
      %v6041 = vsel %vm283, %v6036, %v6040
      %v6042 = vshrl.u32 %v5589, 16
      %v6044 = vrot.slane %v6042, 4
      %v6045 = vor.u32 %v6044, %v6040
      %v6046 = vrot.slane %v6045, 4
      %v6048 = vshll.u32 %v5590, 16
      %v6050 = vrot.slane %v6048, 5
      %v6051 = vsel %vm283, %v6046, %v6050
      %v6052 = vshrl.u32 %v5590, 16
      %v6054 = vrot.slane %v6052, 4
      %v6055 = vor.u32 %v6054, %v6050
      %v6056 = vrot.slane %v6055, 4
      %v6058 = vshll.u32 %v5591, 16
      %v6060 = vrot.slane %v6058, 5
      %v6061 = vsel %vm283, %v6056, %v6060
      %v6063 = vshrl.u32 %v5592, 16
      %v6065 = vrot.slane %v6063, 4
      %v6066 = vshll.u32 %v5592, 16
      %v6068 = vrot.slane %v6066, 5
      %v6069 = vor.u32 %v6065, %v6068
      %v6070 = vrot.slane %v6069, 4
      %v6072 = vshll.u32 %v5593, 16
      %v6074 = vrot.slane %v6072, 5
      %v6075 = vsel %vm283, %v6070, %v6074
      %v6076 = vshrl.u32 %v5593, 16
      %v6078 = vrot.slane %v6076, 4
      %v6079 = vor.u32 %v6078, %v6074
      %v6080 = vrot.slane %v6079, 4
      %v6082 = vshll.u32 %v5594, 16
      %v6084 = vrot.slane %v6082, 5
      %v6085 = vsel %vm283, %v6080, %v6084
      %v6086 = vshrl.u32 %v5594, 16
      %v6088 = vrot.slane %v6086, 4
      %v6089 = vor.u32 %v6088, %v6084
      %v6090 = vrot.slane %v6089, 4
      %v6092 = vshll.u32 %v5595, 16
      %v6094 = vrot.slane %v6092, 5
      %v6095 = vsel %vm283, %v6090, %v6094
      %v6096 = vshrl.u32 %v5595, 16
      %v6098 = vrot.slane %v6096, 4
      %v6099 = vor.u32 %v6098, %v6094
      %v6100 = vrot.slane %v6099, 4
      %v6102 = vshll.u32 %v5596, 16
      %v6104 = vrot.slane %v6102, 5
      %v6105 = vsel %vm283, %v6100, %v6104
      %v6107 = vshrl.u32 %v5597, 16
      %v6109 = vrot.slane %v6107, 4
      %v6110 = vshll.u32 %v5597, 16
      %v6112 = vrot.slane %v6110, 5
      %v6113 = vor.u32 %v6109, %v6112
      %v6114 = vrot.slane %v6113, 4
      %v6116 = vshll.u32 %v5598, 16
      %v6118 = vrot.slane %v6116, 5
      %v6119 = vsel %vm283, %v6114, %v6118
      %v6120 = vshrl.u32 %v5598, 16
      %v6122 = vrot.slane %v6120, 4
      %v6123 = vor.u32 %v6122, %v6118
      %v6124 = vrot.slane %v6123, 4
      %v6126 = vshll.u32 %v5599, 16
      %v6128 = vrot.slane %v6126, 5
      %v6129 = vsel %vm283, %v6124, %v6128
      %v6130 = vshrl.u32 %v5599, 16
      %v6132 = vrot.slane %v6130, 4
      %v6133 = vor.u32 %v6132, %v6128
      %v6134 = vrot.slane %v6133, 4
      %v6136 = vshll.u32 %v5600, 16
      %v6138 = vrot.slane %v6136, 5
      %v6139 = vsel %vm283, %v6134, %v6138
      %v6140 = vshrl.u32 %v5600, 16
      %v6142 = vrot.slane %v6140, 4
      %v6143 = vor.u32 %v6142, %v6138
      %v6144 = vrot.slane %v6143, 4
      %v6146 = vshll.u32 %v5601, 16
      %v6148 = vrot.slane %v6146, 5
      %v6149 = vsel %vm283, %v6144, %v6148
      %v6151 = vshrl.u32 %v5602, 16
      %v6153 = vrot.slane %v6151, 4
      %v6154 = vshll.u32 %v5602, 16
      %v6156 = vrot.slane %v6154, 5
      %v6157 = vor.u32 %v6153, %v6156
      %v6158 = vrot.slane %v6157, 4
      %v6160 = vshll.u32 %v5603, 16
      %v6162 = vrot.slane %v6160, 5
      %v6163 = vsel %vm283, %v6158, %v6162
      %v6164 = vshrl.u32 %v5603, 16
      %v6166 = vrot.slane %v6164, 4
      %v6167 = vor.u32 %v6166, %v6162
      %v6168 = vrot.slane %v6167, 4
      %v6170 = vshll.u32 %v5604, 16
      %v6172 = vrot.slane %v6170, 5
      %v6173 = vsel %vm283, %v6168, %v6172
      %v6174 = vshrl.u32 %v5604, 16
      %v6176 = vrot.slane %v6174, 4
      %v6177 = vor.u32 %v6176, %v6172
      %v6178 = vrot.slane %v6177, 4
      %v6180 = vshll.u32 %v5605, 16
      %v6182 = vrot.slane %v6180, 5
      %v6183 = vsel %vm283, %v6178, %v6182
      %v6184 = vshrl.u32 %v5605, 16
      %v6186 = vrot.slane %v6184, 4
      %v6187 = vor.u32 %v6186, %v6182
      %v6188 = vrot.slane %v6187, 4
      %v6190 = vshll.u32 %v5606, 16
      %v6192 = vrot.slane %v6190, 5
      %v6193 = vsel %vm283, %v6188, %v6192
      %v6195 = vshrl.u32 %v5607, 16
      %v6197 = vrot.slane %v6195, 4
      %v6198 = vshll.u32 %v5607, 16
      %v6200 = vrot.slane %v6198, 5
      %v6201 = vor.u32 %v6197, %v6200
      %v6202 = vrot.slane %v6201, 4
      %v6204 = vshll.u32 %v5608, 16
      %v6206 = vrot.slane %v6204, 5
      %v6207 = vsel %vm283, %v6202, %v6206
      %v6208 = vshrl.u32 %v5608, 16
      %v6210 = vrot.slane %v6208, 4
      %v6211 = vor.u32 %v6210, %v6206
      %v6212 = vrot.slane %v6211, 4
      %v6214 = vshll.u32 %v5609, 16
      %v6216 = vrot.slane %v6214, 5
      %v6217 = vsel %vm283, %v6212, %v6216
      %v6218 = vshrl.u32 %v5609, 16
      %v6220 = vrot.slane %v6218, 4
      %v6221 = vor.u32 %v6220, %v6216
      %v6222 = vrot.slane %v6221, 4
      %v6224 = vshll.u32 %v5610, 16
      %v6226 = vrot.slane %v6224, 5
      %v6227 = vsel %vm283, %v6222, %v6226
      %v6228 = vshrl.u32 %v5610, 16
      %v6230 = vrot.slane %v6228, 4
      %v6231 = vor.u32 %v6230, %v6226
      %v6232 = vrot.slane %v6231, 4
      %v6234 = vshll.u32 %v5611, 16
      %v6236 = vrot.slane %v6234, 5
      %v6237 = vsel %vm283, %v6232, %v6236
      %v6239 = vshrl.u32 %v5612, 16
      %v6241 = vrot.slane %v6239, 4
      %v6242 = vshll.u32 %v5612, 16
      %v6244 = vrot.slane %v6242, 5
      %v6245 = vor.u32 %v6241, %v6244
      %v6246 = vrot.slane %v6245, 4
      %v6248 = vshll.u32 %v5613, 16
      %v6250 = vrot.slane %v6248, 5
      %v6251 = vsel %vm283, %v6246, %v6250
      %v6252 = vshrl.u32 %v5613, 16
      %v6254 = vrot.slane %v6252, 4
      %v6255 = vor.u32 %v6254, %v6250
      %v6256 = vrot.slane %v6255, 4
      %v6258 = vshll.u32 %v5614, 16
      %v6260 = vrot.slane %v6258, 5
      %v6261 = vsel %vm283, %v6256, %v6260
      %v6262 = vshrl.u32 %v5614, 16
      %v6264 = vrot.slane %v6262, 4
      %v6265 = vor.u32 %v6264, %v6260
      %v6266 = vrot.slane %v6265, 4
      %v6268 = vshll.u32 %v5615, 16
      %v6270 = vrot.slane %v6268, 5
      %v6271 = vsel %vm283, %v6266, %v6270
      %v6272 = vshrl.u32 %v5615, 16
      %v6274 = vrot.slane %v6272, 4
      %v6275 = vor.u32 %v6274, %v6270
      %v6276 = vrot.slane %v6275, 4
      %v6278 = vshll.u32 %v5616, 16
      %v6280 = vrot.slane %v6278, 5
      %v6281 = vsel %vm283, %v6276, %v6280
      %v6283 = vshrl.u32 %v5617, 16
      %v6285 = vrot.slane %v6283, 4
      %v6286 = vshll.u32 %v5617, 16
      %v6288 = vrot.slane %v6286, 5
      %v6289 = vor.u32 %v6285, %v6288
      %v6290 = vrot.slane %v6289, 4
      %v6292 = vshll.u32 %v5618, 16
      %v6294 = vrot.slane %v6292, 5
      %v6295 = vsel %vm283, %v6290, %v6294
      %v6296 = vshrl.u32 %v5618, 16
      %v6298 = vrot.slane %v6296, 4
      %v6299 = vor.u32 %v6298, %v6294
      %v6300 = vrot.slane %v6299, 4
      %v6302 = vshll.u32 %v5619, 16
      %v6304 = vrot.slane %v6302, 5
      %v6305 = vsel %vm283, %v6300, %v6304
      %v6306 = vshrl.u32 %v5619, 16
      %v6308 = vrot.slane %v6306, 4
      %v6309 = vor.u32 %v6308, %v6304
      %v6310 = vrot.slane %v6309, 4
      %v6312 = vshll.u32 %v5620, 16
      %v6314 = vrot.slane %v6312, 5
      %v6315 = vsel %vm283, %v6310, %v6314
      %v6316 = vshrl.u32 %v5620, 16
      %v6318 = vrot.slane %v6316, 4
      %v6319 = vor.u32 %v6318, %v6314
      %v6320 = vrot.slane %v6319, 4
      %v6322 = vshll.u32 %v5621, 16
      %v6324 = vrot.slane %v6322, 5
      %v6325 = vsel %vm283, %v6320, %v6324
      %s6326 = scalar_lea.vmem %s1, 14
      %v6327 = vld [vmem:[%s6326] sm:$0x3]
      %v6328 = vunpack.c.l.b16 %v5635
      %v6329 = vunpack.c.l.b16 %v5645
      %v6330 = vunpack.c.l.b16 %v5655
      %v6331 = vunpack.c.l.b16 %v5665
      %v6332 = vunpack.c.l.b16 %v5679
      %v6333 = vunpack.c.l.b16 %v5689
      %v6334 = vunpack.c.l.b16 %v5699
      %v6335 = vunpack.c.l.b16 %v5709
      %v6336 = vunpack.c.l.b16 %v5723
      %v6337 = vunpack.c.l.b16 %v5733
      %v6338 = vunpack.c.l.b16 %v5743
      %v6339 = vunpack.c.l.b16 %v5753
      %v6340 = vunpack.c.l.b16 %v5767
      %v6341 = vunpack.c.l.b16 %v5777
      %v6342 = vunpack.c.l.b16 %v5787
      %v6343 = vunpack.c.l.b16 %v5797
      %v6344 = vunpack.c.l.b16 %v5811
      %v6345 = vunpack.c.l.b16 %v5821
      %v6346 = vunpack.c.l.b16 %v5831
      %v6347 = vunpack.c.l.b16 %v5841
      %v6348 = vunpack.c.l.b16 %v5855
      %v6349 = vunpack.c.l.b16 %v5865
      %v6350 = vunpack.c.l.b16 %v5875
      %v6351 = vunpack.c.l.b16 %v5885
      %v6352 = vunpack.c.l.b16 %v5899
      %v6353 = vunpack.c.l.b16 %v5909
      %v6354 = vunpack.c.l.b16 %v5919
      %v6355 = vunpack.c.l.b16 %v5929
      %v6356 = vunpack.c.l.b16 %v5943
      %v6357 = vunpack.c.l.b16 %v5953
      %v6358 = vunpack.c.l.b16 %v5963
      %v6359 = vunpack.c.l.b16 %v5973
      %v6360 = vunpack.c.l.b16 %v5987
      %v6361 = vunpack.c.l.b16 %v5997
      %v6362 = vunpack.c.l.b16 %v6007
      %v6363 = vunpack.c.l.b16 %v6017
      %v6364 = vunpack.c.l.b16 %v6031
      %v6365 = vunpack.c.l.b16 %v6041
      %v6366 = vunpack.c.l.b16 %v6051
      %v6367 = vunpack.c.l.b16 %v6061
      %v6368 = vunpack.c.l.b16 %v6075
      %v6369 = vunpack.c.l.b16 %v6085
      %v6370 = vunpack.c.l.b16 %v6095
      %v6371 = vunpack.c.l.b16 %v6105
      %v6372 = vunpack.c.l.b16 %v6119
      %v6373 = vunpack.c.l.b16 %v6129
      %v6374 = vunpack.c.l.b16 %v6139
      %v6375 = vunpack.c.l.b16 %v6149
      %v6376 = vunpack.c.l.b16 %v6163
      %v6377 = vunpack.c.l.b16 %v6173
      %v6378 = vunpack.c.l.b16 %v6183
      %v6379 = vunpack.c.l.b16 %v6193
      %v6380 = vunpack.c.l.b16 %v6207
      %v6381 = vunpack.c.l.b16 %v6217
      %v6382 = vunpack.c.l.b16 %v6227
      %v6383 = vunpack.c.l.b16 %v6237
      %v6384 = vunpack.c.l.b16 %v6251
      %v6385 = vunpack.c.l.b16 %v6261
      %v6386 = vunpack.c.l.b16 %v6271
      %v6387 = vunpack.c.l.b16 %v6281
      %v6388 = vunpack.c.l.b16 %v6295
      %v6389 = vunpack.c.l.b16 %v6305
      %v6390 = vunpack.c.l.b16 %v6315
      %v6391 = vunpack.c.l.b16 %v6325
      %v6392 = vpack.c.b16 %v6329, %v6328
      %v6393 = vpack.c.b16 %v6331, %v6330
      %v6394 = vpack.c.b16 %v6333, %v6332
      %v6395 = vpack.c.b16 %v6335, %v6334
      %v6396 = vpack.c.b16 %v6337, %v6336
      %v6397 = vpack.c.b16 %v6339, %v6338
      %v6398 = vpack.c.b16 %v6341, %v6340
      %v6399 = vpack.c.b16 %v6343, %v6342
      %v6400 = vpack.c.b16 %v6345, %v6344
      %v6401 = vpack.c.b16 %v6347, %v6346
      %v6402 = vpack.c.b16 %v6349, %v6348
      %v6403 = vpack.c.b16 %v6351, %v6350
      %v6404 = vpack.c.b16 %v6353, %v6352
      %v6405 = vpack.c.b16 %v6355, %v6354
      %v6406 = vpack.c.b16 %v6357, %v6356
      %v6407 = vpack.c.b16 %v6359, %v6358
      %v6408 = vpack.c.b16 %v6361, %v6360
      %v6409 = vpack.c.b16 %v6363, %v6362
      %v6410 = vpack.c.b16 %v6365, %v6364
      %v6411 = vpack.c.b16 %v6367, %v6366
      %v6412 = vpack.c.b16 %v6369, %v6368
      %v6413 = vpack.c.b16 %v6371, %v6370
      %v6414 = vpack.c.b16 %v6373, %v6372
      %v6415 = vpack.c.b16 %v6375, %v6374
      %v6416 = vpack.c.b16 %v6377, %v6376
      %v6417 = vpack.c.b16 %v6379, %v6378
      %v6418 = vpack.c.b16 %v6381, %v6380
      %v6419 = vpack.c.b16 %v6383, %v6382
      %v6420 = vpack.c.b16 %v6385, %v6384
      %v6421 = vpack.c.b16 %v6387, %v6386
      %v6422 = vpack.c.b16 %v6389, %v6388
      %v6423 = vpack.c.b16 %v6391, %v6390
      %v6425 = vsel %vm1086, %v6392, 0
      %v6428 = vsel %vm1086, %v6393, 0
      %v6431 = vsel %vm1086, %v6394, 0
      %v6434 = vsel %vm1086, %v6395, 0
      %v6437 = vsel %vm1086, %v6396, 0
      %v6440 = vsel %vm1086, %v6397, 0
      %v6443 = vsel %vm1086, %v6398, 0
      %v6446 = vsel %vm1086, %v6399, 0
      %v6449 = vsel %vm1086, %v6400, 0
      %v6452 = vsel %vm1086, %v6401, 0
      %v6455 = vsel %vm1086, %v6402, 0
      %v6458 = vsel %vm1086, %v6403, 0
      %v6461 = vsel %vm1086, %v6404, 0
      %v6464 = vsel %vm1086, %v6405, 0
      %v6467 = vsel %vm1086, %v6406, 0
      %v6470 = vsel %vm1086, %v6407, 0
      %v6473 = vsel %vm1086, %v6408, 0
      %v6476 = vsel %vm1086, %v6409, 0
      %v6479 = vsel %vm1086, %v6410, 0
      %v6482 = vsel %vm1086, %v6411, 0
      %v6485 = vsel %vm1086, %v6412, 0
      %v6488 = vsel %vm1086, %v6413, 0
      %v6491 = vsel %vm1086, %v6414, 0
      %v6494 = vsel %vm1086, %v6415, 0
      %v6497 = vsel %vm1086, %v6416, 0
      %v6500 = vsel %vm1086, %v6417, 0
      %v6503 = vsel %vm1086, %v6418, 0
      %v6506 = vsel %vm1086, %v6419, 0
      %v6509 = vsel %vm1086, %v6420, 0
      %v6512 = vsel %vm1086, %v6421, 0
      %v6515 = vsel %vm1086, %v6422, 0
      %v6518 = vsel %vm1086, %v6423, 0
      %v6521 = vand.u32 %v6327, %v1186
      %6523 = vmatpush.bf16.msra.mxu0 0
      %6524 = vmatpush.bf16.msra.mxu0 0
      %6525 = vmatpush.bf16.msra.mxu0 0
      %6526 = vmatpush.bf16.msra.mxu0 0
      %6527 = vmatpush.bf16.msra.mxu0 0
      %6528 = vmatpush.bf16.msra.mxu0 0
      %6529 = vmatpush.bf16.msra.mxu0 0
      %6530 = vmatpush.bf16.msra.mxu0 %v6521
      %6531 = vmatmul.bf16.gmra.mxu0 %v6425
      %v6532 = vpop.f32.mrf.mxu0
      %v6533 = vadd.f32 0.0, %v6532
      %v6534 = vpop.f32.mrf.mxu0
      %v6535 = vadd.f32 0.0, %v6534
      %6536 = vmatmul.bf16.gmra.mxu0 %v6428
      %v6537 = vpop.f32.mrf.mxu0
      %v6538 = vadd.f32 0.0, %v6537
      %v6539 = vpop.f32.mrf.mxu0
      %v6540 = vadd.f32 0.0, %v6539
      %6541 = vmatmul.bf16.gmra.mxu0 %v6431
      %v6542 = vpop.f32.mrf.mxu0
      %v6543 = vadd.f32 0.0, %v6542
      %v6544 = vpop.f32.mrf.mxu0
      %v6545 = vadd.f32 0.0, %v6544
      %6546 = vmatmul.bf16.gmra.mxu0 %v6434
      %v6547 = vpop.f32.mrf.mxu0
      %v6548 = vadd.f32 0.0, %v6547
      %v6549 = vpop.f32.mrf.mxu0
      %v6550 = vadd.f32 0.0, %v6549
      %6551 = vmatmul.bf16.gmra.mxu0 %v6437
      %v6552 = vpop.f32.mrf.mxu0
      %v6553 = vadd.f32 0.0, %v6552
      %v6554 = vpop.f32.mrf.mxu0
      %v6555 = vadd.f32 0.0, %v6554
      %6556 = vmatmul.bf16.gmra.mxu0 %v6440
      %v6557 = vpop.f32.mrf.mxu0
      %v6558 = vadd.f32 0.0, %v6557
      %v6559 = vpop.f32.mrf.mxu0
      %v6560 = vadd.f32 0.0, %v6559
      %6561 = vmatmul.bf16.gmra.mxu0 %v6443
      %v6562 = vpop.f32.mrf.mxu0
      %v6563 = vadd.f32 0.0, %v6562
      %v6564 = vpop.f32.mrf.mxu0
      %v6565 = vadd.f32 0.0, %v6564
      %6566 = vmatmul.bf16.gmra.mxu0 %v6446
      %v6567 = vpop.f32.mrf.mxu0
      %v6568 = vadd.f32 0.0, %v6567
      %v6569 = vpop.f32.mrf.mxu0
      %v6570 = vadd.f32 0.0, %v6569
      %6571 = vmatmul.bf16.gmra.mxu0 %v6449
      %v6572 = vpop.f32.mrf.mxu0
      %v6573 = vadd.f32 0.0, %v6572
      %v6574 = vpop.f32.mrf.mxu0
      %v6575 = vadd.f32 0.0, %v6574
      %6576 = vmatmul.bf16.gmra.mxu0 %v6452
      %v6577 = vpop.f32.mrf.mxu0
      %v6578 = vadd.f32 0.0, %v6577
      %v6579 = vpop.f32.mrf.mxu0
      %v6580 = vadd.f32 0.0, %v6579
      %6581 = vmatmul.bf16.gmra.mxu0 %v6455
      %v6582 = vpop.f32.mrf.mxu0
      %v6583 = vadd.f32 0.0, %v6582
      %v6584 = vpop.f32.mrf.mxu0
      %v6585 = vadd.f32 0.0, %v6584
      %6586 = vmatmul.bf16.gmra.mxu0 %v6458
      %v6587 = vpop.f32.mrf.mxu0
      %v6588 = vadd.f32 0.0, %v6587
      %v6589 = vpop.f32.mrf.mxu0
      %v6590 = vadd.f32 0.0, %v6589
      %6591 = vmatmul.bf16.gmra.mxu0 %v6461
      %v6592 = vpop.f32.mrf.mxu0
      %v6593 = vadd.f32 0.0, %v6592
      %v6594 = vpop.f32.mrf.mxu0
      %v6595 = vadd.f32 0.0, %v6594
      %6596 = vmatmul.bf16.gmra.mxu0 %v6464
      %v6597 = vpop.f32.mrf.mxu0
      %v6598 = vadd.f32 0.0, %v6597
      %v6599 = vpop.f32.mrf.mxu0
      %v6600 = vadd.f32 0.0, %v6599
      %6601 = vmatmul.bf16.gmra.mxu0 %v6467
      %v6602 = vpop.f32.mrf.mxu0
      %v6603 = vadd.f32 0.0, %v6602
      %v6604 = vpop.f32.mrf.mxu0
      %v6605 = vadd.f32 0.0, %v6604
      %6606 = vmatmul.bf16.gmra.mxu0 %v6470
      %v6607 = vpop.f32.mrf.mxu0
      %v6608 = vadd.f32 0.0, %v6607
      %v6609 = vpop.f32.mrf.mxu0
      %v6610 = vadd.f32 0.0, %v6609
      %6611 = vmatmul.bf16.gmra.mxu0 %v6473
      %v6612 = vpop.f32.mrf.mxu0
      %v6613 = vadd.f32 0.0, %v6612
      %v6614 = vpop.f32.mrf.mxu0
      %v6615 = vadd.f32 0.0, %v6614
      %6616 = vmatmul.bf16.gmra.mxu0 %v6476
      %v6617 = vpop.f32.mrf.mxu0
      %v6618 = vadd.f32 0.0, %v6617
      %v6619 = vpop.f32.mrf.mxu0
      %v6620 = vadd.f32 0.0, %v6619
      %6621 = vmatmul.bf16.gmra.mxu0 %v6479
      %v6622 = vpop.f32.mrf.mxu0
      %v6623 = vadd.f32 0.0, %v6622
      %v6624 = vpop.f32.mrf.mxu0
      %v6625 = vadd.f32 0.0, %v6624
      %6626 = vmatmul.bf16.gmra.mxu0 %v6482
      %v6627 = vpop.f32.mrf.mxu0
      %v6628 = vadd.f32 0.0, %v6627
      %v6629 = vpop.f32.mrf.mxu0
      %v6630 = vadd.f32 0.0, %v6629
      %6631 = vmatmul.bf16.gmra.mxu0 %v6485
      %v6632 = vpop.f32.mrf.mxu0
      %v6633 = vadd.f32 0.0, %v6632
      %v6634 = vpop.f32.mrf.mxu0
      %v6635 = vadd.f32 0.0, %v6634
      %6636 = vmatmul.bf16.gmra.mxu0 %v6488
      %v6637 = vpop.f32.mrf.mxu0
      %v6638 = vadd.f32 0.0, %v6637
      %v6639 = vpop.f32.mrf.mxu0
      %v6640 = vadd.f32 0.0, %v6639
      %6641 = vmatmul.bf16.gmra.mxu0 %v6491
      %v6642 = vpop.f32.mrf.mxu0
      %v6643 = vadd.f32 0.0, %v6642
      %v6644 = vpop.f32.mrf.mxu0
      %v6645 = vadd.f32 0.0, %v6644
      %6646 = vmatmul.bf16.gmra.mxu0 %v6494
      %v6647 = vpop.f32.mrf.mxu0
      %v6648 = vadd.f32 0.0, %v6647
      %v6649 = vpop.f32.mrf.mxu0
      %v6650 = vadd.f32 0.0, %v6649
      %6651 = vmatmul.bf16.gmra.mxu0 %v6497
      %v6652 = vpop.f32.mrf.mxu0
      %v6653 = vadd.f32 0.0, %v6652
      %v6654 = vpop.f32.mrf.mxu0
      %v6655 = vadd.f32 0.0, %v6654
      %6656 = vmatmul.bf16.gmra.mxu0 %v6500
      %v6657 = vpop.f32.mrf.mxu0
      %v6658 = vadd.f32 0.0, %v6657
      %v6659 = vpop.f32.mrf.mxu0
      %v6660 = vadd.f32 0.0, %v6659
      %6661 = vmatmul.bf16.gmra.mxu0 %v6503
      %v6662 = vpop.f32.mrf.mxu0
      %v6663 = vadd.f32 0.0, %v6662
      %v6664 = vpop.f32.mrf.mxu0
      %v6665 = vadd.f32 0.0, %v6664
      %6666 = vmatmul.bf16.gmra.mxu0 %v6506
      %v6667 = vpop.f32.mrf.mxu0
      %v6668 = vadd.f32 0.0, %v6667
      %v6669 = vpop.f32.mrf.mxu0
      %v6670 = vadd.f32 0.0, %v6669
      %6671 = vmatmul.bf16.gmra.mxu0 %v6509
      %v6672 = vpop.f32.mrf.mxu0
      %v6673 = vadd.f32 0.0, %v6672
      %v6674 = vpop.f32.mrf.mxu0
      %v6675 = vadd.f32 0.0, %v6674
      %6676 = vmatmul.bf16.gmra.mxu0 %v6512
      %v6677 = vpop.f32.mrf.mxu0
      %v6678 = vadd.f32 0.0, %v6677
      %v6679 = vpop.f32.mrf.mxu0
      %v6680 = vadd.f32 0.0, %v6679
      %6681 = vmatmul.bf16.gmra.mxu0 %v6515
      %v6682 = vpop.f32.mrf.mxu0
      %v6683 = vadd.f32 0.0, %v6682
      %v6684 = vpop.f32.mrf.mxu0
      %v6685 = vadd.f32 0.0, %v6684
      %6686 = vmatmul.bf16.gmra.mxu0 %v6518
      %v6687 = vpop.f32.mrf.mxu0
      %v6688 = vadd.f32 0.0, %v6687
      %v6689 = vpop.f32.mrf.mxu0
      %v6690 = vadd.f32 0.0, %v6689
      %6691 = vdwg.mxu0
      %v6692 = vadd.f32 %v5478, %v6533
      %v6693 = vadd.f32 %v5479, %v6535
      %v6694 = vadd.f32 %v5480, %v6538
      %v6695 = vadd.f32 %v5481, %v6540
      %v6696 = vadd.f32 %v5482, %v6543
      %v6697 = vadd.f32 %v5483, %v6545
      %v6698 = vadd.f32 %v5484, %v6548
      %v6699 = vadd.f32 %v5485, %v6550
      %v6700 = vadd.f32 %v5486, %v6553
      %v6701 = vadd.f32 %v5487, %v6555
      %v6702 = vadd.f32 %v5488, %v6558
      %v6703 = vadd.f32 %v5489, %v6560
      %v6704 = vadd.f32 %v5490, %v6563
      %v6705 = vadd.f32 %v5491, %v6565
      %v6706 = vadd.f32 %v5492, %v6568
      %v6707 = vadd.f32 %v5493, %v6570
      %v6708 = vadd.f32 %v5494, %v6573
      %v6709 = vadd.f32 %v5495, %v6575
      %v6710 = vadd.f32 %v5496, %v6578
      %v6711 = vadd.f32 %v5497, %v6580
      %v6712 = vadd.f32 %v5498, %v6583
      %v6713 = vadd.f32 %v5499, %v6585
      %v6714 = vadd.f32 %v5500, %v6588
      %v6715 = vadd.f32 %v5501, %v6590
      %v6716 = vadd.f32 %v5502, %v6593
      %v6717 = vadd.f32 %v5503, %v6595
      %v6718 = vadd.f32 %v5504, %v6598
      %v6719 = vadd.f32 %v5505, %v6600
      %v6720 = vadd.f32 %v5506, %v6603
      %v6721 = vadd.f32 %v5507, %v6605
      %v6722 = vadd.f32 %v5508, %v6608
      %v6723 = vadd.f32 %v5509, %v6610
      %v6724 = vadd.f32 %v5510, %v6613
      %v6725 = vadd.f32 %v5511, %v6615
      %v6726 = vadd.f32 %v5512, %v6618
      %v6727 = vadd.f32 %v5513, %v6620
      %v6728 = vadd.f32 %v5514, %v6623
      %v6729 = vadd.f32 %v5515, %v6625
      %v6730 = vadd.f32 %v5516, %v6628
      %v6731 = vadd.f32 %v5517, %v6630
      %v6732 = vadd.f32 %v5518, %v6633
      %v6733 = vadd.f32 %v5519, %v6635
      %v6734 = vadd.f32 %v5520, %v6638
      %v6735 = vadd.f32 %v5521, %v6640
      %v6736 = vadd.f32 %v5522, %v6643
      %v6737 = vadd.f32 %v5523, %v6645
      %v6738 = vadd.f32 %v5524, %v6648
      %v6739 = vadd.f32 %v5525, %v6650
      %v6740 = vadd.f32 %v5526, %v6653
      %v6741 = vadd.f32 %v5527, %v6655
      %v6742 = vadd.f32 %v5528, %v6658
      %v6743 = vadd.f32 %v5529, %v6660
      %v6744 = vadd.f32 %v5530, %v6663
      %v6745 = vadd.f32 %v5531, %v6665
      %v6746 = vadd.f32 %v5532, %v6668
      %v6747 = vadd.f32 %v5533, %v6670
      %v6748 = vadd.f32 %v5534, %v6673
      %v6749 = vadd.f32 %v5535, %v6675
      %v6750 = vadd.f32 %v5536, %v6678
      %v6751 = vadd.f32 %v5537, %v6680
      %v6752 = vadd.f32 %v5538, %v6683
      %v6753 = vadd.f32 %v5539, %v6685
      %v6754 = vadd.f32 %v5540, %v6688
      %v6755 = vadd.f32 %v5541, %v6690
      %v6756 = vld [vmem:[%s4983] sm:$0xe]
      %v6757 = vld [vmem:[%s4983 + $0x14] sm:$0xe]
      %v6758 = vld [vmem:[%s4983 + $0x28] sm:$0xe]
      %v6759 = vld [vmem:[%s4983 + $0x3c] sm:$0xe]
      %v6760 = vld [vmem:[%s4983 + $0x50] sm:$0xe]
      %v6761 = vld [vmem:[%s4983 + $0x64] sm:$0xe]
      %v6762 = vld [vmem:[%s4983 + $0x78] sm:$0xe]
      %v6763 = vld [vmem:[%s4983 + $0x8c] sm:$0xe]
      %v6764 = vld [vmem:[%s4983 + $0xa0] sm:$0xe]
      %v6765 = vld [vmem:[%s4983 + $0xb4] sm:$0xe]
      %v6766 = vld [vmem:[%s4983 + $0xc8] sm:$0xe]
      %v6767 = vld [vmem:[%s4983 + $0xdc] sm:$0xe]
      %v6768 = vld [vmem:[%s4983 + $0xf0] sm:$0xe]
      %v6769 = vld [vmem:[%s4983 + $0x104] sm:$0xe]
      %v6770 = vld [vmem:[%s4983 + $0x118] sm:$0xe]
      %v6771 = vld [vmem:[%s4983 + $0x12c] sm:$0xe]
      %v6852 = vrot.slane %v6756, 5
      %v6853 = vrot.slane %v6852, 4
      %v6854 = vrot.slane %v5543, 5
      %v6855 = vsel %vm1837, %v6853, %v6854
      %v6856 = vrot.slane %v6854, 4
      %v6857 = vrot.slane %v5544, 5
      %v6858 = vsel %vm1837, %v6856, %v6857
      %v6859 = vrot.slane %v6857, 4
      %v6860 = vrot.slane %v5545, 5
      %v6861 = vsel %vm1837, %v6859, %v6860
      %v6862 = vrot.slane %v6860, 4
      %v6863 = vrot.slane %v5546, 5
      %v6864 = vsel %vm1837, %v6862, %v6863
      %v6865 = vrot.slane %v6757, 5
      %v6866 = vrot.slane %v6865, 4
      %v6867 = vrot.slane %v5548, 5
      %v6868 = vsel %vm1837, %v6866, %v6867
      %v6869 = vrot.slane %v6867, 4
      %v6870 = vrot.slane %v5549, 5
      %v6871 = vsel %vm1837, %v6869, %v6870
      %v6872 = vrot.slane %v6870, 4
      %v6873 = vrot.slane %v5550, 5
      %v6874 = vsel %vm1837, %v6872, %v6873
      %v6875 = vrot.slane %v6873, 4
      %v6876 = vrot.slane %v5551, 5
      %v6877 = vsel %vm1837, %v6875, %v6876
      %v6878 = vrot.slane %v6758, 5
      %v6879 = vrot.slane %v6878, 4
      %v6880 = vrot.slane %v5553, 5
      %v6881 = vsel %vm1837, %v6879, %v6880
      %v6882 = vrot.slane %v6880, 4
      %v6883 = vrot.slane %v5554, 5
      %v6884 = vsel %vm1837, %v6882, %v6883
      %v6885 = vrot.slane %v6883, 4
      %v6886 = vrot.slane %v5555, 5
      %v6887 = vsel %vm1837, %v6885, %v6886
      %v6888 = vrot.slane %v6886, 4
      %v6889 = vrot.slane %v5556, 5
      %v6890 = vsel %vm1837, %v6888, %v6889
      %v6891 = vrot.slane %v6759, 5
      %v6892 = vrot.slane %v6891, 4
      %v6893 = vrot.slane %v5558, 5
      %v6894 = vsel %vm1837, %v6892, %v6893
      %v6895 = vrot.slane %v6893, 4
      %v6896 = vrot.slane %v5559, 5
      %v6897 = vsel %vm1837, %v6895, %v6896
      %v6898 = vrot.slane %v6896, 4
      %v6899 = vrot.slane %v5560, 5
      %v6900 = vsel %vm1837, %v6898, %v6899
      %v6901 = vrot.slane %v6899, 4
      %v6902 = vrot.slane %v5561, 5
      %v6903 = vsel %vm1837, %v6901, %v6902
      %v6904 = vrot.slane %v6760, 5
      %v6905 = vrot.slane %v6904, 4
      %v6906 = vrot.slane %v5563, 5
      %v6907 = vsel %vm1837, %v6905, %v6906
      %v6908 = vrot.slane %v6906, 4
      %v6909 = vrot.slane %v5564, 5
      %v6910 = vsel %vm1837, %v6908, %v6909
      %v6911 = vrot.slane %v6909, 4
      %v6912 = vrot.slane %v5565, 5
      %v6913 = vsel %vm1837, %v6911, %v6912
      %v6914 = vrot.slane %v6912, 4
      %v6915 = vrot.slane %v5566, 5
      %v6916 = vsel %vm1837, %v6914, %v6915
      %v6917 = vrot.slane %v6761, 5
      %v6918 = vrot.slane %v6917, 4
      %v6919 = vrot.slane %v5568, 5
      %v6920 = vsel %vm1837, %v6918, %v6919
      %v6921 = vrot.slane %v6919, 4
      %v6922 = vrot.slane %v5569, 5
      %v6923 = vsel %vm1837, %v6921, %v6922
      %v6924 = vrot.slane %v6922, 4
      %v6925 = vrot.slane %v5570, 5
      %v6926 = vsel %vm1837, %v6924, %v6925
      %v6927 = vrot.slane %v6925, 4
      %v6928 = vrot.slane %v5571, 5
      %v6929 = vsel %vm1837, %v6927, %v6928
      %v6930 = vrot.slane %v6762, 5
      %v6931 = vrot.slane %v6930, 4
      %v6932 = vrot.slane %v5573, 5
      %v6933 = vsel %vm1837, %v6931, %v6932
      %v6934 = vrot.slane %v6932, 4
      %v6935 = vrot.slane %v5574, 5
      %v6936 = vsel %vm1837, %v6934, %v6935
      %v6937 = vrot.slane %v6935, 4
      %v6938 = vrot.slane %v5575, 5
      %v6939 = vsel %vm1837, %v6937, %v6938
      %v6940 = vrot.slane %v6938, 4
      %v6941 = vrot.slane %v5576, 5
      %v6942 = vsel %vm1837, %v6940, %v6941
      %v6943 = vrot.slane %v6763, 5
      %v6944 = vrot.slane %v6943, 4
      %v6945 = vrot.slane %v5578, 5
      %v6946 = vsel %vm1837, %v6944, %v6945
      %v6947 = vrot.slane %v6945, 4
      %v6948 = vrot.slane %v5579, 5
      %v6949 = vsel %vm1837, %v6947, %v6948
      %v6950 = vrot.slane %v6948, 4
      %v6951 = vrot.slane %v5580, 5
      %v6952 = vsel %vm1837, %v6950, %v6951
      %v6953 = vrot.slane %v6951, 4
      %v6954 = vrot.slane %v5581, 5
      %v6955 = vsel %vm1837, %v6953, %v6954
      %v6956 = vrot.slane %v6764, 5
      %v6957 = vrot.slane %v6956, 4
      %v6958 = vrot.slane %v5583, 5
      %v6959 = vsel %vm1837, %v6957, %v6958
      %v6960 = vrot.slane %v6958, 4
      %v6961 = vrot.slane %v5584, 5
      %v6962 = vsel %vm1837, %v6960, %v6961
      %v6963 = vrot.slane %v6961, 4
      %v6964 = vrot.slane %v5585, 5
      %v6965 = vsel %vm1837, %v6963, %v6964
      %v6966 = vrot.slane %v6964, 4
      %v6967 = vrot.slane %v5586, 5
      %v6968 = vsel %vm1837, %v6966, %v6967
      %v6969 = vrot.slane %v6765, 5
      %v6970 = vrot.slane %v6969, 4
      %v6971 = vrot.slane %v5588, 5
      %v6972 = vsel %vm1837, %v6970, %v6971
      %v6973 = vrot.slane %v6971, 4
      %v6974 = vrot.slane %v5589, 5
      %v6975 = vsel %vm1837, %v6973, %v6974
      %v6976 = vrot.slane %v6974, 4
      %v6977 = vrot.slane %v5590, 5
      %v6978 = vsel %vm1837, %v6976, %v6977
      %v6979 = vrot.slane %v6977, 4
      %v6980 = vrot.slane %v5591, 5
      %v6981 = vsel %vm1837, %v6979, %v6980
      %v6982 = vrot.slane %v6766, 5
      %v6983 = vrot.slane %v6982, 4
      %v6984 = vrot.slane %v5593, 5
      %v6985 = vsel %vm1837, %v6983, %v6984
      %v6986 = vrot.slane %v6984, 4
      %v6987 = vrot.slane %v5594, 5
      %v6988 = vsel %vm1837, %v6986, %v6987
      %v6989 = vrot.slane %v6987, 4
      %v6990 = vrot.slane %v5595, 5
      %v6991 = vsel %vm1837, %v6989, %v6990
      %v6992 = vrot.slane %v6990, 4
      %v6993 = vrot.slane %v5596, 5
      %v6994 = vsel %vm1837, %v6992, %v6993
      %v6995 = vrot.slane %v6767, 5
      %v6996 = vrot.slane %v6995, 4
      %v6997 = vrot.slane %v5598, 5
      %v6998 = vsel %vm1837, %v6996, %v6997
      %v6999 = vrot.slane %v6997, 4
      %v7000 = vrot.slane %v5599, 5
      %v7001 = vsel %vm1837, %v6999, %v7000
      %v7002 = vrot.slane %v7000, 4
      %v7003 = vrot.slane %v5600, 5
      %v7004 = vsel %vm1837, %v7002, %v7003
      %v7005 = vrot.slane %v7003, 4
      %v7006 = vrot.slane %v5601, 5
      %v7007 = vsel %vm1837, %v7005, %v7006
      %v7008 = vrot.slane %v6768, 5
      %v7009 = vrot.slane %v7008, 4
      %v7010 = vrot.slane %v5603, 5
      %v7011 = vsel %vm1837, %v7009, %v7010
      %v7012 = vrot.slane %v7010, 4
      %v7013 = vrot.slane %v5604, 5
      %v7014 = vsel %vm1837, %v7012, %v7013
      %v7015 = vrot.slane %v7013, 4
      %v7016 = vrot.slane %v5605, 5
      %v7017 = vsel %vm1837, %v7015, %v7016
      %v7018 = vrot.slane %v7016, 4
      %v7019 = vrot.slane %v5606, 5
      %v7020 = vsel %vm1837, %v7018, %v7019
      %v7021 = vrot.slane %v6769, 5
      %v7022 = vrot.slane %v7021, 4
      %v7023 = vrot.slane %v5608, 5
      %v7024 = vsel %vm1837, %v7022, %v7023
      %v7025 = vrot.slane %v7023, 4
      %v7026 = vrot.slane %v5609, 5
      %v7027 = vsel %vm1837, %v7025, %v7026
      %v7028 = vrot.slane %v7026, 4
      %v7029 = vrot.slane %v5610, 5
      %v7030 = vsel %vm1837, %v7028, %v7029
      %v7031 = vrot.slane %v7029, 4
      %v7032 = vrot.slane %v5611, 5
      %v7033 = vsel %vm1837, %v7031, %v7032
      %v7034 = vrot.slane %v6770, 5
      %v7035 = vrot.slane %v7034, 4
      %v7036 = vrot.slane %v5613, 5
      %v7037 = vsel %vm1837, %v7035, %v7036
      %v7038 = vrot.slane %v7036, 4
      %v7039 = vrot.slane %v5614, 5
      %v7040 = vsel %vm1837, %v7038, %v7039
      %v7041 = vrot.slane %v7039, 4
      %v7042 = vrot.slane %v5615, 5
      %v7043 = vsel %vm1837, %v7041, %v7042
      %v7044 = vrot.slane %v7042, 4
      %v7045 = vrot.slane %v5616, 5
      %v7046 = vsel %vm1837, %v7044, %v7045
      %v7047 = vrot.slane %v6771, 5
      %v7048 = vrot.slane %v7047, 4
      %v7049 = vrot.slane %v5618, 5
      %v7050 = vsel %vm1837, %v7048, %v7049
      %v7051 = vrot.slane %v7049, 4
      %v7052 = vrot.slane %v5619, 5
      %v7053 = vsel %vm1837, %v7051, %v7052
      %v7054 = vrot.slane %v7052, 4
      %v7055 = vrot.slane %v5620, 5
      %v7056 = vsel %vm1837, %v7054, %v7055
      %v7057 = vrot.slane %v7055, 4
      %v7058 = vrot.slane %v5621, 5
      %v7059 = vsel %vm1837, %v7057, %v7058
      %s7060 = scalar_lea.vmem %s1, 16
      %v7061 = vld [vmem:[%s7060] sm:$0x3]
      %v7062 = vunpack.c.l.b16 %v6855
      %v7063 = vunpack.c.l.b16 %v6858
      %v7064 = vunpack.c.l.b16 %v6861
      %v7065 = vunpack.c.l.b16 %v6864
      %v7066 = vunpack.c.l.b16 %v6868
      %v7067 = vunpack.c.l.b16 %v6871
      %v7068 = vunpack.c.l.b16 %v6874
      %v7069 = vunpack.c.l.b16 %v6877
      %v7070 = vunpack.c.l.b16 %v6881
      %v7071 = vunpack.c.l.b16 %v6884
      %v7072 = vunpack.c.l.b16 %v6887
      %v7073 = vunpack.c.l.b16 %v6890
      %v7074 = vunpack.c.l.b16 %v6894
      %v7075 = vunpack.c.l.b16 %v6897
      %v7076 = vunpack.c.l.b16 %v6900
      %v7077 = vunpack.c.l.b16 %v6903
      %v7078 = vunpack.c.l.b16 %v6907
      %v7079 = vunpack.c.l.b16 %v6910
      %v7080 = vunpack.c.l.b16 %v6913
      %v7081 = vunpack.c.l.b16 %v6916
      %v7082 = vunpack.c.l.b16 %v6920
      %v7083 = vunpack.c.l.b16 %v6923
      %v7084 = vunpack.c.l.b16 %v6926
      %v7085 = vunpack.c.l.b16 %v6929
      %v7086 = vunpack.c.l.b16 %v6933
      %v7087 = vunpack.c.l.b16 %v6936
      %v7088 = vunpack.c.l.b16 %v6939
      %v7089 = vunpack.c.l.b16 %v6942
      %v7090 = vunpack.c.l.b16 %v6946
      %v7091 = vunpack.c.l.b16 %v6949
      %v7092 = vunpack.c.l.b16 %v6952
      %v7093 = vunpack.c.l.b16 %v6955
      %v7094 = vunpack.c.l.b16 %v6959
      %v7095 = vunpack.c.l.b16 %v6962
      %v7096 = vunpack.c.l.b16 %v6965
      %v7097 = vunpack.c.l.b16 %v6968
      %v7098 = vunpack.c.l.b16 %v6972
      %v7099 = vunpack.c.l.b16 %v6975
      %v7100 = vunpack.c.l.b16 %v6978
      %v7101 = vunpack.c.l.b16 %v6981
      %v7102 = vunpack.c.l.b16 %v6985
      %v7103 = vunpack.c.l.b16 %v6988
      %v7104 = vunpack.c.l.b16 %v6991
      %v7105 = vunpack.c.l.b16 %v6994
      %v7106 = vunpack.c.l.b16 %v6998
      %v7107 = vunpack.c.l.b16 %v7001
      %v7108 = vunpack.c.l.b16 %v7004
      %v7109 = vunpack.c.l.b16 %v7007
      %v7110 = vunpack.c.l.b16 %v7011
      %v7111 = vunpack.c.l.b16 %v7014
      %v7112 = vunpack.c.l.b16 %v7017
      %v7113 = vunpack.c.l.b16 %v7020
      %v7114 = vunpack.c.l.b16 %v7024
      %v7115 = vunpack.c.l.b16 %v7027
      %v7116 = vunpack.c.l.b16 %v7030
      %v7117 = vunpack.c.l.b16 %v7033
      %v7118 = vunpack.c.l.b16 %v7037
      %v7119 = vunpack.c.l.b16 %v7040
      %v7120 = vunpack.c.l.b16 %v7043
      %v7121 = vunpack.c.l.b16 %v7046
      %v7122 = vunpack.c.l.b16 %v7050
      %v7123 = vunpack.c.l.b16 %v7053
      %v7124 = vunpack.c.l.b16 %v7056
      %v7125 = vunpack.c.l.b16 %v7059
      %v7126 = vpack.c.b16 %v7063, %v7062
      %v7127 = vpack.c.b16 %v7065, %v7064
      %v7128 = vpack.c.b16 %v7067, %v7066
      %v7129 = vpack.c.b16 %v7069, %v7068
      %v7130 = vpack.c.b16 %v7071, %v7070
      %v7131 = vpack.c.b16 %v7073, %v7072
      %v7132 = vpack.c.b16 %v7075, %v7074
      %v7133 = vpack.c.b16 %v7077, %v7076
      %v7134 = vpack.c.b16 %v7079, %v7078
      %v7135 = vpack.c.b16 %v7081, %v7080
      %v7136 = vpack.c.b16 %v7083, %v7082
      %v7137 = vpack.c.b16 %v7085, %v7084
      %v7138 = vpack.c.b16 %v7087, %v7086
      %v7139 = vpack.c.b16 %v7089, %v7088
      %v7140 = vpack.c.b16 %v7091, %v7090
      %v7141 = vpack.c.b16 %v7093, %v7092
      %v7142 = vpack.c.b16 %v7095, %v7094
      %v7143 = vpack.c.b16 %v7097, %v7096
      %v7144 = vpack.c.b16 %v7099, %v7098
      %v7145 = vpack.c.b16 %v7101, %v7100
      %v7146 = vpack.c.b16 %v7103, %v7102
      %v7147 = vpack.c.b16 %v7105, %v7104
      %v7148 = vpack.c.b16 %v7107, %v7106
      %v7149 = vpack.c.b16 %v7109, %v7108
      %v7150 = vpack.c.b16 %v7111, %v7110
      %v7151 = vpack.c.b16 %v7113, %v7112
      %v7152 = vpack.c.b16 %v7115, %v7114
      %v7153 = vpack.c.b16 %v7117, %v7116
      %v7154 = vpack.c.b16 %v7119, %v7118
      %v7155 = vpack.c.b16 %v7121, %v7120
      %v7156 = vpack.c.b16 %v7123, %v7122
      %v7157 = vpack.c.b16 %v7125, %v7124
      %v7159 = vsel %vm1086, %v7126, 0
      %v7162 = vsel %vm1086, %v7127, 0
      %v7165 = vsel %vm1086, %v7128, 0
      %v7168 = vsel %vm1086, %v7129, 0
      %v7171 = vsel %vm1086, %v7130, 0
      %v7174 = vsel %vm1086, %v7131, 0
      %v7177 = vsel %vm1086, %v7132, 0
      %v7180 = vsel %vm1086, %v7133, 0
      %v7183 = vsel %vm1086, %v7134, 0
      %v7186 = vsel %vm1086, %v7135, 0
      %v7189 = vsel %vm1086, %v7136, 0
      %v7192 = vsel %vm1086, %v7137, 0
      %v7195 = vsel %vm1086, %v7138, 0
      %v7198 = vsel %vm1086, %v7139, 0
      %v7201 = vsel %vm1086, %v7140, 0
      %v7204 = vsel %vm1086, %v7141, 0
      %v7207 = vsel %vm1086, %v7142, 0
      %v7210 = vsel %vm1086, %v7143, 0
      %v7213 = vsel %vm1086, %v7144, 0
      %v7216 = vsel %vm1086, %v7145, 0
      %v7219 = vsel %vm1086, %v7146, 0
      %v7222 = vsel %vm1086, %v7147, 0
      %v7225 = vsel %vm1086, %v7148, 0
      %v7228 = vsel %vm1086, %v7149, 0
      %v7231 = vsel %vm1086, %v7150, 0
      %v7234 = vsel %vm1086, %v7151, 0
      %v7237 = vsel %vm1086, %v7152, 0
      %v7240 = vsel %vm1086, %v7153, 0
      %v7243 = vsel %vm1086, %v7154, 0
      %v7246 = vsel %vm1086, %v7155, 0
      %v7249 = vsel %vm1086, %v7156, 0
      %v7252 = vsel %vm1086, %v7157, 0
      %v7255 = vand.u32 %v7061, %v1186
      %7257 = vmatpush.bf16.msra.mxu0 0
      %7258 = vmatpush.bf16.msra.mxu0 0
      %7259 = vmatpush.bf16.msra.mxu0 0
      %7260 = vmatpush.bf16.msra.mxu0 0
      %7261 = vmatpush.bf16.msra.mxu0 0
      %7262 = vmatpush.bf16.msra.mxu0 0
      %7263 = vmatpush.bf16.msra.mxu0 0
      %7264 = vmatpush.bf16.msra.mxu0 %v7255
      %7265 = vmatmul.bf16.gmra.mxu0 %v7159
      %v7266 = vpop.f32.mrf.mxu0
      %v7267 = vadd.f32 0.0, %v7266
      %v7268 = vpop.f32.mrf.mxu0
      %v7269 = vadd.f32 0.0, %v7268
      %7270 = vmatmul.bf16.gmra.mxu0 %v7162
      %v7271 = vpop.f32.mrf.mxu0
      %v7272 = vadd.f32 0.0, %v7271
      %v7273 = vpop.f32.mrf.mxu0
      %v7274 = vadd.f32 0.0, %v7273
      %7275 = vmatmul.bf16.gmra.mxu0 %v7165
      %v7276 = vpop.f32.mrf.mxu0
      %v7277 = vadd.f32 0.0, %v7276
      %v7278 = vpop.f32.mrf.mxu0
      %v7279 = vadd.f32 0.0, %v7278
      %7280 = vmatmul.bf16.gmra.mxu0 %v7168
      %v7281 = vpop.f32.mrf.mxu0
      %v7282 = vadd.f32 0.0, %v7281
      %v7283 = vpop.f32.mrf.mxu0
      %v7284 = vadd.f32 0.0, %v7283
      %7285 = vmatmul.bf16.gmra.mxu0 %v7171
      %v7286 = vpop.f32.mrf.mxu0
      %v7287 = vadd.f32 0.0, %v7286
      %v7288 = vpop.f32.mrf.mxu0
      %v7289 = vadd.f32 0.0, %v7288
      %7290 = vmatmul.bf16.gmra.mxu0 %v7174
      %v7291 = vpop.f32.mrf.mxu0
      %v7292 = vadd.f32 0.0, %v7291
      %v7293 = vpop.f32.mrf.mxu0
      %v7294 = vadd.f32 0.0, %v7293
      %7295 = vmatmul.bf16.gmra.mxu0 %v7177
      %v7296 = vpop.f32.mrf.mxu0
      %v7297 = vadd.f32 0.0, %v7296
      %v7298 = vpop.f32.mrf.mxu0
      %v7299 = vadd.f32 0.0, %v7298
      %7300 = vmatmul.bf16.gmra.mxu0 %v7180
      %v7301 = vpop.f32.mrf.mxu0
      %v7302 = vadd.f32 0.0, %v7301
      %v7303 = vpop.f32.mrf.mxu0
      %v7304 = vadd.f32 0.0, %v7303
      %7305 = vmatmul.bf16.gmra.mxu0 %v7183
      %v7306 = vpop.f32.mrf.mxu0
      %v7307 = vadd.f32 0.0, %v7306
      %v7308 = vpop.f32.mrf.mxu0
      %v7309 = vadd.f32 0.0, %v7308
      %7310 = vmatmul.bf16.gmra.mxu0 %v7186
      %v7311 = vpop.f32.mrf.mxu0
      %v7312 = vadd.f32 0.0, %v7311
      %v7313 = vpop.f32.mrf.mxu0
      %v7314 = vadd.f32 0.0, %v7313
      %7315 = vmatmul.bf16.gmra.mxu0 %v7189
      %v7316 = vpop.f32.mrf.mxu0
      %v7317 = vadd.f32 0.0, %v7316
      %v7318 = vpop.f32.mrf.mxu0
      %v7319 = vadd.f32 0.0, %v7318
      %7320 = vmatmul.bf16.gmra.mxu0 %v7192
      %v7321 = vpop.f32.mrf.mxu0
      %v7322 = vadd.f32 0.0, %v7321
      %v7323 = vpop.f32.mrf.mxu0
      %v7324 = vadd.f32 0.0, %v7323
      %7325 = vmatmul.bf16.gmra.mxu0 %v7195
      %v7326 = vpop.f32.mrf.mxu0
      %v7327 = vadd.f32 0.0, %v7326
      %v7328 = vpop.f32.mrf.mxu0
      %v7329 = vadd.f32 0.0, %v7328
      %7330 = vmatmul.bf16.gmra.mxu0 %v7198
      %v7331 = vpop.f32.mrf.mxu0
      %v7332 = vadd.f32 0.0, %v7331
      %v7333 = vpop.f32.mrf.mxu0
      %v7334 = vadd.f32 0.0, %v7333
      %7335 = vmatmul.bf16.gmra.mxu0 %v7201
      %v7336 = vpop.f32.mrf.mxu0
      %v7337 = vadd.f32 0.0, %v7336
      %v7338 = vpop.f32.mrf.mxu0
      %v7339 = vadd.f32 0.0, %v7338
      %7340 = vmatmul.bf16.gmra.mxu0 %v7204
      %v7341 = vpop.f32.mrf.mxu0
      %v7342 = vadd.f32 0.0, %v7341
      %v7343 = vpop.f32.mrf.mxu0
      %v7344 = vadd.f32 0.0, %v7343
      %7345 = vmatmul.bf16.gmra.mxu0 %v7207
      %v7346 = vpop.f32.mrf.mxu0
      %v7347 = vadd.f32 0.0, %v7346
      %v7348 = vpop.f32.mrf.mxu0
      %v7349 = vadd.f32 0.0, %v7348
      %7350 = vmatmul.bf16.gmra.mxu0 %v7210
      %v7351 = vpop.f32.mrf.mxu0
      %v7352 = vadd.f32 0.0, %v7351
      %v7353 = vpop.f32.mrf.mxu0
      %v7354 = vadd.f32 0.0, %v7353
      %7355 = vmatmul.bf16.gmra.mxu0 %v7213
      %v7356 = vpop.f32.mrf.mxu0
      %v7357 = vadd.f32 0.0, %v7356
      %v7358 = vpop.f32.mrf.mxu0
      %v7359 = vadd.f32 0.0, %v7358
      %7360 = vmatmul.bf16.gmra.mxu0 %v7216
      %v7361 = vpop.f32.mrf.mxu0
      %v7362 = vadd.f32 0.0, %v7361
      %v7363 = vpop.f32.mrf.mxu0
      %v7364 = vadd.f32 0.0, %v7363
      %7365 = vmatmul.bf16.gmra.mxu0 %v7219
      %v7366 = vpop.f32.mrf.mxu0
      %v7367 = vadd.f32 0.0, %v7366
      %v7368 = vpop.f32.mrf.mxu0
      %v7369 = vadd.f32 0.0, %v7368
      %7370 = vmatmul.bf16.gmra.mxu0 %v7222
      %v7371 = vpop.f32.mrf.mxu0
      %v7372 = vadd.f32 0.0, %v7371
      %v7373 = vpop.f32.mrf.mxu0
      %v7374 = vadd.f32 0.0, %v7373
      %7375 = vmatmul.bf16.gmra.mxu0 %v7225
      %v7376 = vpop.f32.mrf.mxu0
      %v7377 = vadd.f32 0.0, %v7376
      %v7378 = vpop.f32.mrf.mxu0
      %v7379 = vadd.f32 0.0, %v7378
      %7380 = vmatmul.bf16.gmra.mxu0 %v7228
      %v7381 = vpop.f32.mrf.mxu0
      %v7382 = vadd.f32 0.0, %v7381
      %v7383 = vpop.f32.mrf.mxu0
      %v7384 = vadd.f32 0.0, %v7383
      %7385 = vmatmul.bf16.gmra.mxu0 %v7231
      %v7386 = vpop.f32.mrf.mxu0
      %v7387 = vadd.f32 0.0, %v7386
      %v7388 = vpop.f32.mrf.mxu0
      %v7389 = vadd.f32 0.0, %v7388
      %7390 = vmatmul.bf16.gmra.mxu0 %v7234
      %v7391 = vpop.f32.mrf.mxu0
      %v7392 = vadd.f32 0.0, %v7391
      %v7393 = vpop.f32.mrf.mxu0
      %v7394 = vadd.f32 0.0, %v7393
      %7395 = vmatmul.bf16.gmra.mxu0 %v7237
      %v7396 = vpop.f32.mrf.mxu0
      %v7397 = vadd.f32 0.0, %v7396
      %v7398 = vpop.f32.mrf.mxu0
      %v7399 = vadd.f32 0.0, %v7398
      %7400 = vmatmul.bf16.gmra.mxu0 %v7240
      %v7401 = vpop.f32.mrf.mxu0
      %v7402 = vadd.f32 0.0, %v7401
      %v7403 = vpop.f32.mrf.mxu0
      %v7404 = vadd.f32 0.0, %v7403
      %7405 = vmatmul.bf16.gmra.mxu0 %v7243
      %v7406 = vpop.f32.mrf.mxu0
      %v7407 = vadd.f32 0.0, %v7406
      %v7408 = vpop.f32.mrf.mxu0
      %v7409 = vadd.f32 0.0, %v7408
      %7410 = vmatmul.bf16.gmra.mxu0 %v7246
      %v7411 = vpop.f32.mrf.mxu0
      %v7412 = vadd.f32 0.0, %v7411
      %v7413 = vpop.f32.mrf.mxu0
      %v7414 = vadd.f32 0.0, %v7413
      %7415 = vmatmul.bf16.gmra.mxu0 %v7249
      %v7416 = vpop.f32.mrf.mxu0
      %v7417 = vadd.f32 0.0, %v7416
      %v7418 = vpop.f32.mrf.mxu0
      %v7419 = vadd.f32 0.0, %v7418
      %7420 = vmatmul.bf16.gmra.mxu0 %v7252
      %v7421 = vpop.f32.mrf.mxu0
      %v7422 = vadd.f32 0.0, %v7421
      %v7423 = vpop.f32.mrf.mxu0
      %v7424 = vadd.f32 0.0, %v7423
      %7425 = vdwg.mxu0
      %v7426 = vadd.f32 %v6692, %v7267
      %v7427 = vadd.f32 %v6693, %v7269
      %v7428 = vadd.f32 %v6694, %v7272
      %v7429 = vadd.f32 %v6695, %v7274
      %v7430 = vadd.f32 %v6696, %v7277
      %v7431 = vadd.f32 %v6697, %v7279
      %v7432 = vadd.f32 %v6698, %v7282
      %v7433 = vadd.f32 %v6699, %v7284
      %v7434 = vadd.f32 %v6700, %v7287
      %v7435 = vadd.f32 %v6701, %v7289
      %v7436 = vadd.f32 %v6702, %v7292
      %v7437 = vadd.f32 %v6703, %v7294
      %v7438 = vadd.f32 %v6704, %v7297
      %v7439 = vadd.f32 %v6705, %v7299
      %v7440 = vadd.f32 %v6706, %v7302
      %v7441 = vadd.f32 %v6707, %v7304
      %v7442 = vadd.f32 %v6708, %v7307
      %v7443 = vadd.f32 %v6709, %v7309
      %v7444 = vadd.f32 %v6710, %v7312
      %v7445 = vadd.f32 %v6711, %v7314
      %v7446 = vadd.f32 %v6712, %v7317
      %v7447 = vadd.f32 %v6713, %v7319
      %v7448 = vadd.f32 %v6714, %v7322
      %v7449 = vadd.f32 %v6715, %v7324
      %v7450 = vadd.f32 %v6716, %v7327
      %v7451 = vadd.f32 %v6717, %v7329
      %v7452 = vadd.f32 %v6718, %v7332
      %v7453 = vadd.f32 %v6719, %v7334
      %v7454 = vadd.f32 %v6720, %v7337
      %v7455 = vadd.f32 %v6721, %v7339
      %v7456 = vadd.f32 %v6722, %v7342
      %v7457 = vadd.f32 %v6723, %v7344
      %v7458 = vadd.f32 %v6724, %v7347
      %v7459 = vadd.f32 %v6725, %v7349
      %v7460 = vadd.f32 %v6726, %v7352
      %v7461 = vadd.f32 %v6727, %v7354
      %v7462 = vadd.f32 %v6728, %v7357
      %v7463 = vadd.f32 %v6729, %v7359
      %v7464 = vadd.f32 %v6730, %v7362
      %v7465 = vadd.f32 %v6731, %v7364
      %v7466 = vadd.f32 %v6732, %v7367
      %v7467 = vadd.f32 %v6733, %v7369
      %v7468 = vadd.f32 %v6734, %v7372
      %v7469 = vadd.f32 %v6735, %v7374
      %v7470 = vadd.f32 %v6736, %v7377
      %v7471 = vadd.f32 %v6737, %v7379
      %v7472 = vadd.f32 %v6738, %v7382
      %v7473 = vadd.f32 %v6739, %v7384
      %v7474 = vadd.f32 %v6740, %v7387
      %v7475 = vadd.f32 %v6741, %v7389
      %v7476 = vadd.f32 %v6742, %v7392
      %v7477 = vadd.f32 %v6743, %v7394
      %v7478 = vadd.f32 %v6744, %v7397
      %v7479 = vadd.f32 %v6745, %v7399
      %v7480 = vadd.f32 %v6746, %v7402
      %v7481 = vadd.f32 %v6747, %v7404
      %v7482 = vadd.f32 %v6748, %v7407
      %v7483 = vadd.f32 %v6749, %v7409
      %v7484 = vadd.f32 %v6750, %v7412
      %v7485 = vadd.f32 %v6751, %v7414
      %v7486 = vadd.f32 %v6752, %v7417
      %v7487 = vadd.f32 %v6753, %v7419
      %v7488 = vadd.f32 %v6754, %v7422
      %v7489 = vadd.f32 %v6755, %v7424
      %v7490 = vld [vmem:[%s2] sm:$0x1]
      %v7492 = vperm.slane %v7490, 0
      %v7494 = vmul.f32 %v7426, %v7492
      %v7495 = vmul.f32 %v7427, %v7492
      %v7496 = vmul.f32 %v7428, %v7492
      %v7497 = vmul.f32 %v7429, %v7492
      %v7498 = vmul.f32 %v7430, %v7492
      %v7499 = vmul.f32 %v7431, %v7492
      %v7500 = vmul.f32 %v7432, %v7492
      %v7501 = vmul.f32 %v7433, %v7492
      %v7502 = vmul.f32 %v7434, %v7492
      %v7503 = vmul.f32 %v7435, %v7492
      %v7504 = vmul.f32 %v7436, %v7492
      %v7505 = vmul.f32 %v7437, %v7492
      %v7506 = vmul.f32 %v7438, %v7492
      %v7507 = vmul.f32 %v7439, %v7492
      %v7508 = vmul.f32 %v7440, %v7492
      %v7509 = vmul.f32 %v7441, %v7492
      %v7510 = vmul.f32 %v7442, %v7492
      %v7511 = vmul.f32 %v7443, %v7492
      %v7512 = vmul.f32 %v7444, %v7492
      %v7513 = vmul.f32 %v7445, %v7492
      %v7514 = vmul.f32 %v7446, %v7492
      %v7515 = vmul.f32 %v7447, %v7492
      %v7516 = vmul.f32 %v7448, %v7492
      %v7517 = vmul.f32 %v7449, %v7492
      %v7518 = vmul.f32 %v7450, %v7492
      %v7519 = vmul.f32 %v7451, %v7492
      %v7520 = vmul.f32 %v7452, %v7492
      %v7521 = vmul.f32 %v7453, %v7492
      %v7522 = vmul.f32 %v7454, %v7492
      %v7523 = vmul.f32 %v7455, %v7492
      %v7524 = vmul.f32 %v7456, %v7492
      %v7525 = vmul.f32 %v7457, %v7492
      %v7526 = vmul.f32 %v7458, %v7492
      %v7527 = vmul.f32 %v7459, %v7492
      %v7528 = vmul.f32 %v7460, %v7492
      %v7529 = vmul.f32 %v7461, %v7492
      %v7530 = vmul.f32 %v7462, %v7492
      %v7531 = vmul.f32 %v7463, %v7492
      %v7532 = vmul.f32 %v7464, %v7492
      %v7533 = vmul.f32 %v7465, %v7492
      %v7534 = vmul.f32 %v7466, %v7492
      %v7535 = vmul.f32 %v7467, %v7492
      %v7536 = vmul.f32 %v7468, %v7492
      %v7537 = vmul.f32 %v7469, %v7492
      %v7538 = vmul.f32 %v7470, %v7492
      %v7539 = vmul.f32 %v7471, %v7492
      %v7540 = vmul.f32 %v7472, %v7492
      %v7541 = vmul.f32 %v7473, %v7492
      %v7542 = vmul.f32 %v7474, %v7492
      %v7543 = vmul.f32 %v7475, %v7492
      %v7544 = vmul.f32 %v7476, %v7492
      %v7545 = vmul.f32 %v7477, %v7492
      %v7546 = vmul.f32 %v7478, %v7492
      %v7547 = vmul.f32 %v7479, %v7492
      %v7548 = vmul.f32 %v7480, %v7492
      %v7549 = vmul.f32 %v7481, %v7492
      %v7550 = vmul.f32 %v7482, %v7492
      %v7551 = vmul.f32 %v7483, %v7492
      %v7552 = vmul.f32 %v7484, %v7492
      %v7553 = vmul.f32 %v7485, %v7492
      %v7554 = vmul.f32 %v7486, %v7492
      %v7555 = vmul.f32 %v7487, %v7492
      %v7556 = vmul.f32 %v7488, %v7492
      %v7557 = vmul.f32 %v7489, %v7492
      %v7558 = vld [vmem:[%s3] sm:$0x1]
      %v7560 = vperm.slane %v7558, 0
      %v7562 = vadd.f32 %v7494, %v7560
      %v7563 = vadd.f32 %v7495, %v7560
      %v7564 = vadd.f32 %v7496, %v7560
      %v7565 = vadd.f32 %v7497, %v7560
      %v7566 = vadd.f32 %v7498, %v7560
      %v7567 = vadd.f32 %v7499, %v7560
      %v7568 = vadd.f32 %v7500, %v7560
      %v7569 = vadd.f32 %v7501, %v7560
      %v7570 = vadd.f32 %v7502, %v7560
      %v7571 = vadd.f32 %v7503, %v7560
      %v7572 = vadd.f32 %v7504, %v7560
      %v7573 = vadd.f32 %v7505, %v7560
      %v7574 = vadd.f32 %v7506, %v7560
      %v7575 = vadd.f32 %v7507, %v7560
      %v7576 = vadd.f32 %v7508, %v7560
      %v7577 = vadd.f32 %v7509, %v7560
      %v7578 = vadd.f32 %v7510, %v7560
      %v7579 = vadd.f32 %v7511, %v7560
      %v7580 = vadd.f32 %v7512, %v7560
      %v7581 = vadd.f32 %v7513, %v7560
      %v7582 = vadd.f32 %v7514, %v7560
      %v7583 = vadd.f32 %v7515, %v7560
      %v7584 = vadd.f32 %v7516, %v7560
      %v7585 = vadd.f32 %v7517, %v7560
      %v7586 = vadd.f32 %v7518, %v7560
      %v7587 = vadd.f32 %v7519, %v7560
      %v7588 = vadd.f32 %v7520, %v7560
      %v7589 = vadd.f32 %v7521, %v7560
      %v7590 = vadd.f32 %v7522, %v7560
      %v7591 = vadd.f32 %v7523, %v7560
      %v7592 = vadd.f32 %v7524, %v7560
      %v7593 = vadd.f32 %v7525, %v7560
      %v7594 = vadd.f32 %v7526, %v7560
      %v7595 = vadd.f32 %v7527, %v7560
      %v7596 = vadd.f32 %v7528, %v7560
      %v7597 = vadd.f32 %v7529, %v7560
      %v7598 = vadd.f32 %v7530, %v7560
      %v7599 = vadd.f32 %v7531, %v7560
      %v7600 = vadd.f32 %v7532, %v7560
      %v7601 = vadd.f32 %v7533, %v7560
      %v7602 = vadd.f32 %v7534, %v7560
      %v7603 = vadd.f32 %v7535, %v7560
      %v7604 = vadd.f32 %v7536, %v7560
      %v7605 = vadd.f32 %v7537, %v7560
      %v7606 = vadd.f32 %v7538, %v7560
      %v7607 = vadd.f32 %v7539, %v7560
      %v7608 = vadd.f32 %v7540, %v7560
      %v7609 = vadd.f32 %v7541, %v7560
      %v7610 = vadd.f32 %v7542, %v7560
      %v7611 = vadd.f32 %v7543, %v7560
      %v7612 = vadd.f32 %v7544, %v7560
      %v7613 = vadd.f32 %v7545, %v7560
      %v7614 = vadd.f32 %v7546, %v7560
      %v7615 = vadd.f32 %v7547, %v7560
      %v7616 = vadd.f32 %v7548, %v7560
      %v7617 = vadd.f32 %v7549, %v7560
      %v7618 = vadd.f32 %v7550, %v7560
      %v7619 = vadd.f32 %v7551, %v7560
      %v7620 = vadd.f32 %v7552, %v7560
      %v7621 = vadd.f32 %v7553, %v7560
      %v7622 = vadd.f32 %v7554, %v7560
      %v7623 = vadd.f32 %v7555, %v7560
      %v7624 = vadd.f32 %v7556, %v7560
      %v7625 = vadd.f32 %v7557, %v7560
      %vm7626 = vcmp.gt.f32.partialorder %v7562, 0.0
      %vm7627 = vcmp.gt.f32.partialorder %v7563, 0.0
      %vm7628 = vcmp.gt.f32.partialorder %v7564, 0.0
      %vm7629 = vcmp.gt.f32.partialorder %v7565, 0.0
      %vm7630 = vcmp.gt.f32.partialorder %v7566, 0.0
      %vm7631 = vcmp.gt.f32.partialorder %v7567, 0.0
      %vm7632 = vcmp.gt.f32.partialorder %v7568, 0.0
      %vm7633 = vcmp.gt.f32.partialorder %v7569, 0.0
      %vm7634 = vcmp.gt.f32.partialorder %v7570, 0.0
      %vm7635 = vcmp.gt.f32.partialorder %v7571, 0.0
      %vm7636 = vcmp.gt.f32.partialorder %v7572, 0.0
      %vm7637 = vcmp.gt.f32.partialorder %v7573, 0.0
      %vm7638 = vcmp.gt.f32.partialorder %v7574, 0.0
      %vm7639 = vcmp.gt.f32.partialorder %v7575, 0.0
      %vm7640 = vcmp.gt.f32.partialorder %v7576, 0.0
      %vm7641 = vcmp.gt.f32.partialorder %v7577, 0.0
      %vm7642 = vcmp.gt.f32.partialorder %v7578, 0.0
      %vm7643 = vcmp.gt.f32.partialorder %v7579, 0.0
      %vm7644 = vcmp.gt.f32.partialorder %v7580, 0.0
      %vm7645 = vcmp.gt.f32.partialorder %v7581, 0.0
      %vm7646 = vcmp.gt.f32.partialorder %v7582, 0.0
      %vm7647 = vcmp.gt.f32.partialorder %v7583, 0.0
      %vm7648 = vcmp.gt.f32.partialorder %v7584, 0.0
      %vm7649 = vcmp.gt.f32.partialorder %v7585, 0.0
      %vm7650 = vcmp.gt.f32.partialorder %v7586, 0.0
      %vm7651 = vcmp.gt.f32.partialorder %v7587, 0.0
      %vm7652 = vcmp.gt.f32.partialorder %v7588, 0.0
      %vm7653 = vcmp.gt.f32.partialorder %v7589, 0.0
      %vm7654 = vcmp.gt.f32.partialorder %v7590, 0.0
      %vm7655 = vcmp.gt.f32.partialorder %v7591, 0.0
      %vm7656 = vcmp.gt.f32.partialorder %v7592, 0.0
      %vm7657 = vcmp.gt.f32.partialorder %v7593, 0.0
      %vm7658 = vcmp.gt.f32.partialorder %v7594, 0.0
      %vm7659 = vcmp.gt.f32.partialorder %v7595, 0.0
      %vm7660 = vcmp.gt.f32.partialorder %v7596, 0.0
      %vm7661 = vcmp.gt.f32.partialorder %v7597, 0.0
      %vm7662 = vcmp.gt.f32.partialorder %v7598, 0.0
      %vm7663 = vcmp.gt.f32.partialorder %v7599, 0.0
      %vm7664 = vcmp.gt.f32.partialorder %v7600, 0.0
      %vm7665 = vcmp.gt.f32.partialorder %v7601, 0.0
      %vm7666 = vcmp.gt.f32.partialorder %v7602, 0.0
      %vm7667 = vcmp.gt.f32.partialorder %v7603, 0.0
      %vm7668 = vcmp.gt.f32.partialorder %v7604, 0.0
      %vm7669 = vcmp.gt.f32.partialorder %v7605, 0.0
      %vm7670 = vcmp.gt.f32.partialorder %v7606, 0.0
      %vm7671 = vcmp.gt.f32.partialorder %v7607, 0.0
      %vm7672 = vcmp.gt.f32.partialorder %v7608, 0.0
      %vm7673 = vcmp.gt.f32.partialorder %v7609, 0.0
      %vm7674 = vcmp.gt.f32.partialorder %v7610, 0.0
      %vm7675 = vcmp.gt.f32.partialorder %v7611, 0.0
      %vm7676 = vcmp.gt.f32.partialorder %v7612, 0.0
      %vm7677 = vcmp.gt.f32.partialorder %v7613, 0.0
      %vm7678 = vcmp.gt.f32.partialorder %v7614, 0.0
      %vm7679 = vcmp.gt.f32.partialorder %v7615, 0.0
      %vm7680 = vcmp.gt.f32.partialorder %v7616, 0.0
      %vm7681 = vcmp.gt.f32.partialorder %v7617, 0.0
      %vm7682 = vcmp.gt.f32.partialorder %v7618, 0.0
      %vm7683 = vcmp.gt.f32.partialorder %v7619, 0.0
      %vm7684 = vcmp.gt.f32.partialorder %v7620, 0.0
      %vm7685 = vcmp.gt.f32.partialorder %v7621, 0.0
      %vm7686 = vcmp.gt.f32.partialorder %v7622, 0.0
      %vm7687 = vcmp.gt.f32.partialorder %v7623, 0.0
      %vm7688 = vcmp.gt.f32.partialorder %v7624, 0.0
      %vm7689 = vcmp.gt.f32.partialorder %v7625, 0.0
      %v7690 = vmul.f32 %v7562, 0.01
      %v7691 = vmul.f32 %v7563, 0.01
      %v7692 = vmul.f32 %v7564, 0.01
      %v7693 = vmul.f32 %v7565, 0.01
      %v7694 = vmul.f32 %v7566, 0.01
      %v7695 = vmul.f32 %v7567, 0.01
      %v7696 = vmul.f32 %v7568, 0.01
      %v7697 = vmul.f32 %v7569, 0.01
      %v7698 = vmul.f32 %v7570, 0.01
      %v7699 = vmul.f32 %v7571, 0.01
      %v7700 = vmul.f32 %v7572, 0.01
      %v7701 = vmul.f32 %v7573, 0.01
      %v7702 = vmul.f32 %v7574, 0.01
      %v7703 = vmul.f32 %v7575, 0.01
      %v7704 = vmul.f32 %v7576, 0.01
      %v7705 = vmul.f32 %v7577, 0.01
      %v7706 = vmul.f32 %v7578, 0.01
      %v7707 = vmul.f32 %v7579, 0.01
      %v7708 = vmul.f32 %v7580, 0.01
      %v7709 = vmul.f32 %v7581, 0.01
      %v7710 = vmul.f32 %v7582, 0.01
      %v7711 = vmul.f32 %v7583, 0.01
      %v7712 = vmul.f32 %v7584, 0.01
      %v7713 = vmul.f32 %v7585, 0.01
      %v7714 = vmul.f32 %v7586, 0.01
      %v7715 = vmul.f32 %v7587, 0.01
      %v7716 = vmul.f32 %v7588, 0.01
      %v7717 = vmul.f32 %v7589, 0.01
      %v7718 = vmul.f32 %v7590, 0.01
      %v7719 = vmul.f32 %v7591, 0.01
      %v7720 = vmul.f32 %v7592, 0.01
      %v7721 = vmul.f32 %v7593, 0.01
      %v7722 = vmul.f32 %v7594, 0.01
      %v7723 = vmul.f32 %v7595, 0.01
      %v7724 = vmul.f32 %v7596, 0.01
      %v7725 = vmul.f32 %v7597, 0.01
      %v7726 = vmul.f32 %v7598, 0.01
      %v7727 = vmul.f32 %v7599, 0.01
      %v7728 = vmul.f32 %v7600, 0.01
      %v7729 = vmul.f32 %v7601, 0.01
      %v7730 = vmul.f32 %v7602, 0.01
      %v7731 = vmul.f32 %v7603, 0.01
      %v7732 = vmul.f32 %v7604, 0.01
      %v7733 = vmul.f32 %v7605, 0.01
      %v7734 = vmul.f32 %v7606, 0.01
      %v7735 = vmul.f32 %v7607, 0.01
      %v7736 = vmul.f32 %v7608, 0.01
      %v7737 = vmul.f32 %v7609, 0.01
      %v7738 = vmul.f32 %v7610, 0.01
      %v7739 = vmul.f32 %v7611, 0.01
      %v7740 = vmul.f32 %v7612, 0.01
      %v7741 = vmul.f32 %v7613, 0.01
      %v7742 = vmul.f32 %v7614, 0.01
      %v7743 = vmul.f32 %v7615, 0.01
      %v7744 = vmul.f32 %v7616, 0.01
      %v7745 = vmul.f32 %v7617, 0.01
      %v7746 = vmul.f32 %v7618, 0.01
      %v7747 = vmul.f32 %v7619, 0.01
      %v7748 = vmul.f32 %v7620, 0.01
      %v7749 = vmul.f32 %v7621, 0.01
      %v7750 = vmul.f32 %v7622, 0.01
      %v7751 = vmul.f32 %v7623, 0.01
      %v7752 = vmul.f32 %v7624, 0.01
      %v7753 = vmul.f32 %v7625, 0.01
      %v7754 = vsel %vm7626, %v7562, %v7690
      %v7755 = vsel %vm7627, %v7563, %v7691
      %v7756 = vsel %vm7628, %v7564, %v7692
      %v7757 = vsel %vm7629, %v7565, %v7693
      %v7758 = vsel %vm7630, %v7566, %v7694
      %v7759 = vsel %vm7631, %v7567, %v7695
      %v7760 = vsel %vm7632, %v7568, %v7696
      %v7761 = vsel %vm7633, %v7569, %v7697
      %v7762 = vsel %vm7634, %v7570, %v7698
      %v7763 = vsel %vm7635, %v7571, %v7699
      %v7764 = vsel %vm7636, %v7572, %v7700
      %v7765 = vsel %vm7637, %v7573, %v7701
      %v7766 = vsel %vm7638, %v7574, %v7702
      %v7767 = vsel %vm7639, %v7575, %v7703
      %v7768 = vsel %vm7640, %v7576, %v7704
      %v7769 = vsel %vm7641, %v7577, %v7705
      %v7770 = vsel %vm7642, %v7578, %v7706
      %v7771 = vsel %vm7643, %v7579, %v7707
      %v7772 = vsel %vm7644, %v7580, %v7708
      %v7773 = vsel %vm7645, %v7581, %v7709
      %v7774 = vsel %vm7646, %v7582, %v7710
      %v7775 = vsel %vm7647, %v7583, %v7711
      %v7776 = vsel %vm7648, %v7584, %v7712
      %v7777 = vsel %vm7649, %v7585, %v7713
      %v7778 = vsel %vm7650, %v7586, %v7714
      %v7779 = vsel %vm7651, %v7587, %v7715
      %v7780 = vsel %vm7652, %v7588, %v7716
      %v7781 = vsel %vm7653, %v7589, %v7717
      %v7782 = vsel %vm7654, %v7590, %v7718
      %v7783 = vsel %vm7655, %v7591, %v7719
      %v7784 = vsel %vm7656, %v7592, %v7720
      %v7785 = vsel %vm7657, %v7593, %v7721
      %v7786 = vsel %vm7658, %v7594, %v7722
      %v7787 = vsel %vm7659, %v7595, %v7723
      %v7788 = vsel %vm7660, %v7596, %v7724
      %v7789 = vsel %vm7661, %v7597, %v7725
      %v7790 = vsel %vm7662, %v7598, %v7726
      %v7791 = vsel %vm7663, %v7599, %v7727
      %v7792 = vsel %vm7664, %v7600, %v7728
      %v7793 = vsel %vm7665, %v7601, %v7729
      %v7794 = vsel %vm7666, %v7602, %v7730
      %v7795 = vsel %vm7667, %v7603, %v7731
      %v7796 = vsel %vm7668, %v7604, %v7732
      %v7797 = vsel %vm7669, %v7605, %v7733
      %v7798 = vsel %vm7670, %v7606, %v7734
      %v7799 = vsel %vm7671, %v7607, %v7735
      %v7800 = vsel %vm7672, %v7608, %v7736
      %v7801 = vsel %vm7673, %v7609, %v7737
      %v7802 = vsel %vm7674, %v7610, %v7738
      %v7803 = vsel %vm7675, %v7611, %v7739
      %v7804 = vsel %vm7676, %v7612, %v7740
      %v7805 = vsel %vm7677, %v7613, %v7741
      %v7806 = vsel %vm7678, %v7614, %v7742
      %v7807 = vsel %vm7679, %v7615, %v7743
      %v7808 = vsel %vm7680, %v7616, %v7744
      %v7809 = vsel %vm7681, %v7617, %v7745
      %v7810 = vsel %vm7682, %v7618, %v7746
      %v7811 = vsel %vm7683, %v7619, %v7747
      %v7812 = vsel %vm7684, %v7620, %v7748
      %v7813 = vsel %vm7685, %v7621, %v7749
      %v7814 = vsel %vm7686, %v7622, %v7750
      %v7815 = vsel %vm7687, %v7623, %v7751
      %v7816 = vsel %vm7688, %v7624, %v7752
      %v7817 = vsel %vm7689, %v7625, %v7753
      %v7818 = vpack.c.bf16 %v7754, %v7754
      %v7819 = vpack.c.bf16 %v7755, %v7755
      %v7820 = vpack.c.bf16 %v7756, %v7756
      %v7821 = vpack.c.bf16 %v7757, %v7757
      %v7822 = vpack.c.bf16 %v7758, %v7758
      %v7823 = vpack.c.bf16 %v7759, %v7759
      %v7824 = vpack.c.bf16 %v7760, %v7760
      %v7825 = vpack.c.bf16 %v7761, %v7761
      %v7826 = vpack.c.bf16 %v7762, %v7762
      %v7827 = vpack.c.bf16 %v7763, %v7763
      %v7828 = vpack.c.bf16 %v7764, %v7764
      %v7829 = vpack.c.bf16 %v7765, %v7765
      %v7830 = vpack.c.bf16 %v7766, %v7766
      %v7831 = vpack.c.bf16 %v7767, %v7767
      %v7832 = vpack.c.bf16 %v7768, %v7768
      %v7833 = vpack.c.bf16 %v7769, %v7769
      %v7834 = vpack.c.bf16 %v7770, %v7770
      %v7835 = vpack.c.bf16 %v7771, %v7771
      %v7836 = vpack.c.bf16 %v7772, %v7772
      %v7837 = vpack.c.bf16 %v7773, %v7773
      %v7838 = vpack.c.bf16 %v7774, %v7774
      %v7839 = vpack.c.bf16 %v7775, %v7775
      %v7840 = vpack.c.bf16 %v7776, %v7776
      %v7841 = vpack.c.bf16 %v7777, %v7777
      %v7842 = vpack.c.bf16 %v7778, %v7778
      %v7843 = vpack.c.bf16 %v7779, %v7779
      %v7844 = vpack.c.bf16 %v7780, %v7780
      %v7845 = vpack.c.bf16 %v7781, %v7781
      %v7846 = vpack.c.bf16 %v7782, %v7782
      %v7847 = vpack.c.bf16 %v7783, %v7783
      %v7848 = vpack.c.bf16 %v7784, %v7784
      %v7849 = vpack.c.bf16 %v7785, %v7785
      %v7850 = vpack.c.bf16 %v7786, %v7786
      %v7851 = vpack.c.bf16 %v7787, %v7787
      %v7852 = vpack.c.bf16 %v7788, %v7788
      %v7853 = vpack.c.bf16 %v7789, %v7789
      %v7854 = vpack.c.bf16 %v7790, %v7790
      %v7855 = vpack.c.bf16 %v7791, %v7791
      %v7856 = vpack.c.bf16 %v7792, %v7792
      %v7857 = vpack.c.bf16 %v7793, %v7793
      %v7858 = vpack.c.bf16 %v7794, %v7794
      %v7859 = vpack.c.bf16 %v7795, %v7795
      %v7860 = vpack.c.bf16 %v7796, %v7796
      %v7861 = vpack.c.bf16 %v7797, %v7797
      %v7862 = vpack.c.bf16 %v7798, %v7798
      %v7863 = vpack.c.bf16 %v7799, %v7799
      %v7864 = vpack.c.bf16 %v7800, %v7800
      %v7865 = vpack.c.bf16 %v7801, %v7801
      %v7866 = vpack.c.bf16 %v7802, %v7802
      %v7867 = vpack.c.bf16 %v7803, %v7803
      %v7868 = vpack.c.bf16 %v7804, %v7804
      %v7869 = vpack.c.bf16 %v7805, %v7805
      %v7870 = vpack.c.bf16 %v7806, %v7806
      %v7871 = vpack.c.bf16 %v7807, %v7807
      %v7872 = vpack.c.bf16 %v7808, %v7808
      %v7873 = vpack.c.bf16 %v7809, %v7809
      %v7874 = vpack.c.bf16 %v7810, %v7810
      %v7875 = vpack.c.bf16 %v7811, %v7811
      %v7876 = vpack.c.bf16 %v7812, %v7812
      %v7877 = vpack.c.bf16 %v7813, %v7813
      %v7878 = vpack.c.bf16 %v7814, %v7814
      %v7879 = vpack.c.bf16 %v7815, %v7815
      %v7880 = vpack.c.bf16 %v7816, %v7816
      %v7881 = vpack.c.bf16 %v7817, %v7817
      %vm7882 = vcmask 60416
      %7883 = vst.msk [vmem:[%s197] sm:$0xf] %vm7882, %v7818
      %7884 = vst.msk [vmem:[%s197 + $0x4] sm:$0xf] %vm7882, %v7819
      %7885 = vst.msk [vmem:[%s197 + $0x8] sm:$0xf] %vm7882, %v7820
      %7886 = vst.msk [vmem:[%s197 + $0xc] sm:$0xf] %vm7882, %v7821
      %7887 = vst.msk [vmem:[%s197 + $0x10] sm:$0xf] %vm7882, %v7822
      %7888 = vst.msk [vmem:[%s197 + $0x14] sm:$0xf] %vm7882, %v7823
      %7889 = vst.msk [vmem:[%s197 + $0x18] sm:$0xf] %vm7882, %v7824
      %7890 = vst.msk [vmem:[%s197 + $0x1c] sm:$0xf] %vm7882, %v7825
      %7891 = vst.msk [vmem:[%s197 + $0x20] sm:$0xf] %vm7882, %v7826
      %7892 = vst.msk [vmem:[%s197 + $0x24] sm:$0xf] %vm7882, %v7827
      %7893 = vst.msk [vmem:[%s197 + $0x28] sm:$0xf] %vm7882, %v7828
      %7894 = vst.msk [vmem:[%s197 + $0x2c] sm:$0xf] %vm7882, %v7829
      %7895 = vst.msk [vmem:[%s197 + $0x30] sm:$0xf] %vm7882, %v7830
      %7896 = vst.msk [vmem:[%s197 + $0x34] sm:$0xf] %vm7882, %v7831
      %7897 = vst.msk [vmem:[%s197 + $0x38] sm:$0xf] %vm7882, %v7832
      %7898 = vst.msk [vmem:[%s197 + $0x3c] sm:$0xf] %vm7882, %v7833
      %7899 = vst.msk [vmem:[%s197 + $0x40] sm:$0xf] %vm7882, %v7834
      %7900 = vst.msk [vmem:[%s197 + $0x44] sm:$0xf] %vm7882, %v7835
      %7901 = vst.msk [vmem:[%s197 + $0x48] sm:$0xf] %vm7882, %v7836
      %7902 = vst.msk [vmem:[%s197 + $0x4c] sm:$0xf] %vm7882, %v7837
      %7903 = vst.msk [vmem:[%s197 + $0x50] sm:$0xf] %vm7882, %v7838
      %7904 = vst.msk [vmem:[%s197 + $0x54] sm:$0xf] %vm7882, %v7839
      %7905 = vst.msk [vmem:[%s197 + $0x58] sm:$0xf] %vm7882, %v7840
      %7906 = vst.msk [vmem:[%s197 + $0x5c] sm:$0xf] %vm7882, %v7841
      %7907 = vst.msk [vmem:[%s197 + $0x60] sm:$0xf] %vm7882, %v7842
      %7908 = vst.msk [vmem:[%s197 + $0x64] sm:$0xf] %vm7882, %v7843
      %7909 = vst.msk [vmem:[%s197 + $0x68] sm:$0xf] %vm7882, %v7844
      %7910 = vst.msk [vmem:[%s197 + $0x6c] sm:$0xf] %vm7882, %v7845
      %7911 = vst.msk [vmem:[%s197 + $0x70] sm:$0xf] %vm7882, %v7846
      %7912 = vst.msk [vmem:[%s197 + $0x74] sm:$0xf] %vm7882, %v7847
      %7913 = vst.msk [vmem:[%s197 + $0x78] sm:$0xf] %vm7882, %v7848
      %7914 = vst.msk [vmem:[%s197 + $0x7c] sm:$0xf] %vm7882, %v7849
      %7915 = vst.msk [vmem:[%s197 + $0x80] sm:$0xf] %vm7882, %v7850
      %7916 = vst.msk [vmem:[%s197 + $0x84] sm:$0xf] %vm7882, %v7851
      %7917 = vst.msk [vmem:[%s197 + $0x88] sm:$0xf] %vm7882, %v7852
      %7918 = vst.msk [vmem:[%s197 + $0x8c] sm:$0xf] %vm7882, %v7853
      %7919 = vst.msk [vmem:[%s197 + $0x90] sm:$0xf] %vm7882, %v7854
      %7920 = vst.msk [vmem:[%s197 + $0x94] sm:$0xf] %vm7882, %v7855
      %7921 = vst.msk [vmem:[%s197 + $0x98] sm:$0xf] %vm7882, %v7856
      %7922 = vst.msk [vmem:[%s197 + $0x9c] sm:$0xf] %vm7882, %v7857
      %7923 = vst.msk [vmem:[%s197 + $0xa0] sm:$0xf] %vm7882, %v7858
      %7924 = vst.msk [vmem:[%s197 + $0xa4] sm:$0xf] %vm7882, %v7859
      %7925 = vst.msk [vmem:[%s197 + $0xa8] sm:$0xf] %vm7882, %v7860
      %7926 = vst.msk [vmem:[%s197 + $0xac] sm:$0xf] %vm7882, %v7861
      %7927 = vst.msk [vmem:[%s197 + $0xb0] sm:$0xf] %vm7882, %v7862
      %7928 = vst.msk [vmem:[%s197 + $0xb4] sm:$0xf] %vm7882, %v7863
      %7929 = vst.msk [vmem:[%s197 + $0xb8] sm:$0xf] %vm7882, %v7864
      %7930 = vst.msk [vmem:[%s197 + $0xbc] sm:$0xf] %vm7882, %v7865
      %7931 = vst.msk [vmem:[%s197 + $0xc0] sm:$0xf] %vm7882, %v7866
      %7932 = vst.msk [vmem:[%s197 + $0xc4] sm:$0xf] %vm7882, %v7867
      %7933 = vst.msk [vmem:[%s197 + $0xc8] sm:$0xf] %vm7882, %v7868
      %7934 = vst.msk [vmem:[%s197 + $0xcc] sm:$0xf] %vm7882, %v7869
      %7935 = vst.msk [vmem:[%s197 + $0xd0] sm:$0xf] %vm7882, %v7870
      %7936 = vst.msk [vmem:[%s197 + $0xd4] sm:$0xf] %vm7882, %v7871
      %7937 = vst.msk [vmem:[%s197 + $0xd8] sm:$0xf] %vm7882, %v7872
      %7938 = vst.msk [vmem:[%s197 + $0xdc] sm:$0xf] %vm7882, %v7873
      %7939 = vst.msk [vmem:[%s197 + $0xe0] sm:$0xf] %vm7882, %v7874
      %7940 = vst.msk [vmem:[%s197 + $0xe4] sm:$0xf] %vm7882, %v7875
      %7941 = vst.msk [vmem:[%s197 + $0xe8] sm:$0xf] %vm7882, %v7876
      %7942 = vst.msk [vmem:[%s197 + $0xec] sm:$0xf] %vm7882, %v7877
      %7943 = vst.msk [vmem:[%s197 + $0xf0] sm:$0xf] %vm7882, %v7878
      %7944 = vst.msk [vmem:[%s197 + $0xf4] sm:$0xf] %vm7882, %v7879
      %7945 = vst.msk [vmem:[%s197 + $0xf8] sm:$0xf] %vm7882, %v7880
      %7946 = vst.msk [vmem:[%s197 + $0xfc] sm:$0xf] %vm7882, %v7881
      %s7947 = smul.u32 64, %s15
      %p7948 = scmp.lt.s32.totalorder %s7947, 127
      %s7949 = scalar_select %p7948, %s7947, 127
      %s7950 = smul.addr %s7949, 4
      %s7951 = scalar_lea.vmem %s4, %s7950
      // Predicated region
      $region37: #{tpu_custom_call.1} parent=35 // pred_check
        %p7952 = pneg %p122
      $region38: #{tpu_custom_call.1} parent=35 // pred_check_branch
        %7954 = sbr.rel (%p7952) target = $region40
      $region39: #{tpu_custom_call.1} parent=35 // pred_region
        %s7955 = smul.u32 64, %s15
      $region40: #{tpu_custom_call.1} parent=35 // pred_fallthru
        _
    $region36: #{tpu_custom_call.1} parent=5 // pred_fallthru
      _
    %p7956 = scmp.le.s32.totalorder 2, %s10
    // Predicated region
    $region41: #{tpu_custom_call.1} parent=5 // pred_check
      %p7957 = pneg %p7956
    $region42: #{tpu_custom_call.1} parent=5 // pred_check_branch
      %7959 = sbr.rel (%p7957) target = $region44
    $region43: #{tpu_custom_call.1} parent=5 // pred_region
      %s7960 = ssub.s32 %s10, 2
      // Predicated region
      $region45: #{tpu_custom_call.1} parent=43 // pred_check
        %p7961 = pneg %p128
      $region46: #{tpu_custom_call.1} parent=43 // pred_check_branch
        %7963 = sbr.rel (%p7961) target = $region48
      $region47: #{tpu_custom_call.1} parent=43 // pred_region
        %s7964 = smul.u32 64, %s16
        %p7965 = scmp.lt.s32.totalorder %s7964, 127
        %s7966 = scalar_select %p7965, %s7964, 127
        %s7967 = smul.addr %s7966, 4
        %s7968 = scalar_lea.vmem %s4, %s7967
      $region48: #{tpu_custom_call.1} parent=43 // pred_fallthru
        _
    $region44: #{tpu_custom_call.1} parent=5 // pred_fallthru
      _
  $region6: #{tpu_custom_call.1} parent=0 // loop_footer
    %s14 = sadd.s32 1, %s10
  $region7: #{tpu_custom_call.1} parent=0 // loop_footer_branch
    %9 = sbr.rel target = $region3
  $region8: #{tpu_custom_call.1} parent=0 // loop_exit
    _

</llo_original>
